<compile_context>
chip_gen: v7x
topology: tpu7x:2x2x1
jax: 0.10.0
libtpu: 0.0.40
codegen_flags: <defaults>
</compile_context>

<pallas_src>
import jax
import jax.numpy as jnp
import numpy as np
from jax.experimental import pallas as pl
from jax.experimental.pallas import tpu as pltpu


# ------------------------------------------------------------------ kernel ---
def mi_lstm_kernel(x_ref, wh_ref, wx_ref, b_ref, wA_ref, bA_ref, h_out_ref):
    W = x_ref.shape[0]
    B = x_ref.shape[1]
    H = wA_ref.shape[0]

    # Time-invariant operands: load once, cast to bf16 once (hoisted).
    wh = wh_ref[...].astype(jnp.bfloat16)          # [H,  P]
    wx = wx_ref[...].astype(jnp.bfloat16)          # [4I, P]
    wA = wA_ref[...].astype(jnp.bfloat16)          # [H,  H]
    b = b_ref[...]                                 # [1,  P]  (f32)
    bAY = bA_ref[0]                                # [1, H]
    bAI = bA_ref[1]
    bAP = bA_ref[2]
    bAN = bA_ref[3]

    def step(t, carry):
        cT, hT = carry                             # f32 [B, H]
        xT = x_ref[t]                              # f32 [B, 4I] = [y | i | p | n]

        # Fused gate pre-activations, packed column order:
        #   [CY CI CP CN | IY II IP IN | F | O]  (each block H wide) + zero pad.
        z = (jnp.dot(hT.astype(jnp.bfloat16), wh,
                     preferred_element_type=jnp.float32)
             + jnp.dot(xT.astype(jnp.bfloat16), wx,
                       preferred_element_type=jnp.float32)
             + b)                                  # [B, P] f32

        tz = jnp.tanh(z)
        sz = jax.nn.sigmoid(z)
        # l-terms: tanh(C-gates) * sigmoid(I-gates), one lane-dense [B, 4H] op.
        L = tz[:, 0:4 * H] * sz[:, 4 * H:8 * H]    # [B, 4H] = [lY | lI | lP | lN]
        f = sz[:, 8 * H:9 * H]                     # forget gate
        o = sz[:, 9 * H:10 * H]                    # output gate

        lY = L[:, 0:H]
        lI = L[:, H:2 * H]
        lP = L[:, 2 * H:3 * H]
        lN = L[:, 3 * H:4 * H]

        # Attention — softmax over the [B, 4H] concat (PyTorch semantics),
        # computed without an actual concatenate; only columns 0..3 are used.
        cTwA = jnp.dot(cT.astype(jnp.bfloat16), wA,
                       preferred_element_type=jnp.float32)          # [B, H]
        aY = jnp.tanh(jnp.sum(lY * cTwA, axis=-1, keepdims=True) + bAY)
        aI = jnp.tanh(jnp.sum(lI * cTwA, axis=-1, keepdims=True) + bAI)
        aP = jnp.tanh(jnp.sum(lP * cTwA, axis=-1, keepdims=True) + bAP)
        aN = jnp.tanh(jnp.sum(lN * cTwA, axis=-1, keepdims=True) + bAN)

        m = jnp.maximum(
            jnp.maximum(jnp.max(aY, axis=-1, keepdims=True),
                        jnp.max(aI, axis=-1, keepdims=True)),
            jnp.maximum(jnp.max(aP, axis=-1, keepdims=True),
                        jnp.max(aN, axis=-1, keepdims=True)))       # [B, 1]
        eY = jnp.exp(aY - m)
        eI = jnp.exp(aI - m)
        eP = jnp.exp(aP - m)
        eN = jnp.exp(aN - m)
        denom = (jnp.sum(eY, axis=-1, keepdims=True)
                 + jnp.sum(eI, axis=-1, keepdims=True)
                 + jnp.sum(eP, axis=-1, keepdims=True)
                 + jnp.sum(eN, axis=-1, keepdims=True))             # [B, 1]
        wgt = eY[:, 0:4] / denom                                    # [B, 4]

        lT = (wgt[:, 0:1] * lY + wgt[:, 1:2] * lI
              + wgt[:, 2:3] * lP + wgt[:, 3:4] * lN)

        cNext = cT * f + lT
        hNext = jnp.tanh(cNext) * o
        h_out_ref[t] = hNext
        return (cNext, hNext)

    init = (jnp.zeros((B, H), jnp.float32), jnp.zeros((B, H), jnp.float32))
    jax.lax.fori_loop(0, W, step, init, unroll=True)


# --------------------------------------------------------- weight packing ---
# Packed gate order (columns, each H wide): CY CI CP CN IY II IP IN F O
_PERM = (2, 3, 4, 5, 6, 7, 8, 9, 0, 1)
# Which factor feeds each ORIGINAL gate index: 0=Y, 1=I, 2=P, 3=N
_FACTOR_OF = {0: 0, 1: 0, 2: 0, 3: 1, 4: 2, 5: 3, 6: 0, 7: 0, 8: 0, 9: 0}


def pack_params(params, input_size):
    H = params["wA"].shape[0]
    I = input_size
    wh_cols, wx_cols, b_cols = [], [], []
    for g in _PERM:
        wh_cols.append(params["wh"][g])                      # [H, H]
        blk = jnp.zeros((4 * I, H), jnp.float32)
        blk = blk.at[_FACTOR_OF[g] * I:(_FACTOR_OF[g] + 1) * I].set(
            params["wx"][g])
        wx_cols.append(blk)                                  # [4I, H]
        b_cols.append(params["b"][g, 0])                     # [H]
    wh_all = jnp.concatenate(wh_cols, axis=1)                # [H, 10H]
    wx_all = jnp.concatenate(wx_cols, axis=1)                # [4I, 10H]
    b_all = jnp.concatenate(b_cols, axis=0)[None, :]         # [1, 10H]

    # Pad the fused gate (lane) axis to a multiple of 128 -> full MXU passes,
    # unmasked lane-dense tiles.
    P = ((10 * H + 127) // 128) * 128
    pad = P - 10 * H
    if pad:
        wh_all = jnp.pad(wh_all, ((0, 0), (0, pad)))
        wx_all = jnp.pad(wx_all, ((0, 0), (0, pad)))
        b_all = jnp.pad(b_all, ((0, 0), (0, pad)))
    return wh_all, wx_all, b_all


# ----------------------------------------------------------------- wrapper ---
@jax.jit
def mi_lstm_forward(factorY, factorI, factorP, factorN, params):
    B, W, I = factorY.shape
    H = params["wA"].shape[0]
    B_pad = ((B + 7) // 8) * 8                     # pad batch to full sublanes

    wh_all, wx_all, b_all = pack_params(params, I)

    # One lane-dense factor tensor, time-major: [W, B_pad, 4I].
    x = jnp.concatenate([factorY, factorI, factorP, factorN], axis=-1)
    x = jnp.transpose(x, (1, 0, 2))                # [W, B, 4I]
    if B_pad != B:
        x = jnp.pad(x, ((0, 0), (0, B_pad - B), (0, 0)))

    vmem = pltpu.MemorySpace.VMEM
    h_tm = pl.pallas_call(
        mi_lstm_kernel,
        out_shape=jax.ShapeDtypeStruct((W, B_pad, H), jnp.float32),
        in_specs=[pl.BlockSpec(memory_space=vmem)] * 6,
        out_specs=pl.BlockSpec(memory_space=vmem),
    )(x, wh_all, wx_all, b_all, params["wA"], params["bA"])

    return jnp.transpose(h_tm, (1, 0, 2))[:B]      # [B, W, H]


# ----------------------------------------------------------- pure-JAX ref ---
def mi_lstm_ref(factorY, factorI, factorP, factorN, params):
    B, W, _ = factorY.shape
    H = params["wA"].shape[0]
    cT = jnp.zeros((B, H), jnp.float32)
    hT = jnp.zeros((B, H), jnp.float32)
    outs = []
    for t in range(W):
        yT = factorY[:, t]; iT = factorI[:, t]
        pT = factorP[:, t]; nT = factorN[:, t]

        def lin(k, x):
            return (jnp.dot(hT, params["wh"][k]) + jnp.dot(x, params["wx"][k])
                    + params["b"][k, 0])

        f = jax.nn.sigmoid(lin(0, yT))
        o = jax.nn.sigmoid(lin(1, yT))
        iY = jax.nn.sigmoid(lin(6, yT))
        iI = jax.nn.sigmoid(lin(7, yT))
        iP = jax.nn.sigmoid(lin(8, yT))
        iN = jax.nn.sigmoid(lin(9, yT))
        lY = jnp.tanh(lin(2, yT)) * iY
        lI = jnp.tanh(lin(3, iT)) * iI
        lP = jnp.tanh(lin(4, pT)) * iP
        lN = jnp.tanh(lin(5, nT)) * iN

        cTwA = jnp.dot(cT, params["wA"])
        aY = jnp.tanh(jnp.sum(lY * cTwA, -1, keepdims=True) + params["bA"][0])
        aI = jnp.tanh(jnp.sum(lI * cTwA, -1, keepdims=True) + params["bA"][1])
        aP = jnp.tanh(jnp.sum(lP * cTwA, -1, keepdims=True) + params["bA"][2])
        aN = jnp.tanh(jnp.sum(lN * cTwA, -1, keepdims=True) + params["bA"][3])
        att = jax.nn.softmax(jnp.concatenate([aY, aI, aP, aN], -1), axis=-1)
        lT = (att[:, 0:1] * lY + att[:, 1:2] * lI
              + att[:, 2:3] * lP + att[:, 3:4] * lN)

        cT = cT * f + lT
        hT = jnp.tanh(cT) * o
        outs.append(hT)
    return jnp.stack(outs, axis=1)


# --------------------------------------------------------------- params -----
def init_params(key, inputSize, hiddenSize):
    C = inputSize + hiddenSize
    H = hiddenSize
    keys = jax.random.split(key, 23)
    # 10 x Linear(concatSize -> hiddenSize); stored as [C, H] so y = x @ W + b.
    ws, bs = [], []
    bound = 1.0 / np.sqrt(C)
    for k in range(10):
        ws.append(jax.random.uniform(keys[k], (C, H), jnp.float32, -bound, bound))
        bs.append(jax.random.uniform(keys[10 + k], (1, H), jnp.float32, -bound, bound))
    W = jnp.stack(ws)                                  # [10, C, H]
    params = {
        "wh": W[:, :H, :],                             # [10, H, H]
        "wx": W[:, H:, :],                             # [10, I, H]
        "b": jnp.stack(bs),                            # [10, 1, H]
        "wA": jax.random.normal(keys[20], (H, H), jnp.float32) * np.sqrt(2.0 / H),
        "bA": jax.random.uniform(keys[21], (4, 1, H), jnp.float32, 0.0, 1.0),
    }
    return params


# ------------------------------------------------------------------ main ----
if __name__ == "__main__":
    B, W, I, H = 4, 8, 16, 32
    key = jax.random.PRNGKey(0)
    k1, k2, k3, k4, kp = jax.random.split(key, 5)
    factorY = jax.random.normal(k1, (B, W, I), jnp.float32)
    factorI = jax.random.normal(k2, (B, W, I), jnp.float32)
    factorP = jax.random.normal(k3, (B, W, I), jnp.float32)
    factorN = jax.random.normal(k4, (B, W, I), jnp.float32)
    params = init_params(kp, I, H)

    h = mi_lstm_forward(factorY, factorI, factorP, factorN, params)
    jax.block_until_ready(h)

    h_ref = mi_lstm_ref(factorY, factorI, factorP, factorN, params)
    # The kernel runs its matmuls as bf16 x bf16 -> f32 on the MXU (per the
    # performance review, HIGHEST precision dropped); the tolerance below
    # covers that precision gap vs. the plain-f32 reference.
    np.testing.assert_allclose(np.asarray(h), np.asarray(h_ref),
                               rtol=2e-2, atol=2e-2)
    print("KERNEL_OK")
</pallas_src>

<mosaic_0001>
module attributes {stable_mosaic.version = 11 : i64} {
  func.func @mi_lstm_kernel(%arg0: memref<8x8x64xf32, #tpu.memory_space<vmem>>, %arg1: memref<32x384xf32, #tpu.memory_space<vmem>>, %arg2: memref<64x384xf32, #tpu.memory_space<vmem>>, %arg3: memref<1x384xf32, #tpu.memory_space<vmem>>, %arg4: memref<32x32xf32, #tpu.memory_space<vmem>>, %arg5: memref<4x1x32xf32, #tpu.memory_space<vmem>>, %arg6: memref<8x8x32xf32, #tpu.memory_space<vmem>>) attributes {dimension_semantics = [], scalar_prefetch = 0 : i64, scratch_operands = 0 : i64, tpu.core_type = #tpu.core_type<tc>} {
    %c0 = arith.constant 0 : index
    %c0_0 = arith.constant 0 : index
    %0 = vector.load %arg1[%c0, %c0_0] : memref<32x384xf32, #tpu.memory_space<vmem>>, vector<32x384xf32>
    %1 = arith.truncf %0 : vector<32x384xf32> to vector<32x384xbf16>
    %c0_1 = arith.constant 0 : index
    %c0_2 = arith.constant 0 : index
    %2 = vector.load %arg2[%c0_1, %c0_2] : memref<64x384xf32, #tpu.memory_space<vmem>>, vector<64x384xf32>
    %3 = arith.truncf %2 : vector<64x384xf32> to vector<64x384xbf16>
    %c0_3 = arith.constant 0 : index
    %c0_4 = arith.constant 0 : index
    %4 = vector.load %arg4[%c0_3, %c0_4] : memref<32x32xf32, #tpu.memory_space<vmem>>, vector<32x32xf32>
    %5 = arith.truncf %4 : vector<32x32xf32> to vector<32x32xbf16>
    %c0_5 = arith.constant 0 : index
    %c0_6 = arith.constant 0 : index
    %6 = vector.load %arg3[%c0_5, %c0_6] : memref<1x384xf32, #tpu.memory_space<vmem>>, vector<1x384xf32>
    %c0_7 = arith.constant 0 : index
    %c0_8 = arith.constant 0 : index
    %c0_9 = arith.constant 0 : index
    %7 = vector.load %arg5[%c0_7, %c0_8, %c0_9] : memref<4x1x32xf32, #tpu.memory_space<vmem>>, vector<1x1x32xf32>
    %8 = vector.shape_cast %7 : vector<1x1x32xf32> to vector<1x32xf32>
    %c1 = arith.constant 1 : index
    %c0_10 = arith.constant 0 : index
    %c0_11 = arith.constant 0 : index
    %9 = vector.load %arg5[%c1, %c0_10, %c0_11] : memref<4x1x32xf32, #tpu.memory_space<vmem>>, vector<1x1x32xf32>
    %10 = vector.shape_cast %9 : vector<1x1x32xf32> to vector<1x32xf32>
    %c2 = arith.constant 2 : index
    %c0_12 = arith.constant 0 : index
    %c0_13 = arith.constant 0 : index
    %11 = vector.load %arg5[%c2, %c0_12, %c0_13] : memref<4x1x32xf32, #tpu.memory_space<vmem>>, vector<1x1x32xf32>
    %12 = vector.shape_cast %11 : vector<1x1x32xf32> to vector<1x32xf32>
    %c3 = arith.constant 3 : index
    %c0_14 = arith.constant 0 : index
    %c0_15 = arith.constant 0 : index
    %13 = vector.load %arg5[%c3, %c0_14, %c0_15] : memref<4x1x32xf32, #tpu.memory_space<vmem>>, vector<1x1x32xf32>
    %14 = vector.shape_cast %13 : vector<1x1x32xf32> to vector<1x32xf32>
    %cst = arith.constant 0.000000e+00 : f32
    %15 = vector.broadcast %cst : f32 to vector<8x32xf32>
    %cst_16 = arith.constant 0.000000e+00 : f32
    %16 = vector.broadcast %cst_16 : f32 to vector<8x32xf32>
    %c0_i32 = arith.constant 0 : i32
    %17 = arith.index_cast %c0_i32 : i32 to index
    %c0_17 = arith.constant 0 : index
    %c0_18 = arith.constant 0 : index
    %18 = vector.load %arg0[%17, %c0_17, %c0_18] : memref<8x8x64xf32, #tpu.memory_space<vmem>>, vector<1x8x64xf32>
    %19 = vector.shape_cast %18 : vector<1x8x64xf32> to vector<8x64xf32>
    %20 = arith.truncf %16 : vector<8x32xf32> to vector<8x32xbf16>
    %cst_19 = arith.constant dense<0.000000e+00> : vector<8x384xf32>
    %21 = tpu.matmul %20, %1, %cst_19 {dimension_numbers = #tpu.dot_dimension_numbers<[1], [0], [0], [1], [0, 0, 1, 1], [], []>} : vector<8x32xbf16>, vector<32x384xbf16>, vector<8x384xf32> -> vector<8x384xf32>
    %22 = arith.truncf %19 : vector<8x64xf32> to vector<8x64xbf16>
    %cst_20 = arith.constant dense<0.000000e+00> : vector<8x384xf32>
    %23 = tpu.matmul %22, %3, %cst_20 {dimension_numbers = #tpu.dot_dimension_numbers<[1], [0], [0], [1], [0, 0, 1, 1], [], []>} : vector<8x64xbf16>, vector<64x384xbf16>, vector<8x384xf32> -> vector<8x384xf32>
    %24 = arith.addf %21, %23 : vector<8x384xf32>
    %25 = vector.broadcast %6 : vector<1x384xf32> to vector<8x384xf32>
    %26 = arith.addf %24, %25 : vector<8x384xf32>
    %27 = math.tanh %26 : vector<8x384xf32>
    %28 = arith.negf %26 : vector<8x384xf32>
    %29 = math.exp %28 : vector<8x384xf32>
    %cst_21 = arith.constant 1.000000e+00 : f32
    %30 = vector.broadcast %cst_21 : f32 to vector<8x384xf32>
    %31 = arith.addf %30, %29 : vector<8x384xf32>
    %32 = arith.divf %30, %31 : vector<8x384xf32>
    %33 = vector.extract_strided_slice %27 {offsets = [0, 0], sizes = [8, 128], strides = [1, 1]} : vector<8x384xf32> to vector<8x128xf32>
    %34 = vector.extract_strided_slice %32 {offsets = [0, 128], sizes = [8, 128], strides = [1, 1]} : vector<8x384xf32> to vector<8x128xf32>
    %35 = arith.mulf %33, %34 : vector<8x128xf32>
    %36 = vector.extract_strided_slice %32 {offsets = [0, 256], sizes = [8, 32], strides = [1, 1]} : vector<8x384xf32> to vector<8x32xf32>
    %37 = vector.extract_strided_slice %32 {offsets = [0, 288], sizes = [8, 32], strides = [1, 1]} : vector<8x384xf32> to vector<8x32xf32>
    %38 = vector.extract_strided_slice %35 {offsets = [0, 0], sizes = [8, 32], strides = [1, 1]} : vector<8x128xf32> to vector<8x32xf32>
    %39 = vector.extract_strided_slice %35 {offsets = [0, 32], sizes = [8, 32], strides = [1, 1]} : vector<8x128xf32> to vector<8x32xf32>
    %40 = vector.extract_strided_slice %35 {offsets = [0, 64], sizes = [8, 32], strides = [1, 1]} : vector<8x128xf32> to vector<8x32xf32>
    %41 = vector.extract_strided_slice %35 {offsets = [0, 96], sizes = [8, 32], strides = [1, 1]} : vector<8x128xf32> to vector<8x32xf32>
    %42 = arith.truncf %15 : vector<8x32xf32> to vector<8x32xbf16>
    %cst_22 = arith.constant dense<0.000000e+00> : vector<8x32xf32>
    %43 = tpu.matmul %42, %5, %cst_22 {dimension_numbers = #tpu.dot_dimension_numbers<[1], [0], [0], [1], [0, 0, 1, 1], [], []>} : vector<8x32xbf16>, vector<32x32xbf16>, vector<8x32xf32> -> vector<8x32xf32>
    %44 = arith.mulf %38, %43 : vector<8x32xf32>
    %cst_23 = arith.constant dense<0.000000e+00> : vector<8xf32>
    %45 = vector.multi_reduction <add>, %44, %cst_23 [1] : vector<8x32xf32> to vector<8xf32>
    %46 = vector.shape_cast %45 : vector<8xf32> to vector<8x1xf32>
    %47 = vector.broadcast %46 : vector<8x1xf32> to vector<8x32xf32>
    %48 = vector.broadcast %8 : vector<1x32xf32> to vector<8x32xf32>
    %49 = arith.addf %47, %48 : vector<8x32xf32>
    %50 = math.tanh %49 : vector<8x32xf32>
    %51 = arith.mulf %39, %43 : vector<8x32xf32>
    %cst_24 = arith.constant dense<0.000000e+00> : vector<8xf32>
    %52 = vector.multi_reduction <add>, %51, %cst_24 [1] : vector<8x32xf32> to vector<8xf32>
    %53 = vector.shape_cast %52 : vector<8xf32> to vector<8x1xf32>
    %54 = vector.broadcast %53 : vector<8x1xf32> to vector<8x32xf32>
    %55 = vector.broadcast %10 : vector<1x32xf32> to vector<8x32xf32>
    %56 = arith.addf %54, %55 : vector<8x32xf32>
    %57 = math.tanh %56 : vector<8x32xf32>
    %58 = arith.mulf %40, %43 : vector<8x32xf32>
    %cst_25 = arith.constant dense<0.000000e+00> : vector<8xf32>
    %59 = vector.multi_reduction <add>, %58, %cst_25 [1] : vector<8x32xf32> to vector<8xf32>
    %60 = vector.shape_cast %59 : vector<8xf32> to vector<8x1xf32>
    %61 = vector.broadcast %60 : vector<8x1xf32> to vector<8x32xf32>
    %62 = vector.broadcast %12 : vector<1x32xf32> to vector<8x32xf32>
    %63 = arith.addf %61, %62 : vector<8x32xf32>
    %64 = math.tanh %63 : vector<8x32xf32>
    %65 = arith.mulf %41, %43 : vector<8x32xf32>
    %cst_26 = arith.constant dense<0.000000e+00> : vector<8xf32>
    %66 = vector.multi_reduction <add>, %65, %cst_26 [1] : vector<8x32xf32> to vector<8xf32>
    %67 = vector.shape_cast %66 : vector<8xf32> to vector<8x1xf32>
    %68 = vector.broadcast %67 : vector<8x1xf32> to vector<8x32xf32>
    %69 = vector.broadcast %14 : vector<1x32xf32> to vector<8x32xf32>
    %70 = arith.addf %68, %69 : vector<8x32xf32>
    %71 = math.tanh %70 : vector<8x32xf32>
    %cst_27 = arith.constant dense<0xFF800000> : vector<8xf32>
    %72 = vector.multi_reduction <maximumf>, %50, %cst_27 [1] : vector<8x32xf32> to vector<8xf32>
    %73 = vector.shape_cast %72 : vector<8xf32> to vector<8x1xf32>
    %cst_28 = arith.constant dense<0xFF800000> : vector<8xf32>
    %74 = vector.multi_reduction <maximumf>, %57, %cst_28 [1] : vector<8x32xf32> to vector<8xf32>
    %75 = vector.shape_cast %74 : vector<8xf32> to vector<8x1xf32>
    %76 = arith.maximumf %73, %75 : vector<8x1xf32>
    %cst_29 = arith.constant dense<0xFF800000> : vector<8xf32>
    %77 = vector.multi_reduction <maximumf>, %64, %cst_29 [1] : vector<8x32xf32> to vector<8xf32>
    %78 = vector.shape_cast %77 : vector<8xf32> to vector<8x1xf32>
    %cst_30 = arith.constant dense<0xFF800000> : vector<8xf32>
    %79 = vector.multi_reduction <maximumf>, %71, %cst_30 [1] : vector<8x32xf32> to vector<8xf32>
    %80 = vector.shape_cast %79 : vector<8xf32> to vector<8x1xf32>
    %81 = arith.maximumf %78, %80 : vector<8x1xf32>
    %82 = arith.maximumf %76, %81 : vector<8x1xf32>
    %83 = vector.broadcast %82 : vector<8x1xf32> to vector<8x32xf32>
    %84 = arith.subf %50, %83 : vector<8x32xf32>
    %85 = math.exp %84 : vector<8x32xf32>
    %86 = vector.broadcast %82 : vector<8x1xf32> to vector<8x32xf32>
    %87 = arith.subf %57, %86 : vector<8x32xf32>
    %88 = math.exp %87 : vector<8x32xf32>
    %89 = vector.broadcast %82 : vector<8x1xf32> to vector<8x32xf32>
    %90 = arith.subf %64, %89 : vector<8x32xf32>
    %91 = math.exp %90 : vector<8x32xf32>
    %92 = vector.broadcast %82 : vector<8x1xf32> to vector<8x32xf32>
    %93 = arith.subf %71, %92 : vector<8x32xf32>
    %94 = math.exp %93 : vector<8x32xf32>
    %cst_31 = arith.constant dense<0.000000e+00> : vector<8xf32>
    %95 = vector.multi_reduction <add>, %85, %cst_31 [1] : vector<8x32xf32> to vector<8xf32>
    %96 = vector.shape_cast %95 : vector<8xf32> to vector<8x1xf32>
    %cst_32 = arith.constant dense<0.000000e+00> : vector<8xf32>
    %97 = vector.multi_reduction <add>, %88, %cst_32 [1] : vector<8x32xf32> to vector<8xf32>
    %98 = vector.shape_cast %97 : vector<8xf32> to vector<8x1xf32>
    %99 = arith.addf %96, %98 : vector<8x1xf32>
    %cst_33 = arith.constant dense<0.000000e+00> : vector<8xf32>
    %100 = vector.multi_reduction <add>, %91, %cst_33 [1] : vector<8x32xf32> to vector<8xf32>
    %101 = vector.shape_cast %100 : vector<8xf32> to vector<8x1xf32>
    %102 = arith.addf %99, %101 : vector<8x1xf32>
    %cst_34 = arith.constant dense<0.000000e+00> : vector<8xf32>
    %103 = vector.multi_reduction <add>, %94, %cst_34 [1] : vector<8x32xf32> to vector<8xf32>
    %104 = vector.shape_cast %103 : vector<8xf32> to vector<8x1xf32>
    %105 = arith.addf %102, %104 : vector<8x1xf32>
    %106 = vector.extract_strided_slice %85 {offsets = [0, 0], sizes = [8, 4], strides = [1, 1]} : vector<8x32xf32> to vector<8x4xf32>
    %107 = vector.broadcast %105 : vector<8x1xf32> to vector<8x4xf32>
    %108 = arith.divf %106, %107 : vector<8x4xf32>
    %109 = vector.extract_strided_slice %108 {offsets = [0, 0], sizes = [8, 1], strides = [1, 1]} : vector<8x4xf32> to vector<8x1xf32>
    %110 = vector.broadcast %109 : vector<8x1xf32> to vector<8x32xf32>
    %111 = arith.mulf %110, %38 : vector<8x32xf32>
    %112 = vector.extract_strided_slice %108 {offsets = [0, 1], sizes = [8, 1], strides = [1, 1]} : vector<8x4xf32> to vector<8x1xf32>
    %113 = vector.broadcast %112 : vector<8x1xf32> to vector<8x32xf32>
    %114 = arith.mulf %113, %39 : vector<8x32xf32>
    %115 = arith.addf %111, %114 : vector<8x32xf32>
    %116 = vector.extract_strided_slice %108 {offsets = [0, 2], sizes = [8, 1], strides = [1, 1]} : vector<8x4xf32> to vector<8x1xf32>
    %117 = vector.broadcast %116 : vector<8x1xf32> to vector<8x32xf32>
    %118 = arith.mulf %117, %40 : vector<8x32xf32>
    %119 = arith.addf %115, %118 : vector<8x32xf32>
    %120 = vector.extract_strided_slice %108 {offsets = [0, 3], sizes = [8, 1], strides = [1, 1]} : vector<8x4xf32> to vector<8x1xf32>
    %121 = vector.broadcast %120 : vector<8x1xf32> to vector<8x32xf32>
    %122 = arith.mulf %121, %41 : vector<8x32xf32>
    %123 = arith.addf %119, %122 : vector<8x32xf32>
    %124 = arith.mulf %15, %36 : vector<8x32xf32>
    %125 = arith.addf %124, %123 : vector<8x32xf32>
    %126 = math.tanh %125 : vector<8x32xf32>
    %127 = arith.mulf %126, %37 : vector<8x32xf32>
    %128 = arith.index_cast %c0_i32 : i32 to index
    %c0_35 = arith.constant 0 : index
    %c0_36 = arith.constant 0 : index
    %129 = vector.load %arg6[%128, %c0_35, %c0_36] : memref<8x8x32xf32, #tpu.memory_space<vmem>>, vector<1x8x32xf32>
    %130 = vector.shape_cast %129 : vector<1x8x32xf32> to vector<8x32xf32>
    %131 = vector.shape_cast %127 : vector<8x32xf32> to vector<1x8x32xf32>
    tpu.vector_store %arg6[%128, %c0_35, %c0_36], %131 {strides = array<i32>} : memref<8x8x32xf32, #tpu.memory_space<vmem>>, vector<1x8x32xf32>,
    %c1_i32 = arith.constant 1 : i32
    %132 = arith.index_cast %c1_i32 : i32 to index
    %c0_37 = arith.constant 0 : index
    %c0_38 = arith.constant 0 : index
    %133 = vector.load %arg0[%132, %c0_37, %c0_38] : memref<8x8x64xf32, #tpu.memory_space<vmem>>, vector<1x8x64xf32>
    %134 = vector.shape_cast %133 : vector<1x8x64xf32> to vector<8x64xf32>
    %135 = arith.truncf %127 : vector<8x32xf32> to vector<8x32xbf16>
    %cst_39 = arith.constant dense<0.000000e+00> : vector<8x384xf32>
    %136 = tpu.matmul %135, %1, %cst_39 {dimension_numbers = #tpu.dot_dimension_numbers<[1], [0], [0], [1], [0, 0, 1, 1], [], []>} : vector<8x32xbf16>, vector<32x384xbf16>, vector<8x384xf32> -> vector<8x384xf32>
    %137 = arith.truncf %134 : vector<8x64xf32> to vector<8x64xbf16>
    %cst_40 = arith.constant dense<0.000000e+00> : vector<8x384xf32>
    %138 = tpu.matmul %137, %3, %cst_40 {dimension_numbers = #tpu.dot_dimension_numbers<[1], [0], [0], [1], [0, 0, 1, 1], [], []>} : vector<8x64xbf16>, vector<64x384xbf16>, vector<8x384xf32> -> vector<8x384xf32>
    %139 = arith.addf %136, %138 : vector<8x384xf32>
    %140 = vector.broadcast %6 : vector<1x384xf32> to vector<8x384xf32>
    %141 = arith.addf %139, %140 : vector<8x384xf32>
    %142 = math.tanh %141 : vector<8x384xf32>
    %143 = arith.negf %141 : vector<8x384xf32>
    %144 = math.exp %143 : vector<8x384xf32>
    %cst_41 = arith.constant 1.000000e+00 : f32
    %145 = vector.broadcast %cst_41 : f32 to vector<8x384xf32>
    %146 = arith.addf %145, %144 : vector<8x384xf32>
    %147 = arith.divf %145, %146 : vector<8x384xf32>
    %148 = vector.extract_strided_slice %142 {offsets = [0, 0], sizes = [8, 128], strides = [1, 1]} : vector<8x384xf32> to vector<8x128xf32>
    %149 = vector.extract_strided_slice %147 {offsets = [0, 128], sizes = [8, 128], strides = [1, 1]} : vector<8x384xf32> to vector<8x128xf32>
    %150 = arith.mulf %148, %149 : vector<8x128xf32>
    %151 = vector.extract_strided_slice %147 {offsets = [0, 256], sizes = [8, 32], strides = [1, 1]} : vector<8x384xf32> to vector<8x32xf32>
    %152 = vector.extract_strided_slice %147 {offsets = [0, 288], sizes = [8, 32], strides = [1, 1]} : vector<8x384xf32> to vector<8x32xf32>
    %153 = vector.extract_strided_slice %150 {offsets = [0, 0], sizes = [8, 32], strides = [1, 1]} : vector<8x128xf32> to vector<8x32xf32>
    %154 = vector.extract_strided_slice %150 {offsets = [0, 32], sizes = [8, 32], strides = [1, 1]} : vector<8x128xf32> to vector<8x32xf32>
    %155 = vector.extract_strided_slice %150 {offsets = [0, 64], sizes = [8, 32], strides = [1, 1]} : vector<8x128xf32> to vector<8x32xf32>
    %156 = vector.extract_strided_slice %150 {offsets = [0, 96], sizes = [8, 32], strides = [1, 1]} : vector<8x128xf32> to vector<8x32xf32>
    %157 = arith.truncf %125 : vector<8x32xf32> to vector<8x32xbf16>
    %cst_42 = arith.constant dense<0.000000e+00> : vector<8x32xf32>
    %158 = tpu.matmul %157, %5, %cst_42 {dimension_numbers = #tpu.dot_dimension_numbers<[1], [0], [0], [1], [0, 0, 1, 1], [], []>} : vector<8x32xbf16>, vector<32x32xbf16>, vector<8x32xf32> -> vector<8x32xf32>
    %159 = arith.mulf %153, %158 : vector<8x32xf32>
    %cst_43 = arith.constant dense<0.000000e+00> : vector<8xf32>
    %160 = vector.multi_reduction <add>, %159, %cst_43 [1] : vector<8x32xf32> to vector<8xf32>
    %161 = vector.shape_cast %160 : vector<8xf32> to vector<8x1xf32>
    %162 = vector.broadcast %161 : vector<8x1xf32> to vector<8x32xf32>
    %163 = vector.broadcast %8 : vector<1x32xf32> to vector<8x32xf32>
    %164 = arith.addf %162, %163 : vector<8x32xf32>
    %165 = math.tanh %164 : vector<8x32xf32>
    %166 = arith.mulf %154, %158 : vector<8x32xf32>
    %cst_44 = arith.constant dense<0.000000e+00> : vector<8xf32>
    %167 = vector.multi_reduction <add>, %166, %cst_44 [1] : vector<8x32xf32> to vector<8xf32>
    %168 = vector.shape_cast %167 : vector<8xf32> to vector<8x1xf32>
    %169 = vector.broadcast %168 : vector<8x1xf32> to vector<8x32xf32>
    %170 = vector.broadcast %10 : vector<1x32xf32> to vector<8x32xf32>
    %171 = arith.addf %169, %170 : vector<8x32xf32>
    %172 = math.tanh %171 : vector<8x32xf32>
    %173 = arith.mulf %155, %158 : vector<8x32xf32>
    %cst_45 = arith.constant dense<0.000000e+00> : vector<8xf32>
    %174 = vector.multi_reduction <add>, %173, %cst_45 [1] : vector<8x32xf32> to vector<8xf32>
    %175 = vector.shape_cast %174 : vector<8xf32> to vector<8x1xf32>
    %176 = vector.broadcast %175 : vector<8x1xf32> to vector<8x32xf32>
    %177 = vector.broadcast %12 : vector<1x32xf32> to vector<8x32xf32>
    %178 = arith.addf %176, %177 : vector<8x32xf32>
    %179 = math.tanh %178 : vector<8x32xf32>
    %180 = arith.mulf %156, %158 : vector<8x32xf32>
    %cst_46 = arith.constant dense<0.000000e+00> : vector<8xf32>
    %181 = vector.multi_reduction <add>, %180, %cst_46 [1] : vector<8x32xf32> to vector<8xf32>
    %182 = vector.shape_cast %181 : vector<8xf32> to vector<8x1xf32>
    %183 = vector.broadcast %182 : vector<8x1xf32> to vector<8x32xf32>
    %184 = vector.broadcast %14 : vector<1x32xf32> to vector<8x32xf32>
    %185 = arith.addf %183, %184 : vector<8x32xf32>
    %186 = math.tanh %185 : vector<8x32xf32>
    %cst_47 = arith.constant dense<0xFF800000> : vector<8xf32>
    %187 = vector.multi_reduction <maximumf>, %165, %cst_47 [1] : vector<8x32xf32> to vector<8xf32>
    %188 = vector.shape_cast %187 : vector<8xf32> to vector<8x1xf32>
    %cst_48 = arith.constant dense<0xFF800000> : vector<8xf32>
    %189 = vector.multi_reduction <maximumf>, %172, %cst_48 [1] : vector<8x32xf32> to vector<8xf32>
    %190 = vector.shape_cast %189 : vector<8xf32> to vector<8x1xf32>
    %191 = arith.maximumf %188, %190 : vector<8x1xf32>
    %cst_49 = arith.constant dense<0xFF800000> : vector<8xf32>
    %192 = vector.multi_reduction <maximumf>, %179, %cst_49 [1] : vector<8x32xf32> to vector<8xf32>
    %193 = vector.shape_cast %192 : vector<8xf32> to vector<8x1xf32>
    %cst_50 = arith.constant dense<0xFF800000> : vector<8xf32>
    %194 = vector.multi_reduction <maximumf>, %186, %cst_50 [1] : vector<8x32xf32> to vector<8xf32>
    %195 = vector.shape_cast %194 : vector<8xf32> to vector<8x1xf32>
    %196 = arith.maximumf %193, %195 : vector<8x1xf32>
    %197 = arith.maximumf %191, %196 : vector<8x1xf32>
    %198 = vector.broadcast %197 : vector<8x1xf32> to vector<8x32xf32>
    %199 = arith.subf %165, %198 : vector<8x32xf32>
    %200 = math.exp %199 : vector<8x32xf32>
    %201 = vector.broadcast %197 : vector<8x1xf32> to vector<8x32xf32>
    %202 = arith.subf %172, %201 : vector<8x32xf32>
    %203 = math.exp %202 : vector<8x32xf32>
    %204 = vector.broadcast %197 : vector<8x1xf32> to vector<8x32xf32>
    %205 = arith.subf %179, %204 : vector<8x32xf32>
    %206 = math.exp %205 : vector<8x32xf32>
    %207 = vector.broadcast %197 : vector<8x1xf32> to vector<8x32xf32>
    %208 = arith.subf %186, %207 : vector<8x32xf32>
    %209 = math.exp %208 : vector<8x32xf32>
    %cst_51 = arith.constant dense<0.000000e+00> : vector<8xf32>
    %210 = vector.multi_reduction <add>, %200, %cst_51 [1] : vector<8x32xf32> to vector<8xf32>
    %211 = vector.shape_cast %210 : vector<8xf32> to vector<8x1xf32>
    %cst_52 = arith.constant dense<0.000000e+00> : vector<8xf32>
    %212 = vector.multi_reduction <add>, %203, %cst_52 [1] : vector<8x32xf32> to vector<8xf32>
    %213 = vector.shape_cast %212 : vector<8xf32> to vector<8x1xf32>
    %214 = arith.addf %211, %213 : vector<8x1xf32>
    %cst_53 = arith.constant dense<0.000000e+00> : vector<8xf32>
    %215 = vector.multi_reduction <add>, %206, %cst_53 [1] : vector<8x32xf32> to vector<8xf32>
    %216 = vector.shape_cast %215 : vector<8xf32> to vector<8x1xf32>
    %217 = arith.addf %214, %216 : vector<8x1xf32>
    %cst_54 = arith.constant dense<0.000000e+00> : vector<8xf32>
    %218 = vector.multi_reduction <add>, %209, %cst_54 [1] : vector<8x32xf32> to vector<8xf32>
    %219 = vector.shape_cast %218 : vector<8xf32> to vector<8x1xf32>
    %220 = arith.addf %217, %219 : vector<8x1xf32>
    %221 = vector.extract_strided_slice %200 {offsets = [0, 0], sizes = [8, 4], strides = [1, 1]} : vector<8x32xf32> to vector<8x4xf32>
    %222 = vector.broadcast %220 : vector<8x1xf32> to vector<8x4xf32>
    %223 = arith.divf %221, %222 : vector<8x4xf32>
    %224 = vector.extract_strided_slice %223 {offsets = [0, 0], sizes = [8, 1], strides = [1, 1]} : vector<8x4xf32> to vector<8x1xf32>
    %225 = vector.broadcast %224 : vector<8x1xf32> to vector<8x32xf32>
    %226 = arith.mulf %225, %153 : vector<8x32xf32>
    %227 = vector.extract_strided_slice %223 {offsets = [0, 1], sizes = [8, 1], strides = [1, 1]} : vector<8x4xf32> to vector<8x1xf32>
    %228 = vector.broadcast %227 : vector<8x1xf32> to vector<8x32xf32>
    %229 = arith.mulf %228, %154 : vector<8x32xf32>
    %230 = arith.addf %226, %229 : vector<8x32xf32>
    %231 = vector.extract_strided_slice %223 {offsets = [0, 2], sizes = [8, 1], strides = [1, 1]} : vector<8x4xf32> to vector<8x1xf32>
    %232 = vector.broadcast %231 : vector<8x1xf32> to vector<8x32xf32>
    %233 = arith.mulf %232, %155 : vector<8x32xf32>
    %234 = arith.addf %230, %233 : vector<8x32xf32>
    %235 = vector.extract_strided_slice %223 {offsets = [0, 3], sizes = [8, 1], strides = [1, 1]} : vector<8x4xf32> to vector<8x1xf32>
    %236 = vector.broadcast %235 : vector<8x1xf32> to vector<8x32xf32>
    %237 = arith.mulf %236, %156 : vector<8x32xf32>
    %238 = arith.addf %234, %237 : vector<8x32xf32>
    %239 = arith.mulf %125, %151 : vector<8x32xf32>
    %240 = arith.addf %239, %238 : vector<8x32xf32>
    %241 = math.tanh %240 : vector<8x32xf32>
    %242 = arith.mulf %241, %152 : vector<8x32xf32>
    %243 = arith.index_cast %c1_i32 : i32 to index
    %c0_55 = arith.constant 0 : index
    %c0_56 = arith.constant 0 : index
    %244 = vector.load %arg6[%243, %c0_55, %c0_56] : memref<8x8x32xf32, #tpu.memory_space<vmem>>, vector<1x8x32xf32>
    %245 = vector.shape_cast %244 : vector<1x8x32xf32> to vector<8x32xf32>
    %246 = vector.shape_cast %242 : vector<8x32xf32> to vector<1x8x32xf32>
    tpu.vector_store %arg6[%243, %c0_55, %c0_56], %246 {strides = array<i32>} : memref<8x8x32xf32, #tpu.memory_space<vmem>>, vector<1x8x32xf32>,
    %c2_i32 = arith.constant 2 : i32
    %247 = arith.index_cast %c2_i32 : i32 to index
    %c0_57 = arith.constant 0 : index
    %c0_58 = arith.constant 0 : index
    %248 = vector.load %arg0[%247, %c0_57, %c0_58] : memref<8x8x64xf32, #tpu.memory_space<vmem>>, vector<1x8x64xf32>
    %249 = vector.shape_cast %248 : vector<1x8x64xf32> to vector<8x64xf32>
    %250 = arith.truncf %242 : vector<8x32xf32> to vector<8x32xbf16>
    %cst_59 = arith.constant dense<0.000000e+00> : vector<8x384xf32>
    %251 = tpu.matmul %250, %1, %cst_59 {dimension_numbers = #tpu.dot_dimension_numbers<[1], [0], [0], [1], [0, 0, 1, 1], [], []>} : vector<8x32xbf16>, vector<32x384xbf16>, vector<8x384xf32> -> vector<8x384xf32>
    %252 = arith.truncf %249 : vector<8x64xf32> to vector<8x64xbf16>
    %cst_60 = arith.constant dense<0.000000e+00> : vector<8x384xf32>
    %253 = tpu.matmul %252, %3, %cst_60 {dimension_numbers = #tpu.dot_dimension_numbers<[1], [0], [0], [1], [0, 0, 1, 1], [], []>} : vector<8x64xbf16>, vector<64x384xbf16>, vector<8x384xf32> -> vector<8x384xf32>
    %254 = arith.addf %251, %253 : vector<8x384xf32>
    %255 = vector.broadcast %6 : vector<1x384xf32> to vector<8x384xf32>
    %256 = arith.addf %254, %255 : vector<8x384xf32>
    %257 = math.tanh %256 : vector<8x384xf32>
    %258 = arith.negf %256 : vector<8x384xf32>
    %259 = math.exp %258 : vector<8x384xf32>
    %cst_61 = arith.constant 1.000000e+00 : f32
    %260 = vector.broadcast %cst_61 : f32 to vector<8x384xf32>
    %261 = arith.addf %260, %259 : vector<8x384xf32>
    %262 = arith.divf %260, %261 : vector<8x384xf32>
    %263 = vector.extract_strided_slice %257 {offsets = [0, 0], sizes = [8, 128], strides = [1, 1]} : vector<8x384xf32> to vector<8x128xf32>
    %264 = vector.extract_strided_slice %262 {offsets = [0, 128], sizes = [8, 128], strides = [1, 1]} : vector<8x384xf32> to vector<8x128xf32>
    %265 = arith.mulf %263, %264 : vector<8x128xf32>
    %266 = vector.extract_strided_slice %262 {offsets = [0, 256], sizes = [8, 32], strides = [1, 1]} : vector<8x384xf32> to vector<8x32xf32>
    %267 = vector.extract_strided_slice %262 {offsets = [0, 288], sizes = [8, 32], strides = [1, 1]} : vector<8x384xf32> to vector<8x32xf32>
    %268 = vector.extract_strided_slice %265 {offsets = [0, 0], sizes = [8, 32], strides = [1, 1]} : vector<8x128xf32> to vector<8x32xf32>
    %269 = vector.extract_strided_slice %265 {offsets = [0, 32], sizes = [8, 32], strides = [1, 1]} : vector<8x128xf32> to vector<8x32xf32>
    %270 = vector.extract_strided_slice %265 {offsets = [0, 64], sizes = [8, 32], strides = [1, 1]} : vector<8x128xf32> to vector<8x32xf32>
    %271 = vector.extract_strided_slice %265 {offsets = [0, 96], sizes = [8, 32], strides = [1, 1]} : vector<8x128xf32> to vector<8x32xf32>
    %272 = arith.truncf %240 : vector<8x32xf32> to vector<8x32xbf16>
    %cst_62 = arith.constant dense<0.000000e+00> : vector<8x32xf32>
    %273 = tpu.matmul %272, %5, %cst_62 {dimension_numbers = #tpu.dot_dimension_numbers<[1], [0], [0], [1], [0, 0, 1, 1], [], []>} : vector<8x32xbf16>, vector<32x32xbf16>, vector<8x32xf32> -> vector<8x32xf32>
    %274 = arith.mulf %268, %273 : vector<8x32xf32>
    %cst_63 = arith.constant dense<0.000000e+00> : vector<8xf32>
    %275 = vector.multi_reduction <add>, %274, %cst_63 [1] : vector<8x32xf32> to vector<8xf32>
    %276 = vector.shape_cast %275 : vector<8xf32> to vector<8x1xf32>
    %277 = vector.broadcast %276 : vector<8x1xf32> to vector<8x32xf32>
    %278 = vector.broadcast %8 : vector<1x32xf32> to vector<8x32xf32>
    %279 = arith.addf %277, %278 : vector<8x32xf32>
    %280 = math.tanh %279 : vector<8x32xf32>
    %281 = arith.mulf %269, %273 : vector<8x32xf32>
    %cst_64 = arith.constant dense<0.000000e+00> : vector<8xf32>
    %282 = vector.multi_reduction <add>, %281, %cst_64 [1] : vector<8x32xf32> to vector<8xf32>
    %283 = vector.shape_cast %282 : vector<8xf32> to vector<8x1xf32>
    %284 = vector.broadcast %283 : vector<8x1xf32> to vector<8x32xf32>
    %285 = vector.broadcast %10 : vector<1x32xf32> to vector<8x32xf32>
    %286 = arith.addf %284, %285 : vector<8x32xf32>
    %287 = math.tanh %286 : vector<8x32xf32>
    %288 = arith.mulf %270, %273 : vector<8x32xf32>
    %cst_65 = arith.constant dense<0.000000e+00> : vector<8xf32>
    %289 = vector.multi_reduction <add>, %288, %cst_65 [1] : vector<8x32xf32> to vector<8xf32>
    %290 = vector.shape_cast %289 : vector<8xf32> to vector<8x1xf32>
    %291 = vector.broadcast %290 : vector<8x1xf32> to vector<8x32xf32>
    %292 = vector.broadcast %12 : vector<1x32xf32> to vector<8x32xf32>
    %293 = arith.addf %291, %292 : vector<8x32xf32>
    %294 = math.tanh %293 : vector<8x32xf32>
    %295 = arith.mulf %271, %273 : vector<8x32xf32>
    %cst_66 = arith.constant dense<0.000000e+00> : vector<8xf32>
    %296 = vector.multi_reduction <add>, %295, %cst_66 [1] : vector<8x32xf32> to vector<8xf32>
    %297 = vector.shape_cast %296 : vector<8xf32> to vector<8x1xf32>
    %298 = vector.broadcast %297 : vector<8x1xf32> to vector<8x32xf32>
    %299 = vector.broadcast %14 : vector<1x32xf32> to vector<8x32xf32>
    %300 = arith.addf %298, %299 : vector<8x32xf32>
    %301 = math.tanh %300 : vector<8x32xf32>
    %cst_67 = arith.constant dense<0xFF800000> : vector<8xf32>
    %302 = vector.multi_reduction <maximumf>, %280, %cst_67 [1] : vector<8x32xf32> to vector<8xf32>
    %303 = vector.shape_cast %302 : vector<8xf32> to vector<8x1xf32>
    %cst_68 = arith.constant dense<0xFF800000> : vector<8xf32>
    %304 = vector.multi_reduction <maximumf>, %287, %cst_68 [1] : vector<8x32xf32> to vector<8xf32>
    %305 = vector.shape_cast %304 : vector<8xf32> to vector<8x1xf32>
    %306 = arith.maximumf %303, %305 : vector<8x1xf32>
    %cst_69 = arith.constant dense<0xFF800000> : vector<8xf32>
    %307 = vector.multi_reduction <maximumf>, %294, %cst_69 [1] : vector<8x32xf32> to vector<8xf32>
    %308 = vector.shape_cast %307 : vector<8xf32> to vector<8x1xf32>
    %cst_70 = arith.constant dense<0xFF800000> : vector<8xf32>
    %309 = vector.multi_reduction <maximumf>, %301, %cst_70 [1] : vector<8x32xf32> to vector<8xf32>
    %310 = vector.shape_cast %309 : vector<8xf32> to vector<8x1xf32>
    %311 = arith.maximumf %308, %310 : vector<8x1xf32>
    %312 = arith.maximumf %306, %311 : vector<8x1xf32>
    %313 = vector.broadcast %312 : vector<8x1xf32> to vector<8x32xf32>
    %314 = arith.subf %280, %313 : vector<8x32xf32>
    %315 = math.exp %314 : vector<8x32xf32>
    %316 = vector.broadcast %312 : vector<8x1xf32> to vector<8x32xf32>
    %317 = arith.subf %287, %316 : vector<8x32xf32>
    %318 = math.exp %317 : vector<8x32xf32>
    %319 = vector.broadcast %312 : vector<8x1xf32> to vector<8x32xf32>
    %320 = arith.subf %294, %319 : vector<8x32xf32>
    %321 = math.exp %320 : vector<8x32xf32>
    %322 = vector.broadcast %312 : vector<8x1xf32> to vector<8x32xf32>
    %323 = arith.subf %301, %322 : vector<8x32xf32>
    %324 = math.exp %323 : vector<8x32xf32>
    %cst_71 = arith.constant dense<0.000000e+00> : vector<8xf32>
    %325 = vector.multi_reduction <add>, %315, %cst_71 [1] : vector<8x32xf32> to vector<8xf32>
    %326 = vector.shape_cast %325 : vector<8xf32> to vector<8x1xf32>
    %cst_72 = arith.constant dense<0.000000e+00> : vector<8xf32>
    %327 = vector.multi_reduction <add>, %318, %cst_72 [1] : vector<8x32xf32> to vector<8xf32>
    %328 = vector.shape_cast %327 : vector<8xf32> to vector<8x1xf32>
    %329 = arith.addf %326, %328 : vector<8x1xf32>
    %cst_73 = arith.constant dense<0.000000e+00> : vector<8xf32>
    %330 = vector.multi_reduction <add>, %321, %cst_73 [1] : vector<8x32xf32> to vector<8xf32>
    %331 = vector.shape_cast %330 : vector<8xf32> to vector<8x1xf32>
    %332 = arith.addf %329, %331 : vector<8x1xf32>
    %cst_74 = arith.constant dense<0.000000e+00> : vector<8xf32>
    %333 = vector.multi_reduction <add>, %324, %cst_74 [1] : vector<8x32xf32> to vector<8xf32>
    %334 = vector.shape_cast %333 : vector<8xf32> to vector<8x1xf32>
    %335 = arith.addf %332, %334 : vector<8x1xf32>
    %336 = vector.extract_strided_slice %315 {offsets = [0, 0], sizes = [8, 4], strides = [1, 1]} : vector<8x32xf32> to vector<8x4xf32>
    %337 = vector.broadcast %335 : vector<8x1xf32> to vector<8x4xf32>
    %338 = arith.divf %336, %337 : vector<8x4xf32>
    %339 = vector.extract_strided_slice %338 {offsets = [0, 0], sizes = [8, 1], strides = [1, 1]} : vector<8x4xf32> to vector<8x1xf32>
    %340 = vector.broadcast %339 : vector<8x1xf32> to vector<8x32xf32>
    %341 = arith.mulf %340, %268 : vector<8x32xf32>
    %342 = vector.extract_strided_slice %338 {offsets = [0, 1], sizes = [8, 1], strides = [1, 1]} : vector<8x4xf32> to vector<8x1xf32>
    %343 = vector.broadcast %342 : vector<8x1xf32> to vector<8x32xf32>
    %344 = arith.mulf %343, %269 : vector<8x32xf32>
    %345 = arith.addf %341, %344 : vector<8x32xf32>
    %346 = vector.extract_strided_slice %338 {offsets = [0, 2], sizes = [8, 1], strides = [1, 1]} : vector<8x4xf32> to vector<8x1xf32>
    %347 = vector.broadcast %346 : vector<8x1xf32> to vector<8x32xf32>
    %348 = arith.mulf %347, %270 : vector<8x32xf32>
    %349 = arith.addf %345, %348 : vector<8x32xf32>
    %350 = vector.extract_strided_slice %338 {offsets = [0, 3], sizes = [8, 1], strides = [1, 1]} : vector<8x4xf32> to vector<8x1xf32>
    %351 = vector.broadcast %350 : vector<8x1xf32> to vector<8x32xf32>
    %352 = arith.mulf %351, %271 : vector<8x32xf32>
    %353 = arith.addf %349, %352 : vector<8x32xf32>
    %354 = arith.mulf %240, %266 : vector<8x32xf32>
    %355 = arith.addf %354, %353 : vector<8x32xf32>
    %356 = math.tanh %355 : vector<8x32xf32>
    %357 = arith.mulf %356, %267 : vector<8x32xf32>
    %358 = arith.index_cast %c2_i32 : i32 to index
    %c0_75 = arith.constant 0 : index
    %c0_76 = arith.constant 0 : index
    %359 = vector.load %arg6[%358, %c0_75, %c0_76] : memref<8x8x32xf32, #tpu.memory_space<vmem>>, vector<1x8x32xf32>
    %360 = vector.shape_cast %359 : vector<1x8x32xf32> to vector<8x32xf32>
    %361 = vector.shape_cast %357 : vector<8x32xf32> to vector<1x8x32xf32>
    tpu.vector_store %arg6[%358, %c0_75, %c0_76], %361 {strides = array<i32>} : memref<8x8x32xf32, #tpu.memory_space<vmem>>, vector<1x8x32xf32>,
    %c3_i32 = arith.constant 3 : i32
    %362 = arith.index_cast %c3_i32 : i32 to index
    %c0_77 = arith.constant 0 : index
    %c0_78 = arith.constant 0 : index
    %363 = vector.load %arg0[%362, %c0_77, %c0_78] : memref<8x8x64xf32, #tpu.memory_space<vmem>>, vector<1x8x64xf32>
    %364 = vector.shape_cast %363 : vector<1x8x64xf32> to vector<8x64xf32>
    %365 = arith.truncf %357 : vector<8x32xf32> to vector<8x32xbf16>
    %cst_79 = arith.constant dense<0.000000e+00> : vector<8x384xf32>
    %366 = tpu.matmul %365, %1, %cst_79 {dimension_numbers = #tpu.dot_dimension_numbers<[1], [0], [0], [1], [0, 0, 1, 1], [], []>} : vector<8x32xbf16>, vector<32x384xbf16>, vector<8x384xf32> -> vector<8x384xf32>
    %367 = arith.truncf %364 : vector<8x64xf32> to vector<8x64xbf16>
    %cst_80 = arith.constant dense<0.000000e+00> : vector<8x384xf32>
    %368 = tpu.matmul %367, %3, %cst_80 {dimension_numbers = #tpu.dot_dimension_numbers<[1], [0], [0], [1], [0, 0, 1, 1], [], []>} : vector<8x64xbf16>, vector<64x384xbf16>, vector<8x384xf32> -> vector<8x384xf32>
    %369 = arith.addf %366, %368 : vector<8x384xf32>
    %370 = vector.broadcast %6 : vector<1x384xf32> to vector<8x384xf32>
    %371 = arith.addf %369, %370 : vector<8x384xf32>
    %372 = math.tanh %371 : vector<8x384xf32>
    %373 = arith.negf %371 : vector<8x384xf32>
    %374 = math.exp %373 : vector<8x384xf32>
    %cst_81 = arith.constant 1.000000e+00 : f32
    %375 = vector.broadcast %cst_81 : f32 to vector<8x384xf32>
    %376 = arith.addf %375, %374 : vector<8x384xf32>
    %377 = arith.divf %375, %376 : vector<8x384xf32>
    %378 = vector.extract_strided_slice %372 {offsets = [0, 0], sizes = [8, 128], strides = [1, 1]} : vector<8x384xf32> to vector<8x128xf32>
    %379 = vector.extract_strided_slice %377 {offsets = [0, 128], sizes = [8, 128], strides = [1, 1]} : vector<8x384xf32> to vector<8x128xf32>
    %380 = arith.mulf %378, %379 : vector<8x128xf32>
    %381 = vector.extract_strided_slice %377 {offsets = [0, 256], sizes = [8, 32], strides = [1, 1]} : vector<8x384xf32> to vector<8x32xf32>
    %382 = vector.extract_strided_slice %377 {offsets = [0, 288], sizes = [8, 32], strides = [1, 1]} : vector<8x384xf32> to vector<8x32xf32>
    %383 = vector.extract_strided_slice %380 {offsets = [0, 0], sizes = [8, 32], strides = [1, 1]} : vector<8x128xf32> to vector<8x32xf32>
    %384 = vector.extract_strided_slice %380 {offsets = [0, 32], sizes = [8, 32], strides = [1, 1]} : vector<8x128xf32> to vector<8x32xf32>
    %385 = vector.extract_strided_slice %380 {offsets = [0, 64], sizes = [8, 32], strides = [1, 1]} : vector<8x128xf32> to vector<8x32xf32>
    %386 = vector.extract_strided_slice %380 {offsets = [0, 96], sizes = [8, 32], strides = [1, 1]} : vector<8x128xf32> to vector<8x32xf32>
    %387 = arith.truncf %355 : vector<8x32xf32> to vector<8x32xbf16>
    %cst_82 = arith.constant dense<0.000000e+00> : vector<8x32xf32>
    %388 = tpu.matmul %387, %5, %cst_82 {dimension_numbers = #tpu.dot_dimension_numbers<[1], [0], [0], [1], [0, 0, 1, 1], [], []>} : vector<8x32xbf16>, vector<32x32xbf16>, vector<8x32xf32> -> vector<8x32xf32>
    %389 = arith.mulf %383, %388 : vector<8x32xf32>
    %cst_83 = arith.constant dense<0.000000e+00> : vector<8xf32>
    %390 = vector.multi_reduction <add>, %389, %cst_83 [1] : vector<8x32xf32> to vector<8xf32>
    %391 = vector.shape_cast %390 : vector<8xf32> to vector<8x1xf32>
    %392 = vector.broadcast %391 : vector<8x1xf32> to vector<8x32xf32>
    %393 = vector.broadcast %8 : vector<1x32xf32> to vector<8x32xf32>
    %394 = arith.addf %392, %393 : vector<8x32xf32>
    %395 = math.tanh %394 : vector<8x32xf32>
    %396 = arith.mulf %384, %388 : vector<8x32xf32>
    %cst_84 = arith.constant dense<0.000000e+00> : vector<8xf32>
    %397 = vector.multi_reduction <add>, %396, %cst_84 [1] : vector<8x32xf32> to vector<8xf32>
    %398 = vector.shape_cast %397 : vector<8xf32> to vector<8x1xf32>
    %399 = vector.broadcast %398 : vector<8x1xf32> to vector<8x32xf32>
    %400 = vector.broadcast %10 : vector<1x32xf32> to vector<8x32xf32>
    %401 = arith.addf %399, %400 : vector<8x32xf32>
    %402 = math.tanh %401 : vector<8x32xf32>
    %403 = arith.mulf %385, %388 : vector<8x32xf32>
    %cst_85 = arith.constant dense<0.000000e+00> : vector<8xf32>
    %404 = vector.multi_reduction <add>, %403, %cst_85 [1] : vector<8x32xf32> to vector<8xf32>
    %405 = vector.shape_cast %404 : vector<8xf32> to vector<8x1xf32>
    %406 = vector.broadcast %405 : vector<8x1xf32> to vector<8x32xf32>
    %407 = vector.broadcast %12 : vector<1x32xf32> to vector<8x32xf32>
    %408 = arith.addf %406, %407 : vector<8x32xf32>
    %409 = math.tanh %408 : vector<8x32xf32>
    %410 = arith.mulf %386, %388 : vector<8x32xf32>
    %cst_86 = arith.constant dense<0.000000e+00> : vector<8xf32>
    %411 = vector.multi_reduction <add>, %410, %cst_86 [1] : vector<8x32xf32> to vector<8xf32>
    %412 = vector.shape_cast %411 : vector<8xf32> to vector<8x1xf32>
    %413 = vector.broadcast %412 : vector<8x1xf32> to vector<8x32xf32>
    %414 = vector.broadcast %14 : vector<1x32xf32> to vector<8x32xf32>
    %415 = arith.addf %413, %414 : vector<8x32xf32>
    %416 = math.tanh %415 : vector<8x32xf32>
    %cst_87 = arith.constant dense<0xFF800000> : vector<8xf32>
    %417 = vector.multi_reduction <maximumf>, %395, %cst_87 [1] : vector<8x32xf32> to vector<8xf32>
    %418 = vector.shape_cast %417 : vector<8xf32> to vector<8x1xf32>
    %cst_88 = arith.constant dense<0xFF800000> : vector<8xf32>
    %419 = vector.multi_reduction <maximumf>, %402, %cst_88 [1] : vector<8x32xf32> to vector<8xf32>
    %420 = vector.shape_cast %419 : vector<8xf32> to vector<8x1xf32>
    %421 = arith.maximumf %418, %420 : vector<8x1xf32>
    %cst_89 = arith.constant dense<0xFF800000> : vector<8xf32>
    %422 = vector.multi_reduction <maximumf>, %409, %cst_89 [1] : vector<8x32xf32> to vector<8xf32>
    %423 = vector.shape_cast %422 : vector<8xf32> to vector<8x1xf32>
    %cst_90 = arith.constant dense<0xFF800000> : vector<8xf32>
    %424 = vector.multi_reduction <maximumf>, %416, %cst_90 [1] : vector<8x32xf32> to vector<8xf32>
    %425 = vector.shape_cast %424 : vector<8xf32> to vector<8x1xf32>
    %426 = arith.maximumf %423, %425 : vector<8x1xf32>
    %427 = arith.maximumf %421, %426 : vector<8x1xf32>
    %428 = vector.broadcast %427 : vector<8x1xf32> to vector<8x32xf32>
    %429 = arith.subf %395, %428 : vector<8x32xf32>
    %430 = math.exp %429 : vector<8x32xf32>
    %431 = vector.broadcast %427 : vector<8x1xf32> to vector<8x32xf32>
    %432 = arith.subf %402, %431 : vector<8x32xf32>
    %433 = math.exp %432 : vector<8x32xf32>
    %434 = vector.broadcast %427 : vector<8x1xf32> to vector<8x32xf32>
    %435 = arith.subf %409, %434 : vector<8x32xf32>
    %436 = math.exp %435 : vector<8x32xf32>
    %437 = vector.broadcast %427 : vector<8x1xf32> to vector<8x32xf32>
    %438 = arith.subf %416, %437 : vector<8x32xf32>
    %439 = math.exp %438 : vector<8x32xf32>
    %cst_91 = arith.constant dense<0.000000e+00> : vector<8xf32>
    %440 = vector.multi_reduction <add>, %430, %cst_91 [1] : vector<8x32xf32> to vector<8xf32>
    %441 = vector.shape_cast %440 : vector<8xf32> to vector<8x1xf32>
    %cst_92 = arith.constant dense<0.000000e+00> : vector<8xf32>
    %442 = vector.multi_reduction <add>, %433, %cst_92 [1] : vector<8x32xf32> to vector<8xf32>
    %443 = vector.shape_cast %442 : vector<8xf32> to vector<8x1xf32>
    %444 = arith.addf %441, %443 : vector<8x1xf32>
    %cst_93 = arith.constant dense<0.000000e+00> : vector<8xf32>
    %445 = vector.multi_reduction <add>, %436, %cst_93 [1] : vector<8x32xf32> to vector<8xf32>
    %446 = vector.shape_cast %445 : vector<8xf32> to vector<8x1xf32>
    %447 = arith.addf %444, %446 : vector<8x1xf32>
    %cst_94 = arith.constant dense<0.000000e+00> : vector<8xf32>
    %448 = vector.multi_reduction <add>, %439, %cst_94 [1] : vector<8x32xf32> to vector<8xf32>
    %449 = vector.shape_cast %448 : vector<8xf32> to vector<8x1xf32>
    %450 = arith.addf %447, %449 : vector<8x1xf32>
    %451 = vector.extract_strided_slice %430 {offsets = [0, 0], sizes = [8, 4], strides = [1, 1]} : vector<8x32xf32> to vector<8x4xf32>
    %452 = vector.broadcast %450 : vector<8x1xf32> to vector<8x4xf32>
    %453 = arith.divf %451, %452 : vector<8x4xf32>
    %454 = vector.extract_strided_slice %453 {offsets = [0, 0], sizes = [8, 1], strides = [1, 1]} : vector<8x4xf32> to vector<8x1xf32>
    %455 = vector.broadcast %454 : vector<8x1xf32> to vector<8x32xf32>
    %456 = arith.mulf %455, %383 : vector<8x32xf32>
    %457 = vector.extract_strided_slice %453 {offsets = [0, 1], sizes = [8, 1], strides = [1, 1]} : vector<8x4xf32> to vector<8x1xf32>
    %458 = vector.broadcast %457 : vector<8x1xf32> to vector<8x32xf32>
    %459 = arith.mulf %458, %384 : vector<8x32xf32>
    %460 = arith.addf %456, %459 : vector<8x32xf32>
    %461 = vector.extract_strided_slice %453 {offsets = [0, 2], sizes = [8, 1], strides = [1, 1]} : vector<8x4xf32> to vector<8x1xf32>
    %462 = vector.broadcast %461 : vector<8x1xf32> to vector<8x32xf32>
    %463 = arith.mulf %462, %385 : vector<8x32xf32>
    %464 = arith.addf %460, %463 : vector<8x32xf32>
    %465 = vector.extract_strided_slice %453 {offsets = [0, 3], sizes = [8, 1], strides = [1, 1]} : vector<8x4xf32> to vector<8x1xf32>
    %466 = vector.broadcast %465 : vector<8x1xf32> to vector<8x32xf32>
    %467 = arith.mulf %466, %386 : vector<8x32xf32>
    %468 = arith.addf %464, %467 : vector<8x32xf32>
    %469 = arith.mulf %355, %381 : vector<8x32xf32>
    %470 = arith.addf %469, %468 : vector<8x32xf32>
    %471 = math.tanh %470 : vector<8x32xf32>
    %472 = arith.mulf %471, %382 : vector<8x32xf32>
    %473 = arith.index_cast %c3_i32 : i32 to index
    %c0_95 = arith.constant 0 : index
    %c0_96 = arith.constant 0 : index
    %474 = vector.load %arg6[%473, %c0_95, %c0_96] : memref<8x8x32xf32, #tpu.memory_space<vmem>>, vector<1x8x32xf32>
    %475 = vector.shape_cast %474 : vector<1x8x32xf32> to vector<8x32xf32>
    %476 = vector.shape_cast %472 : vector<8x32xf32> to vector<1x8x32xf32>
    tpu.vector_store %arg6[%473, %c0_95, %c0_96], %476 {strides = array<i32>} : memref<8x8x32xf32, #tpu.memory_space<vmem>>, vector<1x8x32xf32>,
    %c4_i32 = arith.constant 4 : i32
    %477 = arith.index_cast %c4_i32 : i32 to index
    %c0_97 = arith.constant 0 : index
    %c0_98 = arith.constant 0 : index
    %478 = vector.load %arg0[%477, %c0_97, %c0_98] : memref<8x8x64xf32, #tpu.memory_space<vmem>>, vector<1x8x64xf32>
    %479 = vector.shape_cast %478 : vector<1x8x64xf32> to vector<8x64xf32>
    %480 = arith.truncf %472 : vector<8x32xf32> to vector<8x32xbf16>
    %cst_99 = arith.constant dense<0.000000e+00> : vector<8x384xf32>
    %481 = tpu.matmul %480, %1, %cst_99 {dimension_numbers = #tpu.dot_dimension_numbers<[1], [0], [0], [1], [0, 0, 1, 1], [], []>} : vector<8x32xbf16>, vector<32x384xbf16>, vector<8x384xf32> -> vector<8x384xf32>
    %482 = arith.truncf %479 : vector<8x64xf32> to vector<8x64xbf16>
    %cst_100 = arith.constant dense<0.000000e+00> : vector<8x384xf32>
    %483 = tpu.matmul %482, %3, %cst_100 {dimension_numbers = #tpu.dot_dimension_numbers<[1], [0], [0], [1], [0, 0, 1, 1], [], []>} : vector<8x64xbf16>, vector<64x384xbf16>, vector<8x384xf32> -> vector<8x384xf32>
    %484 = arith.addf %481, %483 : vector<8x384xf32>
    %485 = vector.broadcast %6 : vector<1x384xf32> to vector<8x384xf32>
    %486 = arith.addf %484, %485 : vector<8x384xf32>
    %487 = math.tanh %486 : vector<8x384xf32>
    %488 = arith.negf %486 : vector<8x384xf32>
    %489 = math.exp %488 : vector<8x384xf32>
    %cst_101 = arith.constant 1.000000e+00 : f32
    %490 = vector.broadcast %cst_101 : f32 to vector<8x384xf32>
    %491 = arith.addf %490, %489 : vector<8x384xf32>
    %492 = arith.divf %490, %491 : vector<8x384xf32>
    %493 = vector.extract_strided_slice %487 {offsets = [0, 0], sizes = [8, 128], strides = [1, 1]} : vector<8x384xf32> to vector<8x128xf32>
    %494 = vector.extract_strided_slice %492 {offsets = [0, 128], sizes = [8, 128], strides = [1, 1]} : vector<8x384xf32> to vector<8x128xf32>
    %495 = arith.mulf %493, %494 : vector<8x128xf32>
    %496 = vector.extract_strided_slice %492 {offsets = [0, 256], sizes = [8, 32], strides = [1, 1]} : vector<8x384xf32> to vector<8x32xf32>
    %497 = vector.extract_strided_slice %492 {offsets = [0, 288], sizes = [8, 32], strides = [1, 1]} : vector<8x384xf32> to vector<8x32xf32>
    %498 = vector.extract_strided_slice %495 {offsets = [0, 0], sizes = [8, 32], strides = [1, 1]} : vector<8x128xf32> to vector<8x32xf32>
    %499 = vector.extract_strided_slice %495 {offsets = [0, 32], sizes = [8, 32], strides = [1, 1]} : vector<8x128xf32> to vector<8x32xf32>
    %500 = vector.extract_strided_slice %495 {offsets = [0, 64], sizes = [8, 32], strides = [1, 1]} : vector<8x128xf32> to vector<8x32xf32>
    %501 = vector.extract_strided_slice %495 {offsets = [0, 96], sizes = [8, 32], strides = [1, 1]} : vector<8x128xf32> to vector<8x32xf32>
    %502 = arith.truncf %470 : vector<8x32xf32> to vector<8x32xbf16>
    %cst_102 = arith.constant dense<0.000000e+00> : vector<8x32xf32>
    %503 = tpu.matmul %502, %5, %cst_102 {dimension_numbers = #tpu.dot_dimension_numbers<[1], [0], [0], [1], [0, 0, 1, 1], [], []>} : vector<8x32xbf16>, vector<32x32xbf16>, vector<8x32xf32> -> vector<8x32xf32>
    %504 = arith.mulf %498, %503 : vector<8x32xf32>
    %cst_103 = arith.constant dense<0.000000e+00> : vector<8xf32>
    %505 = vector.multi_reduction <add>, %504, %cst_103 [1] : vector<8x32xf32> to vector<8xf32>
    %506 = vector.shape_cast %505 : vector<8xf32> to vector<8x1xf32>
    %507 = vector.broadcast %506 : vector<8x1xf32> to vector<8x32xf32>
    %508 = vector.broadcast %8 : vector<1x32xf32> to vector<8x32xf32>
    %509 = arith.addf %507, %508 : vector<8x32xf32>
    %510 = math.tanh %509 : vector<8x32xf32>
    %511 = arith.mulf %499, %503 : vector<8x32xf32>
    %cst_104 = arith.constant dense<0.000000e+00> : vector<8xf32>
    %512 = vector.multi_reduction <add>, %511, %cst_104 [1] : vector<8x32xf32> to vector<8xf32>
    %513 = vector.shape_cast %512 : vector<8xf32> to vector<8x1xf32>
    %514 = vector.broadcast %513 : vector<8x1xf32> to vector<8x32xf32>
    %515 = vector.broadcast %10 : vector<1x32xf32> to vector<8x32xf32>
    %516 = arith.addf %514, %515 : vector<8x32xf32>
    %517 = math.tanh %516 : vector<8x32xf32>
    %518 = arith.mulf %500, %503 : vector<8x32xf32>
    %cst_105 = arith.constant dense<0.000000e+00> : vector<8xf32>
    %519 = vector.multi_reduction <add>, %518, %cst_105 [1] : vector<8x32xf32> to vector<8xf32>
    %520 = vector.shape_cast %519 : vector<8xf32> to vector<8x1xf32>
    %521 = vector.broadcast %520 : vector<8x1xf32> to vector<8x32xf32>
    %522 = vector.broadcast %12 : vector<1x32xf32> to vector<8x32xf32>
    %523 = arith.addf %521, %522 : vector<8x32xf32>
    %524 = math.tanh %523 : vector<8x32xf32>
    %525 = arith.mulf %501, %503 : vector<8x32xf32>
    %cst_106 = arith.constant dense<0.000000e+00> : vector<8xf32>
    %526 = vector.multi_reduction <add>, %525, %cst_106 [1] : vector<8x32xf32> to vector<8xf32>
    %527 = vector.shape_cast %526 : vector<8xf32> to vector<8x1xf32>
    %528 = vector.broadcast %527 : vector<8x1xf32> to vector<8x32xf32>
    %529 = vector.broadcast %14 : vector<1x32xf32> to vector<8x32xf32>
    %530 = arith.addf %528, %529 : vector<8x32xf32>
    %531 = math.tanh %530 : vector<8x32xf32>
    %cst_107 = arith.constant dense<0xFF800000> : vector<8xf32>
    %532 = vector.multi_reduction <maximumf>, %510, %cst_107 [1] : vector<8x32xf32> to vector<8xf32>
    %533 = vector.shape_cast %532 : vector<8xf32> to vector<8x1xf32>
    %cst_108 = arith.constant dense<0xFF800000> : vector<8xf32>
    %534 = vector.multi_reduction <maximumf>, %517, %cst_108 [1] : vector<8x32xf32> to vector<8xf32>
    %535 = vector.shape_cast %534 : vector<8xf32> to vector<8x1xf32>
    %536 = arith.maximumf %533, %535 : vector<8x1xf32>
    %cst_109 = arith.constant dense<0xFF800000> : vector<8xf32>
    %537 = vector.multi_reduction <maximumf>, %524, %cst_109 [1] : vector<8x32xf32> to vector<8xf32>
    %538 = vector.shape_cast %537 : vector<8xf32> to vector<8x1xf32>
    %cst_110 = arith.constant dense<0xFF800000> : vector<8xf32>
    %539 = vector.multi_reduction <maximumf>, %531, %cst_110 [1] : vector<8x32xf32> to vector<8xf32>
    %540 = vector.shape_cast %539 : vector<8xf32> to vector<8x1xf32>
    %541 = arith.maximumf %538, %540 : vector<8x1xf32>
    %542 = arith.maximumf %536, %541 : vector<8x1xf32>
    %543 = vector.broadcast %542 : vector<8x1xf32> to vector<8x32xf32>
    %544 = arith.subf %510, %543 : vector<8x32xf32>
    %545 = math.exp %544 : vector<8x32xf32>
    %546 = vector.broadcast %542 : vector<8x1xf32> to vector<8x32xf32>
    %547 = arith.subf %517, %546 : vector<8x32xf32>
    %548 = math.exp %547 : vector<8x32xf32>
    %549 = vector.broadcast %542 : vector<8x1xf32> to vector<8x32xf32>
    %550 = arith.subf %524, %549 : vector<8x32xf32>
    %551 = math.exp %550 : vector<8x32xf32>
    %552 = vector.broadcast %542 : vector<8x1xf32> to vector<8x32xf32>
    %553 = arith.subf %531, %552 : vector<8x32xf32>
    %554 = math.exp %553 : vector<8x32xf32>
    %cst_111 = arith.constant dense<0.000000e+00> : vector<8xf32>
    %555 = vector.multi_reduction <add>, %545, %cst_111 [1] : vector<8x32xf32> to vector<8xf32>
    %556 = vector.shape_cast %555 : vector<8xf32> to vector<8x1xf32>
    %cst_112 = arith.constant dense<0.000000e+00> : vector<8xf32>
    %557 = vector.multi_reduction <add>, %548, %cst_112 [1] : vector<8x32xf32> to vector<8xf32>
    %558 = vector.shape_cast %557 : vector<8xf32> to vector<8x1xf32>
    %559 = arith.addf %556, %558 : vector<8x1xf32>
    %cst_113 = arith.constant dense<0.000000e+00> : vector<8xf32>
    %560 = vector.multi_reduction <add>, %551, %cst_113 [1] : vector<8x32xf32> to vector<8xf32>
    %561 = vector.shape_cast %560 : vector<8xf32> to vector<8x1xf32>
    %562 = arith.addf %559, %561 : vector<8x1xf32>
    %cst_114 = arith.constant dense<0.000000e+00> : vector<8xf32>
    %563 = vector.multi_reduction <add>, %554, %cst_114 [1] : vector<8x32xf32> to vector<8xf32>
    %564 = vector.shape_cast %563 : vector<8xf32> to vector<8x1xf32>
    %565 = arith.addf %562, %564 : vector<8x1xf32>
    %566 = vector.extract_strided_slice %545 {offsets = [0, 0], sizes = [8, 4], strides = [1, 1]} : vector<8x32xf32> to vector<8x4xf32>
    %567 = vector.broadcast %565 : vector<8x1xf32> to vector<8x4xf32>
    %568 = arith.divf %566, %567 : vector<8x4xf32>
    %569 = vector.extract_strided_slice %568 {offsets = [0, 0], sizes = [8, 1], strides = [1, 1]} : vector<8x4xf32> to vector<8x1xf32>
    %570 = vector.broadcast %569 : vector<8x1xf32> to vector<8x32xf32>
    %571 = arith.mulf %570, %498 : vector<8x32xf32>
    %572 = vector.extract_strided_slice %568 {offsets = [0, 1], sizes = [8, 1], strides = [1, 1]} : vector<8x4xf32> to vector<8x1xf32>
    %573 = vector.broadcast %572 : vector<8x1xf32> to vector<8x32xf32>
    %574 = arith.mulf %573, %499 : vector<8x32xf32>
    %575 = arith.addf %571, %574 : vector<8x32xf32>
    %576 = vector.extract_strided_slice %568 {offsets = [0, 2], sizes = [8, 1], strides = [1, 1]} : vector<8x4xf32> to vector<8x1xf32>
    %577 = vector.broadcast %576 : vector<8x1xf32> to vector<8x32xf32>
    %578 = arith.mulf %577, %500 : vector<8x32xf32>
    %579 = arith.addf %575, %578 : vector<8x32xf32>
    %580 = vector.extract_strided_slice %568 {offsets = [0, 3], sizes = [8, 1], strides = [1, 1]} : vector<8x4xf32> to vector<8x1xf32>
    %581 = vector.broadcast %580 : vector<8x1xf32> to vector<8x32xf32>
    %582 = arith.mulf %581, %501 : vector<8x32xf32>
    %583 = arith.addf %579, %582 : vector<8x32xf32>
    %584 = arith.mulf %470, %496 : vector<8x32xf32>
    %585 = arith.addf %584, %583 : vector<8x32xf32>
    %586 = math.tanh %585 : vector<8x32xf32>
    %587 = arith.mulf %586, %497 : vector<8x32xf32>
    %588 = arith.index_cast %c4_i32 : i32 to index
    %c0_115 = arith.constant 0 : index
    %c0_116 = arith.constant 0 : index
    %589 = vector.load %arg6[%588, %c0_115, %c0_116] : memref<8x8x32xf32, #tpu.memory_space<vmem>>, vector<1x8x32xf32>
    %590 = vector.shape_cast %589 : vector<1x8x32xf32> to vector<8x32xf32>
    %591 = vector.shape_cast %587 : vector<8x32xf32> to vector<1x8x32xf32>
    tpu.vector_store %arg6[%588, %c0_115, %c0_116], %591 {strides = array<i32>} : memref<8x8x32xf32, #tpu.memory_space<vmem>>, vector<1x8x32xf32>,
    %c5_i32 = arith.constant 5 : i32
    %592 = arith.index_cast %c5_i32 : i32 to index
    %c0_117 = arith.constant 0 : index
    %c0_118 = arith.constant 0 : index
    %593 = vector.load %arg0[%592, %c0_117, %c0_118] : memref<8x8x64xf32, #tpu.memory_space<vmem>>, vector<1x8x64xf32>
    %594 = vector.shape_cast %593 : vector<1x8x64xf32> to vector<8x64xf32>
    %595 = arith.truncf %587 : vector<8x32xf32> to vector<8x32xbf16>
    %cst_119 = arith.constant dense<0.000000e+00> : vector<8x384xf32>
    %596 = tpu.matmul %595, %1, %cst_119 {dimension_numbers = #tpu.dot_dimension_numbers<[1], [0], [0], [1], [0, 0, 1, 1], [], []>} : vector<8x32xbf16>, vector<32x384xbf16>, vector<8x384xf32> -> vector<8x384xf32>
    %597 = arith.truncf %594 : vector<8x64xf32> to vector<8x64xbf16>
    %cst_120 = arith.constant dense<0.000000e+00> : vector<8x384xf32>
    %598 = tpu.matmul %597, %3, %cst_120 {dimension_numbers = #tpu.dot_dimension_numbers<[1], [0], [0], [1], [0, 0, 1, 1], [], []>} : vector<8x64xbf16>, vector<64x384xbf16>, vector<8x384xf32> -> vector<8x384xf32>
    %599 = arith.addf %596, %598 : vector<8x384xf32>
    %600 = vector.broadcast %6 : vector<1x384xf32> to vector<8x384xf32>
    %601 = arith.addf %599, %600 : vector<8x384xf32>
    %602 = math.tanh %601 : vector<8x384xf32>
    %603 = arith.negf %601 : vector<8x384xf32>
    %604 = math.exp %603 : vector<8x384xf32>
    %cst_121 = arith.constant 1.000000e+00 : f32
    %605 = vector.broadcast %cst_121 : f32 to vector<8x384xf32>
    %606 = arith.addf %605, %604 : vector<8x384xf32>
    %607 = arith.divf %605, %606 : vector<8x384xf32>
    %608 = vector.extract_strided_slice %602 {offsets = [0, 0], sizes = [8, 128], strides = [1, 1]} : vector<8x384xf32> to vector<8x128xf32>
    %609 = vector.extract_strided_slice %607 {offsets = [0, 128], sizes = [8, 128], strides = [1, 1]} : vector<8x384xf32> to vector<8x128xf32>
    %610 = arith.mulf %608, %609 : vector<8x128xf32>
    %611 = vector.extract_strided_slice %607 {offsets = [0, 256], sizes = [8, 32], strides = [1, 1]} : vector<8x384xf32> to vector<8x32xf32>
    %612 = vector.extract_strided_slice %607 {offsets = [0, 288], sizes = [8, 32], strides = [1, 1]} : vector<8x384xf32> to vector<8x32xf32>
    %613 = vector.extract_strided_slice %610 {offsets = [0, 0], sizes = [8, 32], strides = [1, 1]} : vector<8x128xf32> to vector<8x32xf32>
    %614 = vector.extract_strided_slice %610 {offsets = [0, 32], sizes = [8, 32], strides = [1, 1]} : vector<8x128xf32> to vector<8x32xf32>
    %615 = vector.extract_strided_slice %610 {offsets = [0, 64], sizes = [8, 32], strides = [1, 1]} : vector<8x128xf32> to vector<8x32xf32>
    %616 = vector.extract_strided_slice %610 {offsets = [0, 96], sizes = [8, 32], strides = [1, 1]} : vector<8x128xf32> to vector<8x32xf32>
    %617 = arith.truncf %585 : vector<8x32xf32> to vector<8x32xbf16>
    %cst_122 = arith.constant dense<0.000000e+00> : vector<8x32xf32>
    %618 = tpu.matmul %617, %5, %cst_122 {dimension_numbers = #tpu.dot_dimension_numbers<[1], [0], [0], [1], [0, 0, 1, 1], [], []>} : vector<8x32xbf16>, vector<32x32xbf16>, vector<8x32xf32> -> vector<8x32xf32>
    %619 = arith.mulf %613, %618 : vector<8x32xf32>
    %cst_123 = arith.constant dense<0.000000e+00> : vector<8xf32>
    %620 = vector.multi_reduction <add>, %619, %cst_123 [1] : vector<8x32xf32> to vector<8xf32>
    %621 = vector.shape_cast %620 : vector<8xf32> to vector<8x1xf32>
    %622 = vector.broadcast %621 : vector<8x1xf32> to vector<8x32xf32>
    %623 = vector.broadcast %8 : vector<1x32xf32> to vector<8x32xf32>
    %624 = arith.addf %622, %623 : vector<8x32xf32>
    %625 = math.tanh %624 : vector<8x32xf32>
    %626 = arith.mulf %614, %618 : vector<8x32xf32>
    %cst_124 = arith.constant dense<0.000000e+00> : vector<8xf32>
    %627 = vector.multi_reduction <add>, %626, %cst_124 [1] : vector<8x32xf32> to vector<8xf32>
    %628 = vector.shape_cast %627 : vector<8xf32> to vector<8x1xf32>
    %629 = vector.broadcast %628 : vector<8x1xf32> to vector<8x32xf32>
    %630 = vector.broadcast %10 : vector<1x32xf32> to vector<8x32xf32>
    %631 = arith.addf %629, %630 : vector<8x32xf32>
    %632 = math.tanh %631 : vector<8x32xf32>
    %633 = arith.mulf %615, %618 : vector<8x32xf32>
    %cst_125 = arith.constant dense<0.000000e+00> : vector<8xf32>
    %634 = vector.multi_reduction <add>, %633, %cst_125 [1] : vector<8x32xf32> to vector<8xf32>
    %635 = vector.shape_cast %634 : vector<8xf32> to vector<8x1xf32>
    %636 = vector.broadcast %635 : vector<8x1xf32> to vector<8x32xf32>
    %637 = vector.broadcast %12 : vector<1x32xf32> to vector<8x32xf32>
    %638 = arith.addf %636, %637 : vector<8x32xf32>
    %639 = math.tanh %638 : vector<8x32xf32>
    %640 = arith.mulf %616, %618 : vector<8x32xf32>
    %cst_126 = arith.constant dense<0.000000e+00> : vector<8xf32>
    %641 = vector.multi_reduction <add>, %640, %cst_126 [1] : vector<8x32xf32> to vector<8xf32>
    %642 = vector.shape_cast %641 : vector<8xf32> to vector<8x1xf32>
    %643 = vector.broadcast %642 : vector<8x1xf32> to vector<8x32xf32>
    %644 = vector.broadcast %14 : vector<1x32xf32> to vector<8x32xf32>
    %645 = arith.addf %643, %644 : vector<8x32xf32>
    %646 = math.tanh %645 : vector<8x32xf32>
    %cst_127 = arith.constant dense<0xFF800000> : vector<8xf32>
    %647 = vector.multi_reduction <maximumf>, %625, %cst_127 [1] : vector<8x32xf32> to vector<8xf32>
    %648 = vector.shape_cast %647 : vector<8xf32> to vector<8x1xf32>
    %cst_128 = arith.constant dense<0xFF800000> : vector<8xf32>
    %649 = vector.multi_reduction <maximumf>, %632, %cst_128 [1] : vector<8x32xf32> to vector<8xf32>
    %650 = vector.shape_cast %649 : vector<8xf32> to vector<8x1xf32>
    %651 = arith.maximumf %648, %650 : vector<8x1xf32>
    %cst_129 = arith.constant dense<0xFF800000> : vector<8xf32>
    %652 = vector.multi_reduction <maximumf>, %639, %cst_129 [1] : vector<8x32xf32> to vector<8xf32>
    %653 = vector.shape_cast %652 : vector<8xf32> to vector<8x1xf32>
    %cst_130 = arith.constant dense<0xFF800000> : vector<8xf32>
    %654 = vector.multi_reduction <maximumf>, %646, %cst_130 [1] : vector<8x32xf32> to vector<8xf32>
    %655 = vector.shape_cast %654 : vector<8xf32> to vector<8x1xf32>
    %656 = arith.maximumf %653, %655 : vector<8x1xf32>
    %657 = arith.maximumf %651, %656 : vector<8x1xf32>
    %658 = vector.broadcast %657 : vector<8x1xf32> to vector<8x32xf32>
    %659 = arith.subf %625, %658 : vector<8x32xf32>
    %660 = math.exp %659 : vector<8x32xf32>
    %661 = vector.broadcast %657 : vector<8x1xf32> to vector<8x32xf32>
    %662 = arith.subf %632, %661 : vector<8x32xf32>
    %663 = math.exp %662 : vector<8x32xf32>
    %664 = vector.broadcast %657 : vector<8x1xf32> to vector<8x32xf32>
    %665 = arith.subf %639, %664 : vector<8x32xf32>
    %666 = math.exp %665 : vector<8x32xf32>
    %667 = vector.broadcast %657 : vector<8x1xf32> to vector<8x32xf32>
    %668 = arith.subf %646, %667 : vector<8x32xf32>
    %669 = math.exp %668 : vector<8x32xf32>
    %cst_131 = arith.constant dense<0.000000e+00> : vector<8xf32>
    %670 = vector.multi_reduction <add>, %660, %cst_131 [1] : vector<8x32xf32> to vector<8xf32>
    %671 = vector.shape_cast %670 : vector<8xf32> to vector<8x1xf32>
    %cst_132 = arith.constant dense<0.000000e+00> : vector<8xf32>
    %672 = vector.multi_reduction <add>, %663, %cst_132 [1] : vector<8x32xf32> to vector<8xf32>
    %673 = vector.shape_cast %672 : vector<8xf32> to vector<8x1xf32>
    %674 = arith.addf %671, %673 : vector<8x1xf32>
    %cst_133 = arith.constant dense<0.000000e+00> : vector<8xf32>
    %675 = vector.multi_reduction <add>, %666, %cst_133 [1] : vector<8x32xf32> to vector<8xf32>
    %676 = vector.shape_cast %675 : vector<8xf32> to vector<8x1xf32>
    %677 = arith.addf %674, %676 : vector<8x1xf32>
    %cst_134 = arith.constant dense<0.000000e+00> : vector<8xf32>
    %678 = vector.multi_reduction <add>, %669, %cst_134 [1] : vector<8x32xf32> to vector<8xf32>
    %679 = vector.shape_cast %678 : vector<8xf32> to vector<8x1xf32>
    %680 = arith.addf %677, %679 : vector<8x1xf32>
    %681 = vector.extract_strided_slice %660 {offsets = [0, 0], sizes = [8, 4], strides = [1, 1]} : vector<8x32xf32> to vector<8x4xf32>
    %682 = vector.broadcast %680 : vector<8x1xf32> to vector<8x4xf32>
    %683 = arith.divf %681, %682 : vector<8x4xf32>
    %684 = vector.extract_strided_slice %683 {offsets = [0, 0], sizes = [8, 1], strides = [1, 1]} : vector<8x4xf32> to vector<8x1xf32>
    %685 = vector.broadcast %684 : vector<8x1xf32> to vector<8x32xf32>
    %686 = arith.mulf %685, %613 : vector<8x32xf32>
    %687 = vector.extract_strided_slice %683 {offsets = [0, 1], sizes = [8, 1], strides = [1, 1]} : vector<8x4xf32> to vector<8x1xf32>
    %688 = vector.broadcast %687 : vector<8x1xf32> to vector<8x32xf32>
    %689 = arith.mulf %688, %614 : vector<8x32xf32>
    %690 = arith.addf %686, %689 : vector<8x32xf32>
    %691 = vector.extract_strided_slice %683 {offsets = [0, 2], sizes = [8, 1], strides = [1, 1]} : vector<8x4xf32> to vector<8x1xf32>
    %692 = vector.broadcast %691 : vector<8x1xf32> to vector<8x32xf32>
    %693 = arith.mulf %692, %615 : vector<8x32xf32>
    %694 = arith.addf %690, %693 : vector<8x32xf32>
    %695 = vector.extract_strided_slice %683 {offsets = [0, 3], sizes = [8, 1], strides = [1, 1]} : vector<8x4xf32> to vector<8x1xf32>
    %696 = vector.broadcast %695 : vector<8x1xf32> to vector<8x32xf32>
    %697 = arith.mulf %696, %616 : vector<8x32xf32>
    %698 = arith.addf %694, %697 : vector<8x32xf32>
    %699 = arith.mulf %585, %611 : vector<8x32xf32>
    %700 = arith.addf %699, %698 : vector<8x32xf32>
    %701 = math.tanh %700 : vector<8x32xf32>
    %702 = arith.mulf %701, %612 : vector<8x32xf32>
    %703 = arith.index_cast %c5_i32 : i32 to index
    %c0_135 = arith.constant 0 : index
    %c0_136 = arith.constant 0 : index
    %704 = vector.load %arg6[%703, %c0_135, %c0_136] : memref<8x8x32xf32, #tpu.memory_space<vmem>>, vector<1x8x32xf32>
    %705 = vector.shape_cast %704 : vector<1x8x32xf32> to vector<8x32xf32>
    %706 = vector.shape_cast %702 : vector<8x32xf32> to vector<1x8x32xf32>
    tpu.vector_store %arg6[%703, %c0_135, %c0_136], %706 {strides = array<i32>} : memref<8x8x32xf32, #tpu.memory_space<vmem>>, vector<1x8x32xf32>,
    %c6_i32 = arith.constant 6 : i32
    %707 = arith.index_cast %c6_i32 : i32 to index
    %c0_137 = arith.constant 0 : index
    %c0_138 = arith.constant 0 : index
    %708 = vector.load %arg0[%707, %c0_137, %c0_138] : memref<8x8x64xf32, #tpu.memory_space<vmem>>, vector<1x8x64xf32>
    %709 = vector.shape_cast %708 : vector<1x8x64xf32> to vector<8x64xf32>
    %710 = arith.truncf %702 : vector<8x32xf32> to vector<8x32xbf16>
    %cst_139 = arith.constant dense<0.000000e+00> : vector<8x384xf32>
    %711 = tpu.matmul %710, %1, %cst_139 {dimension_numbers = #tpu.dot_dimension_numbers<[1], [0], [0], [1], [0, 0, 1, 1], [], []>} : vector<8x32xbf16>, vector<32x384xbf16>, vector<8x384xf32> -> vector<8x384xf32>
    %712 = arith.truncf %709 : vector<8x64xf32> to vector<8x64xbf16>
    %cst_140 = arith.constant dense<0.000000e+00> : vector<8x384xf32>
    %713 = tpu.matmul %712, %3, %cst_140 {dimension_numbers = #tpu.dot_dimension_numbers<[1], [0], [0], [1], [0, 0, 1, 1], [], []>} : vector<8x64xbf16>, vector<64x384xbf16>, vector<8x384xf32> -> vector<8x384xf32>
    %714 = arith.addf %711, %713 : vector<8x384xf32>
    %715 = vector.broadcast %6 : vector<1x384xf32> to vector<8x384xf32>
    %716 = arith.addf %714, %715 : vector<8x384xf32>
    %717 = math.tanh %716 : vector<8x384xf32>
    %718 = arith.negf %716 : vector<8x384xf32>
    %719 = math.exp %718 : vector<8x384xf32>
    %cst_141 = arith.constant 1.000000e+00 : f32
    %720 = vector.broadcast %cst_141 : f32 to vector<8x384xf32>
    %721 = arith.addf %720, %719 : vector<8x384xf32>
    %722 = arith.divf %720, %721 : vector<8x384xf32>
    %723 = vector.extract_strided_slice %717 {offsets = [0, 0], sizes = [8, 128], strides = [1, 1]} : vector<8x384xf32> to vector<8x128xf32>
    %724 = vector.extract_strided_slice %722 {offsets = [0, 128], sizes = [8, 128], strides = [1, 1]} : vector<8x384xf32> to vector<8x128xf32>
    %725 = arith.mulf %723, %724 : vector<8x128xf32>
    %726 = vector.extract_strided_slice %722 {offsets = [0, 256], sizes = [8, 32], strides = [1, 1]} : vector<8x384xf32> to vector<8x32xf32>
    %727 = vector.extract_strided_slice %722 {offsets = [0, 288], sizes = [8, 32], strides = [1, 1]} : vector<8x384xf32> to vector<8x32xf32>
    %728 = vector.extract_strided_slice %725 {offsets = [0, 0], sizes = [8, 32], strides = [1, 1]} : vector<8x128xf32> to vector<8x32xf32>
    %729 = vector.extract_strided_slice %725 {offsets = [0, 32], sizes = [8, 32], strides = [1, 1]} : vector<8x128xf32> to vector<8x32xf32>
    %730 = vector.extract_strided_slice %725 {offsets = [0, 64], sizes = [8, 32], strides = [1, 1]} : vector<8x128xf32> to vector<8x32xf32>
    %731 = vector.extract_strided_slice %725 {offsets = [0, 96], sizes = [8, 32], strides = [1, 1]} : vector<8x128xf32> to vector<8x32xf32>
    %732 = arith.truncf %700 : vector<8x32xf32> to vector<8x32xbf16>
    %cst_142 = arith.constant dense<0.000000e+00> : vector<8x32xf32>
    %733 = tpu.matmul %732, %5, %cst_142 {dimension_numbers = #tpu.dot_dimension_numbers<[1], [0], [0], [1], [0, 0, 1, 1], [], []>} : vector<8x32xbf16>, vector<32x32xbf16>, vector<8x32xf32> -> vector<8x32xf32>
    %734 = arith.mulf %728, %733 : vector<8x32xf32>
    %cst_143 = arith.constant dense<0.000000e+00> : vector<8xf32>
    %735 = vector.multi_reduction <add>, %734, %cst_143 [1] : vector<8x32xf32> to vector<8xf32>
    %736 = vector.shape_cast %735 : vector<8xf32> to vector<8x1xf32>
    %737 = vector.broadcast %736 : vector<8x1xf32> to vector<8x32xf32>
    %738 = vector.broadcast %8 : vector<1x32xf32> to vector<8x32xf32>
    %739 = arith.addf %737, %738 : vector<8x32xf32>
    %740 = math.tanh %739 : vector<8x32xf32>
    %741 = arith.mulf %729, %733 : vector<8x32xf32>
    %cst_144 = arith.constant dense<0.000000e+00> : vector<8xf32>
    %742 = vector.multi_reduction <add>, %741, %cst_144 [1] : vector<8x32xf32> to vector<8xf32>
    %743 = vector.shape_cast %742 : vector<8xf32> to vector<8x1xf32>
    %744 = vector.broadcast %743 : vector<8x1xf32> to vector<8x32xf32>
    %745 = vector.broadcast %10 : vector<1x32xf32> to vector<8x32xf32>
    %746 = arith.addf %744, %745 : vector<8x32xf32>
    %747 = math.tanh %746 : vector<8x32xf32>
    %748 = arith.mulf %730, %733 : vector<8x32xf32>
    %cst_145 = arith.constant dense<0.000000e+00> : vector<8xf32>
    %749 = vector.multi_reduction <add>, %748, %cst_145 [1] : vector<8x32xf32> to vector<8xf32>
    %750 = vector.shape_cast %749 : vector<8xf32> to vector<8x1xf32>
    %751 = vector.broadcast %750 : vector<8x1xf32> to vector<8x32xf32>
    %752 = vector.broadcast %12 : vector<1x32xf32> to vector<8x32xf32>
    %753 = arith.addf %751, %752 : vector<8x32xf32>
    %754 = math.tanh %753 : vector<8x32xf32>
    %755 = arith.mulf %731, %733 : vector<8x32xf32>
    %cst_146 = arith.constant dense<0.000000e+00> : vector<8xf32>
    %756 = vector.multi_reduction <add>, %755, %cst_146 [1] : vector<8x32xf32> to vector<8xf32>
    %757 = vector.shape_cast %756 : vector<8xf32> to vector<8x1xf32>
    %758 = vector.broadcast %757 : vector<8x1xf32> to vector<8x32xf32>
    %759 = vector.broadcast %14 : vector<1x32xf32> to vector<8x32xf32>
    %760 = arith.addf %758, %759 : vector<8x32xf32>
    %761 = math.tanh %760 : vector<8x32xf32>
    %cst_147 = arith.constant dense<0xFF800000> : vector<8xf32>
    %762 = vector.multi_reduction <maximumf>, %740, %cst_147 [1] : vector<8x32xf32> to vector<8xf32>
    %763 = vector.shape_cast %762 : vector<8xf32> to vector<8x1xf32>
    %cst_148 = arith.constant dense<0xFF800000> : vector<8xf32>
    %764 = vector.multi_reduction <maximumf>, %747, %cst_148 [1] : vector<8x32xf32> to vector<8xf32>
    %765 = vector.shape_cast %764 : vector<8xf32> to vector<8x1xf32>
    %766 = arith.maximumf %763, %765 : vector<8x1xf32>
    %cst_149 = arith.constant dense<0xFF800000> : vector<8xf32>
    %767 = vector.multi_reduction <maximumf>, %754, %cst_149 [1] : vector<8x32xf32> to vector<8xf32>
    %768 = vector.shape_cast %767 : vector<8xf32> to vector<8x1xf32>
    %cst_150 = arith.constant dense<0xFF800000> : vector<8xf32>
    %769 = vector.multi_reduction <maximumf>, %761, %cst_150 [1] : vector<8x32xf32> to vector<8xf32>
    %770 = vector.shape_cast %769 : vector<8xf32> to vector<8x1xf32>
    %771 = arith.maximumf %768, %770 : vector<8x1xf32>
    %772 = arith.maximumf %766, %771 : vector<8x1xf32>
    %773 = vector.broadcast %772 : vector<8x1xf32> to vector<8x32xf32>
    %774 = arith.subf %740, %773 : vector<8x32xf32>
    %775 = math.exp %774 : vector<8x32xf32>
    %776 = vector.broadcast %772 : vector<8x1xf32> to vector<8x32xf32>
    %777 = arith.subf %747, %776 : vector<8x32xf32>
    %778 = math.exp %777 : vector<8x32xf32>
    %779 = vector.broadcast %772 : vector<8x1xf32> to vector<8x32xf32>
    %780 = arith.subf %754, %779 : vector<8x32xf32>
    %781 = math.exp %780 : vector<8x32xf32>
    %782 = vector.broadcast %772 : vector<8x1xf32> to vector<8x32xf32>
    %783 = arith.subf %761, %782 : vector<8x32xf32>
    %784 = math.exp %783 : vector<8x32xf32>
    %cst_151 = arith.constant dense<0.000000e+00> : vector<8xf32>
    %785 = vector.multi_reduction <add>, %775, %cst_151 [1] : vector<8x32xf32> to vector<8xf32>
    %786 = vector.shape_cast %785 : vector<8xf32> to vector<8x1xf32>
    %cst_152 = arith.constant dense<0.000000e+00> : vector<8xf32>
    %787 = vector.multi_reduction <add>, %778, %cst_152 [1] : vector<8x32xf32> to vector<8xf32>
    %788 = vector.shape_cast %787 : vector<8xf32> to vector<8x1xf32>
    %789 = arith.addf %786, %788 : vector<8x1xf32>
    %cst_153 = arith.constant dense<0.000000e+00> : vector<8xf32>
    %790 = vector.multi_reduction <add>, %781, %cst_153 [1] : vector<8x32xf32> to vector<8xf32>
    %791 = vector.shape_cast %790 : vector<8xf32> to vector<8x1xf32>
    %792 = arith.addf %789, %791 : vector<8x1xf32>
    %cst_154 = arith.constant dense<0.000000e+00> : vector<8xf32>
    %793 = vector.multi_reduction <add>, %784, %cst_154 [1] : vector<8x32xf32> to vector<8xf32>
    %794 = vector.shape_cast %793 : vector<8xf32> to vector<8x1xf32>
    %795 = arith.addf %792, %794 : vector<8x1xf32>
    %796 = vector.extract_strided_slice %775 {offsets = [0, 0], sizes = [8, 4], strides = [1, 1]} : vector<8x32xf32> to vector<8x4xf32>
    %797 = vector.broadcast %795 : vector<8x1xf32> to vector<8x4xf32>
    %798 = arith.divf %796, %797 : vector<8x4xf32>
    %799 = vector.extract_strided_slice %798 {offsets = [0, 0], sizes = [8, 1], strides = [1, 1]} : vector<8x4xf32> to vector<8x1xf32>
    %800 = vector.broadcast %799 : vector<8x1xf32> to vector<8x32xf32>
    %801 = arith.mulf %800, %728 : vector<8x32xf32>
    %802 = vector.extract_strided_slice %798 {offsets = [0, 1], sizes = [8, 1], strides = [1, 1]} : vector<8x4xf32> to vector<8x1xf32>
    %803 = vector.broadcast %802 : vector<8x1xf32> to vector<8x32xf32>
    %804 = arith.mulf %803, %729 : vector<8x32xf32>
    %805 = arith.addf %801, %804 : vector<8x32xf32>
    %806 = vector.extract_strided_slice %798 {offsets = [0, 2], sizes = [8, 1], strides = [1, 1]} : vector<8x4xf32> to vector<8x1xf32>
    %807 = vector.broadcast %806 : vector<8x1xf32> to vector<8x32xf32>
    %808 = arith.mulf %807, %730 : vector<8x32xf32>
    %809 = arith.addf %805, %808 : vector<8x32xf32>
    %810 = vector.extract_strided_slice %798 {offsets = [0, 3], sizes = [8, 1], strides = [1, 1]} : vector<8x4xf32> to vector<8x1xf32>
    %811 = vector.broadcast %810 : vector<8x1xf32> to vector<8x32xf32>
    %812 = arith.mulf %811, %731 : vector<8x32xf32>
    %813 = arith.addf %809, %812 : vector<8x32xf32>
    %814 = arith.mulf %700, %726 : vector<8x32xf32>
    %815 = arith.addf %814, %813 : vector<8x32xf32>
    %816 = math.tanh %815 : vector<8x32xf32>
    %817 = arith.mulf %816, %727 : vector<8x32xf32>
    %818 = arith.index_cast %c6_i32 : i32 to index
    %c0_155 = arith.constant 0 : index
    %c0_156 = arith.constant 0 : index
    %819 = vector.load %arg6[%818, %c0_155, %c0_156] : memref<8x8x32xf32, #tpu.memory_space<vmem>>, vector<1x8x32xf32>
    %820 = vector.shape_cast %819 : vector<1x8x32xf32> to vector<8x32xf32>
    %821 = vector.shape_cast %817 : vector<8x32xf32> to vector<1x8x32xf32>
    tpu.vector_store %arg6[%818, %c0_155, %c0_156], %821 {strides = array<i32>} : memref<8x8x32xf32, #tpu.memory_space<vmem>>, vector<1x8x32xf32>,
    %c7_i32 = arith.constant 7 : i32
    %822 = arith.index_cast %c7_i32 : i32 to index
    %c0_157 = arith.constant 0 : index
    %c0_158 = arith.constant 0 : index
    %823 = vector.load %arg0[%822, %c0_157, %c0_158] : memref<8x8x64xf32, #tpu.memory_space<vmem>>, vector<1x8x64xf32>
    %824 = vector.shape_cast %823 : vector<1x8x64xf32> to vector<8x64xf32>
    %825 = arith.truncf %817 : vector<8x32xf32> to vector<8x32xbf16>
    %cst_159 = arith.constant dense<0.000000e+00> : vector<8x384xf32>
    %826 = tpu.matmul %825, %1, %cst_159 {dimension_numbers = #tpu.dot_dimension_numbers<[1], [0], [0], [1], [0, 0, 1, 1], [], []>} : vector<8x32xbf16>, vector<32x384xbf16>, vector<8x384xf32> -> vector<8x384xf32>
    %827 = arith.truncf %824 : vector<8x64xf32> to vector<8x64xbf16>
    %cst_160 = arith.constant dense<0.000000e+00> : vector<8x384xf32>
    %828 = tpu.matmul %827, %3, %cst_160 {dimension_numbers = #tpu.dot_dimension_numbers<[1], [0], [0], [1], [0, 0, 1, 1], [], []>} : vector<8x64xbf16>, vector<64x384xbf16>, vector<8x384xf32> -> vector<8x384xf32>
    %829 = arith.addf %826, %828 : vector<8x384xf32>
    %830 = vector.broadcast %6 : vector<1x384xf32> to vector<8x384xf32>
    %831 = arith.addf %829, %830 : vector<8x384xf32>
    %832 = math.tanh %831 : vector<8x384xf32>
    %833 = arith.negf %831 : vector<8x384xf32>
    %834 = math.exp %833 : vector<8x384xf32>
    %cst_161 = arith.constant 1.000000e+00 : f32
    %835 = vector.broadcast %cst_161 : f32 to vector<8x384xf32>
    %836 = arith.addf %835, %834 : vector<8x384xf32>
    %837 = arith.divf %835, %836 : vector<8x384xf32>
    %838 = vector.extract_strided_slice %832 {offsets = [0, 0], sizes = [8, 128], strides = [1, 1]} : vector<8x384xf32> to vector<8x128xf32>
    %839 = vector.extract_strided_slice %837 {offsets = [0, 128], sizes = [8, 128], strides = [1, 1]} : vector<8x384xf32> to vector<8x128xf32>
    %840 = arith.mulf %838, %839 : vector<8x128xf32>
    %841 = vector.extract_strided_slice %837 {offsets = [0, 256], sizes = [8, 32], strides = [1, 1]} : vector<8x384xf32> to vector<8x32xf32>
    %842 = vector.extract_strided_slice %837 {offsets = [0, 288], sizes = [8, 32], strides = [1, 1]} : vector<8x384xf32> to vector<8x32xf32>
    %843 = vector.extract_strided_slice %840 {offsets = [0, 0], sizes = [8, 32], strides = [1, 1]} : vector<8x128xf32> to vector<8x32xf32>
    %844 = vector.extract_strided_slice %840 {offsets = [0, 32], sizes = [8, 32], strides = [1, 1]} : vector<8x128xf32> to vector<8x32xf32>
    %845 = vector.extract_strided_slice %840 {offsets = [0, 64], sizes = [8, 32], strides = [1, 1]} : vector<8x128xf32> to vector<8x32xf32>
    %846 = vector.extract_strided_slice %840 {offsets = [0, 96], sizes = [8, 32], strides = [1, 1]} : vector<8x128xf32> to vector<8x32xf32>
    %847 = arith.truncf %815 : vector<8x32xf32> to vector<8x32xbf16>
    %cst_162 = arith.constant dense<0.000000e+00> : vector<8x32xf32>
    %848 = tpu.matmul %847, %5, %cst_162 {dimension_numbers = #tpu.dot_dimension_numbers<[1], [0], [0], [1], [0, 0, 1, 1], [], []>} : vector<8x32xbf16>, vector<32x32xbf16>, vector<8x32xf32> -> vector<8x32xf32>
    %849 = arith.mulf %843, %848 : vector<8x32xf32>
    %cst_163 = arith.constant dense<0.000000e+00> : vector<8xf32>
    %850 = vector.multi_reduction <add>, %849, %cst_163 [1] : vector<8x32xf32> to vector<8xf32>
    %851 = vector.shape_cast %850 : vector<8xf32> to vector<8x1xf32>
    %852 = vector.broadcast %851 : vector<8x1xf32> to vector<8x32xf32>
    %853 = vector.broadcast %8 : vector<1x32xf32> to vector<8x32xf32>
    %854 = arith.addf %852, %853 : vector<8x32xf32>
    %855 = math.tanh %854 : vector<8x32xf32>
    %856 = arith.mulf %844, %848 : vector<8x32xf32>
    %cst_164 = arith.constant dense<0.000000e+00> : vector<8xf32>
    %857 = vector.multi_reduction <add>, %856, %cst_164 [1] : vector<8x32xf32> to vector<8xf32>
    %858 = vector.shape_cast %857 : vector<8xf32> to vector<8x1xf32>
    %859 = vector.broadcast %858 : vector<8x1xf32> to vector<8x32xf32>
    %860 = vector.broadcast %10 : vector<1x32xf32> to vector<8x32xf32>
    %861 = arith.addf %859, %860 : vector<8x32xf32>
    %862 = math.tanh %861 : vector<8x32xf32>
    %863 = arith.mulf %845, %848 : vector<8x32xf32>
    %cst_165 = arith.constant dense<0.000000e+00> : vector<8xf32>
    %864 = vector.multi_reduction <add>, %863, %cst_165 [1] : vector<8x32xf32> to vector<8xf32>
    %865 = vector.shape_cast %864 : vector<8xf32> to vector<8x1xf32>
    %866 = vector.broadcast %865 : vector<8x1xf32> to vector<8x32xf32>
    %867 = vector.broadcast %12 : vector<1x32xf32> to vector<8x32xf32>
    %868 = arith.addf %866, %867 : vector<8x32xf32>
    %869 = math.tanh %868 : vector<8x32xf32>
    %870 = arith.mulf %846, %848 : vector<8x32xf32>
    %cst_166 = arith.constant dense<0.000000e+00> : vector<8xf32>
    %871 = vector.multi_reduction <add>, %870, %cst_166 [1] : vector<8x32xf32> to vector<8xf32>
    %872 = vector.shape_cast %871 : vector<8xf32> to vector<8x1xf32>
    %873 = vector.broadcast %872 : vector<8x1xf32> to vector<8x32xf32>
    %874 = vector.broadcast %14 : vector<1x32xf32> to vector<8x32xf32>
    %875 = arith.addf %873, %874 : vector<8x32xf32>
    %876 = math.tanh %875 : vector<8x32xf32>
    %cst_167 = arith.constant dense<0xFF800000> : vector<8xf32>
    %877 = vector.multi_reduction <maximumf>, %855, %cst_167 [1] : vector<8x32xf32> to vector<8xf32>
    %878 = vector.shape_cast %877 : vector<8xf32> to vector<8x1xf32>
    %cst_168 = arith.constant dense<0xFF800000> : vector<8xf32>
    %879 = vector.multi_reduction <maximumf>, %862, %cst_168 [1] : vector<8x32xf32> to vector<8xf32>
    %880 = vector.shape_cast %879 : vector<8xf32> to vector<8x1xf32>
    %881 = arith.maximumf %878, %880 : vector<8x1xf32>
    %cst_169 = arith.constant dense<0xFF800000> : vector<8xf32>
    %882 = vector.multi_reduction <maximumf>, %869, %cst_169 [1] : vector<8x32xf32> to vector<8xf32>
    %883 = vector.shape_cast %882 : vector<8xf32> to vector<8x1xf32>
    %cst_170 = arith.constant dense<0xFF800000> : vector<8xf32>
    %884 = vector.multi_reduction <maximumf>, %876, %cst_170 [1] : vector<8x32xf32> to vector<8xf32>
    %885 = vector.shape_cast %884 : vector<8xf32> to vector<8x1xf32>
    %886 = arith.maximumf %883, %885 : vector<8x1xf32>
    %887 = arith.maximumf %881, %886 : vector<8x1xf32>
    %888 = vector.broadcast %887 : vector<8x1xf32> to vector<8x32xf32>
    %889 = arith.subf %855, %888 : vector<8x32xf32>
    %890 = math.exp %889 : vector<8x32xf32>
    %891 = vector.broadcast %887 : vector<8x1xf32> to vector<8x32xf32>
    %892 = arith.subf %862, %891 : vector<8x32xf32>
    %893 = math.exp %892 : vector<8x32xf32>
    %894 = vector.broadcast %887 : vector<8x1xf32> to vector<8x32xf32>
    %895 = arith.subf %869, %894 : vector<8x32xf32>
    %896 = math.exp %895 : vector<8x32xf32>
    %897 = vector.broadcast %887 : vector<8x1xf32> to vector<8x32xf32>
    %898 = arith.subf %876, %897 : vector<8x32xf32>
    %899 = math.exp %898 : vector<8x32xf32>
    %cst_171 = arith.constant dense<0.000000e+00> : vector<8xf32>
    %900 = vector.multi_reduction <add>, %890, %cst_171 [1] : vector<8x32xf32> to vector<8xf32>
    %901 = vector.shape_cast %900 : vector<8xf32> to vector<8x1xf32>
    %cst_172 = arith.constant dense<0.000000e+00> : vector<8xf32>
    %902 = vector.multi_reduction <add>, %893, %cst_172 [1] : vector<8x32xf32> to vector<8xf32>
    %903 = vector.shape_cast %902 : vector<8xf32> to vector<8x1xf32>
    %904 = arith.addf %901, %903 : vector<8x1xf32>
    %cst_173 = arith.constant dense<0.000000e+00> : vector<8xf32>
    %905 = vector.multi_reduction <add>, %896, %cst_173 [1] : vector<8x32xf32> to vector<8xf32>
    %906 = vector.shape_cast %905 : vector<8xf32> to vector<8x1xf32>
    %907 = arith.addf %904, %906 : vector<8x1xf32>
    %cst_174 = arith.constant dense<0.000000e+00> : vector<8xf32>
    %908 = vector.multi_reduction <add>, %899, %cst_174 [1] : vector<8x32xf32> to vector<8xf32>
    %909 = vector.shape_cast %908 : vector<8xf32> to vector<8x1xf32>
    %910 = arith.addf %907, %909 : vector<8x1xf32>
    %911 = vector.extract_strided_slice %890 {offsets = [0, 0], sizes = [8, 4], strides = [1, 1]} : vector<8x32xf32> to vector<8x4xf32>
    %912 = vector.broadcast %910 : vector<8x1xf32> to vector<8x4xf32>
    %913 = arith.divf %911, %912 : vector<8x4xf32>
    %914 = vector.extract_strided_slice %913 {offsets = [0, 0], sizes = [8, 1], strides = [1, 1]} : vector<8x4xf32> to vector<8x1xf32>
    %915 = vector.broadcast %914 : vector<8x1xf32> to vector<8x32xf32>
    %916 = arith.mulf %915, %843 : vector<8x32xf32>
    %917 = vector.extract_strided_slice %913 {offsets = [0, 1], sizes = [8, 1], strides = [1, 1]} : vector<8x4xf32> to vector<8x1xf32>
    %918 = vector.broadcast %917 : vector<8x1xf32> to vector<8x32xf32>
    %919 = arith.mulf %918, %844 : vector<8x32xf32>
    %920 = arith.addf %916, %919 : vector<8x32xf32>
    %921 = vector.extract_strided_slice %913 {offsets = [0, 2], sizes = [8, 1], strides = [1, 1]} : vector<8x4xf32> to vector<8x1xf32>
    %922 = vector.broadcast %921 : vector<8x1xf32> to vector<8x32xf32>
    %923 = arith.mulf %922, %845 : vector<8x32xf32>
    %924 = arith.addf %920, %923 : vector<8x32xf32>
    %925 = vector.extract_strided_slice %913 {offsets = [0, 3], sizes = [8, 1], strides = [1, 1]} : vector<8x4xf32> to vector<8x1xf32>
    %926 = vector.broadcast %925 : vector<8x1xf32> to vector<8x32xf32>
    %927 = arith.mulf %926, %846 : vector<8x32xf32>
    %928 = arith.addf %924, %927 : vector<8x32xf32>
    %929 = arith.mulf %815, %841 : vector<8x32xf32>
    %930 = arith.addf %929, %928 : vector<8x32xf32>
    %931 = math.tanh %930 : vector<8x32xf32>
    %932 = arith.mulf %931, %842 : vector<8x32xf32>
    %933 = arith.index_cast %c7_i32 : i32 to index
    %c0_175 = arith.constant 0 : index
    %c0_176 = arith.constant 0 : index
    %934 = vector.load %arg6[%933, %c0_175, %c0_176] : memref<8x8x32xf32, #tpu.memory_space<vmem>>, vector<1x8x32xf32>
    %935 = vector.shape_cast %934 : vector<1x8x32xf32> to vector<8x32xf32>
    %936 = vector.shape_cast %932 : vector<8x32xf32> to vector<1x8x32xf32>
    tpu.vector_store %arg6[%933, %c0_175, %c0_176], %936 {strides = array<i32>} : memref<8x8x32xf32, #tpu.memory_space<vmem>>, vector<1x8x32xf32>,
    %c8_i32 = arith.constant 8 : i32
    return
  }
}

</mosaic_0001>

<llo_original>
// kernel: mi_lstm_forward.1
$region0: #{mi_lstm_forward.1}
  #allocation0 [shape = 'u32[]', space=smem, size = 0x4, offset = 0x4, fixed_abs, tag = 'smem constant byte address 0x4 - core index']
  #allocation1 [shape = 'u32[144,128]{1,0:T(1,128)}', space=vmem, size = 0x12000, scoped, tag = 'internal scratch']
  %s0 = inlined_call_operand.vmem [shape: f32[8,8,64], index: 0, kind: input, shape index: {}]
  %s1 = inlined_call_operand.vmem [shape: f32[32,384], index: 1, kind: input, shape index: {}]
  %s2 = inlined_call_operand.vmem [shape: f32[64,384], index: 2, kind: input, shape index: {}]
  %s3 = inlined_call_operand.vmem [shape: f32[1,384], index: 3, kind: input, shape index: {}]
  %s4 = inlined_call_operand.vmem [shape: f32[32,32], index: 4, kind: input, shape index: {}]
  %s5 = inlined_call_operand.vmem [shape: f32[4,1,32], index: 5, kind: input, shape index: {}]
  %s6 = inlined_call_operand.vmem [shape: f32[8,8,32], index: 6, kind: output, shape index: {}]
  %s7 = sld [smem:[#allocation0]]
  $region34: #{mi_lstm_forward.1} parent=0
    _
  %s9 = ssub.s32 1, %s7
  %s10 = scalar_select 0, %s9, %s7
  // Predicated region
  $region2: #{mi_lstm_forward.1} parent=0 // pred_check
    _
  $region3: #{mi_lstm_forward.1} parent=0 // pred_check_branch
    %12 = sbr.rel (0) target = $region5
  $region4: #{mi_lstm_forward.1} parent=0 // pred_region
    _
  $region5: #{mi_lstm_forward.1} parent=0 // pred_fallthru
    _
  // Predicated region
  $region6: #{mi_lstm_forward.1} parent=0 // pred_check
    _
  $region7: #{mi_lstm_forward.1} parent=0 // pred_check_branch
    %14 = sbr.rel (0) target = $region9
  $region8: #{mi_lstm_forward.1} parent=0 // pred_region
    _
  $region9: #{mi_lstm_forward.1} parent=0 // pred_fallthru
    _
  // Predicated region
  $region10: #{mi_lstm_forward.1} parent=0 // pred_check
    _
  $region11: #{mi_lstm_forward.1} parent=0 // pred_check_branch
    %16 = sbr.rel (0) target = $region13
  $region12: #{mi_lstm_forward.1} parent=0 // pred_region
    _
  $region13: #{mi_lstm_forward.1} parent=0 // pred_fallthru
    _
  // Predicated region
  $region14: #{mi_lstm_forward.1} parent=0 // pred_check
    _
  $region15: #{mi_lstm_forward.1} parent=0 // pred_check_branch
    %18 = sbr.rel (0) target = $region17
  $region16: #{mi_lstm_forward.1} parent=0 // pred_region
    _
  $region17: #{mi_lstm_forward.1} parent=0 // pred_fallthru
    _
  // Predicated region
  $region18: #{mi_lstm_forward.1} parent=0 // pred_check
    _
  $region19: #{mi_lstm_forward.1} parent=0 // pred_check_branch
    %20 = sbr.rel (0) target = $region21
  $region20: #{mi_lstm_forward.1} parent=0 // pred_region
    _
  $region21: #{mi_lstm_forward.1} parent=0 // pred_fallthru
    _
  // Predicated region
  $region22: #{mi_lstm_forward.1} parent=0 // pred_check
    _
  $region23: #{mi_lstm_forward.1} parent=0 // pred_check_branch
    %22 = sbr.rel (0) target = $region25
  $region24: #{mi_lstm_forward.1} parent=0 // pred_region
    _
  $region25: #{mi_lstm_forward.1} parent=0 // pred_fallthru
    _
  %v24 = vld [vmem:[%s1] sm:$0xff]
  %v25 = vld [vmem:[%s1 + $0x8] sm:$0xff]
  %v26 = vld [vmem:[%s1 + $0x10] sm:$0xff]
  %v27 = vld [vmem:[%s1 + $0x18] sm:$0xff]
  %v28 = vld [vmem:[%s1 + $0x20] sm:$0xff]
  %v29 = vld [vmem:[%s1 + $0x28] sm:$0xff]
  %v30 = vld [vmem:[%s1 + $0x30] sm:$0xff]
  %v31 = vld [vmem:[%s1 + $0x38] sm:$0xff]
  %v32 = vld [vmem:[%s1 + $0x40] sm:$0xff]
  %v33 = vld [vmem:[%s1 + $0x48] sm:$0xff]
  %v34 = vld [vmem:[%s1 + $0x50] sm:$0xff]
  %v35 = vld [vmem:[%s1 + $0x58] sm:$0xff]
  %v36 = vpack.c.bf16 %v27, %v24
  %v37 = vpack.c.bf16 %v28, %v25
  %v38 = vpack.c.bf16 %v29, %v26
  %v39 = vpack.c.bf16 %v33, %v30
  %v40 = vpack.c.bf16 %v34, %v31
  %v41 = vpack.c.bf16 %v35, %v32
  %v42 = vld [vmem:[%s2] sm:$0xff]
  %v43 = vld [vmem:[%s2 + $0x8] sm:$0xff]
  %v44 = vld [vmem:[%s2 + $0x10] sm:$0xff]
  %v45 = vld [vmem:[%s2 + $0x18] sm:$0xff]
  %v46 = vld [vmem:[%s2 + $0x20] sm:$0xff]
  %v47 = vld [vmem:[%s2 + $0x28] sm:$0xff]
  %v48 = vld [vmem:[%s2 + $0x30] sm:$0xff]
  %v49 = vld [vmem:[%s2 + $0x38] sm:$0xff]
  %v50 = vld [vmem:[%s2 + $0x40] sm:$0xff]
  %v51 = vld [vmem:[%s2 + $0x48] sm:$0xff]
  %v52 = vld [vmem:[%s2 + $0x50] sm:$0xff]
  %v53 = vld [vmem:[%s2 + $0x58] sm:$0xff]
  %v54 = vld [vmem:[%s2 + $0x60] sm:$0xff]
  %v55 = vld [vmem:[%s2 + $0x68] sm:$0xff]
  %v56 = vld [vmem:[%s2 + $0x70] sm:$0xff]
  %v57 = vld [vmem:[%s2 + $0x78] sm:$0xff]
  %v58 = vld [vmem:[%s2 + $0x80] sm:$0xff]
  %v59 = vld [vmem:[%s2 + $0x88] sm:$0xff]
  %v60 = vld [vmem:[%s2 + $0x90] sm:$0xff]
  %v61 = vld [vmem:[%s2 + $0x98] sm:$0xff]
  %v62 = vld [vmem:[%s2 + $0xa0] sm:$0xff]
  %v63 = vld [vmem:[%s2 + $0xa8] sm:$0xff]
  %v64 = vld [vmem:[%s2 + $0xb0] sm:$0xff]
  %v65 = vld [vmem:[%s2 + $0xb8] sm:$0xff]
  %v66 = vpack.c.bf16 %v45, %v42
  %v67 = vpack.c.bf16 %v46, %v43
  %v68 = vpack.c.bf16 %v47, %v44
  %v69 = vpack.c.bf16 %v51, %v48
  %v70 = vpack.c.bf16 %v52, %v49
  %v71 = vpack.c.bf16 %v53, %v50
  %v72 = vpack.c.bf16 %v57, %v54
  %v73 = vpack.c.bf16 %v58, %v55
  %v74 = vpack.c.bf16 %v59, %v56
  %v75 = vpack.c.bf16 %v63, %v60
  %v76 = vpack.c.bf16 %v64, %v61
  %v77 = vpack.c.bf16 %v65, %v62
  %v78 = vld [vmem:[%s4] sm:$0xff]
  %v79 = vld [vmem:[%s4 + $0x8] sm:$0xff]
  %v80 = vld [vmem:[%s4 + $0x10] sm:$0xff]
  %v81 = vld [vmem:[%s4 + $0x18] sm:$0xff]
  %v82 = vpack.c.bf16 %v79, %v78
  %v83 = vpack.c.bf16 %v81, %v80
  %v84 = vld [vmem:[%s3] sm:$0x7]
  %v85 = vld [vmem:[%s5] sm:$0x1]
  %s86 = scalar_lea.vmem %s5, 1
  %v87 = vld [vmem:[%s86] sm:$0x1]
  %s88 = scalar_lea.vmem %s5, 2
  %v89 = vld [vmem:[%s88] sm:$0x1]
  %s90 = scalar_lea.vmem %s5, 3
  %v91 = vld [vmem:[%s90] sm:$0x1]
  %v92 = vld [vmem:[%s0] sm:$0xff]
  %v93 = vpack.c.bf16 %v92, %v92
  %vm94 = vcmask 523264
  %v96 = vsel %vm94, %v93, 0
  %98 = vmatprep.subr.bf16.mxu0 %v67
  %99 = vmatpush1.bf16.msra.mxu0 %v66
  %100 = vmatprep.subr.bf16.mxu0 %v70
  %101 = vmatpush1.bf16.msra.mxu0 %v69
  %102 = vmatprep.subr.bf16.mxu0 %v73
  %103 = vmatpush1.bf16.msra.mxu0 %v72
  %104 = vmatprep.subr.bf16.mxu0 %v76
  %105 = vmatpush1.bf16.msra.mxu0 %v75
  %106 = vmatprep.subr.bf16.mxu0 0
  %107 = vmatpush1.bf16.msra.mxu0 0
  %108 = vmatprep.subr.bf16.mxu0 0
  %109 = vmatpush1.bf16.msra.mxu0 0
  %110 = vmatprep.subr.bf16.mxu0 0
  %111 = vmatpush1.bf16.msra.mxu0 0
  %112 = vmatprep.subr.bf16.mxu0 0
  %113 = vmatpush1.bf16.msra.mxu0 0
  %114 = vmatprep.subr.bf16.mxu0 0
  %115 = vmatpush1.bf16.msra.mxu0 0
  %116 = vmatprep.subr.bf16.mxu0 0
  %117 = vmatpush1.bf16.msra.mxu0 0
  %118 = vmatprep.subr.bf16.mxu0 0
  %119 = vmatpush1.bf16.msra.mxu0 0
  %120 = vmatprep.subr.bf16.mxu0 0
  %121 = vmatpush1.bf16.msra.mxu0 0
  %122 = vmatprep.subr.bf16.mxu0 0
  %123 = vmatpush1.bf16.msra.mxu0 0
  %124 = vmatprep.subr.bf16.mxu0 0
  %125 = vmatpush1.bf16.msra.mxu0 0
  %126 = vmatprep.subr.bf16.mxu0 0
  %127 = vmatpush1.bf16.msra.mxu0 0
  %128 = vmatprep.subr.bf16.mxu0 0
  %129 = vmatpush1.bf16.msra.mxu0 0
  %130 = vmatprep.mubr.bf16.mxu0 0
  %131 = vmatmul.mubr.bf16.gmra.mrb[0].mxu0 %v96
  %v132 = vpop.f32.mrb[0].mxu0
  %v133 = vadd.f32 0.0, %v132
  %v134 = vpop.f32.mrb[0].mxu0
  %v135 = vadd.f32 0.0, %v134
  %v136 = vpop.f32.mrb[0].mxu0
  %v137 = vpop.f32.mrb[0].mxu0
  %138 = vdwg.mxu0
  %139 = vmatprep.subr.bf16.mxu0 0
  %140 = vmatpush1.bf16.msra.mxu0 %v68
  %141 = vmatprep.subr.bf16.mxu0 0
  %142 = vmatpush1.bf16.msra.mxu0 %v71
  %143 = vmatprep.subr.bf16.mxu0 0
  %144 = vmatpush1.bf16.msra.mxu0 %v74
  %145 = vmatprep.subr.bf16.mxu0 0
  %146 = vmatpush1.bf16.msra.mxu0 %v77
  %147 = vmatprep.subr.bf16.mxu0 0
  %148 = vmatpush1.bf16.msra.mxu0 0
  %149 = vmatprep.subr.bf16.mxu0 0
  %150 = vmatpush1.bf16.msra.mxu0 0
  %151 = vmatprep.subr.bf16.mxu0 0
  %152 = vmatpush1.bf16.msra.mxu0 0
  %153 = vmatprep.subr.bf16.mxu0 0
  %154 = vmatpush1.bf16.msra.mxu0 0
  %155 = vmatprep.subr.bf16.mxu0 0
  %156 = vmatpush1.bf16.msra.mxu0 0
  %157 = vmatprep.subr.bf16.mxu0 0
  %158 = vmatpush1.bf16.msra.mxu0 0
  %159 = vmatprep.subr.bf16.mxu0 0
  %160 = vmatpush1.bf16.msra.mxu0 0
  %161 = vmatprep.subr.bf16.mxu0 0
  %162 = vmatpush1.bf16.msra.mxu0 0
  %163 = vmatprep.subr.bf16.mxu0 0
  %164 = vmatpush1.bf16.msra.mxu0 0
  %165 = vmatprep.subr.bf16.mxu0 0
  %166 = vmatpush1.bf16.msra.mxu0 0
  %167 = vmatprep.subr.bf16.mxu0 0
  %168 = vmatpush1.bf16.msra.mxu0 0
  %169 = vmatprep.subr.bf16.mxu0 0
  %170 = vmatpush1.bf16.msra.mxu0 0
  %171 = vmatprep.mubr.bf16.mxu0 0
  %172 = vmatmul.mubr.bf16.gmra.mrb[0].mxu0 %v96
  %v173 = vpop.f32.mrb[0].mxu0
  %v174 = vadd.f32 0.0, %v173
  %v175 = vpop.f32.mrb[0].mxu0
  %v176 = vpop.f32.mrb[0].mxu0
  %v177 = vpop.f32.mrb[0].mxu0
  %178 = vdwg.mxu0
  %vm179 = vcmask 261120
  %v181 = vsel %vm179, 0, 0
  %183 = vmatprep.subr.bf16.mxu0 %v37
  %184 = vmatpush1.bf16.msra.mxu0 %v36
  %185 = vmatprep.subr.bf16.mxu0 %v40
  %186 = vmatpush1.bf16.msra.mxu0 %v39
  %187 = vmatprep.subr.bf16.mxu0 0
  %188 = vmatpush1.bf16.msra.mxu0 0
  %189 = vmatprep.subr.bf16.mxu0 0
  %190 = vmatpush1.bf16.msra.mxu0 0
  %191 = vmatprep.subr.bf16.mxu0 0
  %192 = vmatpush1.bf16.msra.mxu0 0
  %193 = vmatprep.subr.bf16.mxu0 0
  %194 = vmatpush1.bf16.msra.mxu0 0
  %195 = vmatprep.subr.bf16.mxu0 0
  %196 = vmatpush1.bf16.msra.mxu0 0
  %197 = vmatprep.subr.bf16.mxu0 0
  %198 = vmatpush1.bf16.msra.mxu0 0
  %199 = vmatprep.subr.bf16.mxu0 0
  %200 = vmatpush1.bf16.msra.mxu0 0
  %201 = vmatprep.subr.bf16.mxu0 0
  %202 = vmatpush1.bf16.msra.mxu0 0
  %203 = vmatprep.subr.bf16.mxu0 0
  %204 = vmatpush1.bf16.msra.mxu0 0
  %205 = vmatprep.subr.bf16.mxu0 0
  %206 = vmatpush1.bf16.msra.mxu0 0
  %207 = vmatprep.subr.bf16.mxu0 0
  %208 = vmatpush1.bf16.msra.mxu0 0
  %209 = vmatprep.subr.bf16.mxu0 0
  %210 = vmatpush1.bf16.msra.mxu0 0
  %211 = vmatprep.subr.bf16.mxu0 0
  %212 = vmatpush1.bf16.msra.mxu0 0
  %213 = vmatprep.subr.bf16.mxu0 0
  %214 = vmatpush1.bf16.msra.mxu0 0
  %215 = vmatprep.mubr.bf16.mxu0 0
  %216 = vmatmul.mubr.bf16.gmra.mrb[0].mxu0 %v181
  %v217 = vpop.f32.mrb[0].mxu0
  %v218 = vadd.f32 %v133, %v217
  %v219 = vpop.f32.mrb[0].mxu0
  %v220 = vadd.f32 %v135, %v219
  %v221 = vpop.f32.mrb[0].mxu0
  %v222 = vpop.f32.mrb[0].mxu0
  %223 = vdwg.mxu0
  %224 = vmatprep.subr.bf16.mxu0 0
  %225 = vmatpush1.bf16.msra.mxu0 %v38
  %226 = vmatprep.subr.bf16.mxu0 0
  %227 = vmatpush1.bf16.msra.mxu0 %v41
  %228 = vmatprep.subr.bf16.mxu0 0
  %229 = vmatpush1.bf16.msra.mxu0 0
  %230 = vmatprep.subr.bf16.mxu0 0
  %231 = vmatpush1.bf16.msra.mxu0 0
  %232 = vmatprep.subr.bf16.mxu0 0
  %233 = vmatpush1.bf16.msra.mxu0 0
  %234 = vmatprep.subr.bf16.mxu0 0
  %235 = vmatpush1.bf16.msra.mxu0 0
  %236 = vmatprep.subr.bf16.mxu0 0
  %237 = vmatpush1.bf16.msra.mxu0 0
  %238 = vmatprep.subr.bf16.mxu0 0
  %239 = vmatpush1.bf16.msra.mxu0 0
  %240 = vmatprep.subr.bf16.mxu0 0
  %241 = vmatpush1.bf16.msra.mxu0 0
  %242 = vmatprep.subr.bf16.mxu0 0
  %243 = vmatpush1.bf16.msra.mxu0 0
  %244 = vmatprep.subr.bf16.mxu0 0
  %245 = vmatpush1.bf16.msra.mxu0 0
  %246 = vmatprep.subr.bf16.mxu0 0
  %247 = vmatpush1.bf16.msra.mxu0 0
  %248 = vmatprep.subr.bf16.mxu0 0
  %249 = vmatpush1.bf16.msra.mxu0 0
  %250 = vmatprep.subr.bf16.mxu0 0
  %251 = vmatpush1.bf16.msra.mxu0 0
  %252 = vmatprep.subr.bf16.mxu0 0
  %253 = vmatpush1.bf16.msra.mxu0 0
  %254 = vmatprep.subr.bf16.mxu0 0
  %255 = vmatpush1.bf16.msra.mxu0 0
  %256 = vmatprep.mubr.bf16.mxu0 0
  %257 = vmatmul.mubr.bf16.gmra.mrb[0].mxu0 %v181
  %v258 = vpop.f32.mrb[0].mxu0
  %v259 = vadd.f32 %v174, %v258
  %v260 = vpop.f32.mrb[0].mxu0
  %v261 = vpop.f32.mrb[0].mxu0
  %v262 = vpop.f32.mrb[0].mxu0
  %263 = vdwg.mxu0
  %v265 = vlaneseq
  %v266 = vshrl.u32 %v265, 7
  %v267 = vsub.s32 0, %v266
  %v268 = vrot.slane %v84, %v267
  %v269 = vlaneseq
  %v270 = vshrl.u32 %v269, 7
  %v271 = vsub.s32 1, %v270
  %v272 = vrot.slane %v84, %v271
  %v273 = vlaneseq
  %v274 = vshrl.u32 %v273, 7
  %v275 = vsub.s32 2, %v274
  %v276 = vrot.slane %v84, %v275
  %v280 = vadd.f32 %v218, %v268
  %v281 = vadd.f32 %v220, %v272
  %v282 = vadd.f32 %v259, %v276
  %v283 = vtanh.pop %v280
  %v284 = vxor.u32 %v281, 2147483648
  %v285 = vxor.u32 %v282, 2147483648
  %v286 = vmul.f32 %v284, 1.442695
  %v287 = vpow.pop %v286
  %v288 = vmul.f32 %v285, 1.442695
  %v289 = vpow.pop %v288
  %v290 = vadd.f32 %v287, 1.0
  %v291 = vadd.f32 %v289, 1.0
  %v292 = vrcp.pop %v290
  %v293 = vmul.f32 1.0, %v292
  %v294 = vrcp.pop %v291
  %v295 = vmul.f32 1.0, %v294
  %v296 = vmul.f32 %v283, %v293
  %297 = vmatprep.subr.bf16.mxu0 0
  %298 = vmatpush1.bf16.msra.mxu0 %v82
  %299 = vmatprep.subr.bf16.mxu0 0
  %300 = vmatpush1.bf16.msra.mxu0 %v83
  %301 = vmatprep.subr.bf16.mxu0 0
  %302 = vmatpush1.bf16.msra.mxu0 0
  %303 = vmatprep.subr.bf16.mxu0 0
  %304 = vmatpush1.bf16.msra.mxu0 0
  %305 = vmatprep.subr.bf16.mxu0 0
  %306 = vmatpush1.bf16.msra.mxu0 0
  %307 = vmatprep.subr.bf16.mxu0 0
  %308 = vmatpush1.bf16.msra.mxu0 0
  %309 = vmatprep.subr.bf16.mxu0 0
  %310 = vmatpush1.bf16.msra.mxu0 0
  %311 = vmatprep.subr.bf16.mxu0 0
  %312 = vmatpush1.bf16.msra.mxu0 0
  %313 = vmatprep.subr.bf16.mxu0 0
  %314 = vmatpush1.bf16.msra.mxu0 0
  %315 = vmatprep.subr.bf16.mxu0 0
  %316 = vmatpush1.bf16.msra.mxu0 0
  %317 = vmatprep.subr.bf16.mxu0 0
  %318 = vmatpush1.bf16.msra.mxu0 0
  %319 = vmatprep.subr.bf16.mxu0 0
  %320 = vmatpush1.bf16.msra.mxu0 0
  %321 = vmatprep.subr.bf16.mxu0 0
  %322 = vmatpush1.bf16.msra.mxu0 0
  %323 = vmatprep.subr.bf16.mxu0 0
  %324 = vmatpush1.bf16.msra.mxu0 0
  %325 = vmatprep.subr.bf16.mxu0 0
  %326 = vmatpush1.bf16.msra.mxu0 0
  %327 = vmatprep.subr.bf16.mxu0 0
  %328 = vmatpush1.bf16.msra.mxu0 0
  %329 = vmatprep.mubr.bf16.mxu0 0
  %330 = vmatmul.mubr.bf16.gmra.mrb[0].mxu0 %v181
  %v331 = vpop.f32.mrb[0].mxu0
  %v332 = vadd.f32 0.0, %v331
  %v333 = vpop.f32.mrb[0].mxu0
  %v334 = vpop.f32.mrb[0].mxu0
  %v335 = vpop.f32.mrb[0].mxu0
  %336 = vdwg.mxu0
  %v337 = vmul.f32 %v296, %v332
  %v338 = vsel %vm179, %v337, 0.0
  %339 = vadd.xlane.f32.xlu0 %v338
  %v340 = vpop.xlane.xlu0 %339
  %v342 = vlaneseq
  %v343 = vshrl.u32 %v342, 7
  %v344 = vsub.s32 0, %v343
  %v345 = vrot.slane %v85, %v344
  %v347 = vadd.f32 %v340, %v345
  %v348 = vtanh.pop %v347
  %350 = vrot.lane.b32.xlu0 %v332, 32
  %v351 = vpop.permute.xlu0 %350
  %v353 = vmul.f32 %v296, %v351
  %355 = vrot.lane.b32.xlu0 %v353, 96
  %v356 = vpop.permute.xlu0 %355
  %v358 = vsel %vm179, %v356, 0.0
  %359 = vadd.xlane.f32.xlu0 %v358
  %v360 = vpop.xlane.xlu0 %359
  %v362 = vlaneseq
  %v363 = vshrl.u32 %v362, 7
  %v364 = vsub.s32 0, %v363
  %v365 = vrot.slane %v87, %v364
  %v367 = vadd.f32 %v360, %v365
  %v368 = vtanh.pop %v367
  %369 = vrot.lane.b32.xlu0 %v332, 64
  %v370 = vpop.permute.xlu0 %369
  %v372 = vmul.f32 %v296, %v370
  %374 = vrot.lane.b32.xlu0 %v372, 64
  %v375 = vpop.permute.xlu0 %374
  %v377 = vsel %vm179, %v375, 0.0
  %378 = vadd.xlane.f32.xlu0 %v377
  %v379 = vpop.xlane.xlu0 %378
  %v381 = vlaneseq
  %v382 = vshrl.u32 %v381, 7
  %v383 = vsub.s32 0, %v382
  %v384 = vrot.slane %v89, %v383
  %v386 = vadd.f32 %v379, %v384
  %v387 = vtanh.pop %v386
  %388 = vrot.lane.b32.xlu0 %v332, 96
  %v389 = vpop.permute.xlu0 %388
  %v391 = vmul.f32 %v296, %v389
  %393 = vrot.lane.b32.xlu0 %v391, 32
  %v394 = vpop.permute.xlu0 %393
  %v396 = vsel %vm179, %v394, 0.0
  %397 = vadd.xlane.f32.xlu0 %v396
  %v398 = vpop.xlane.xlu0 %397
  %v400 = vlaneseq
  %v401 = vshrl.u32 %v400, 7
  %v402 = vsub.s32 0, %v401
  %v403 = vrot.slane %v91, %v402
  %v405 = vadd.f32 %v398, %v403
  %v406 = vtanh.pop %v405
  %v407 = vsel %vm179, %v348, -inf
  %408 = vmax.xlane.f32.xlu0 %v407
  %v409 = vpop.xlane.xlu0 %408
  %v410 = vsel %vm179, %v368, -inf
  %411 = vmax.xlane.f32.xlu0 %v410
  %v412 = vpop.xlane.xlu0 %411
  %v413 = vmax.f32 %v409, %v412
  %v414 = vsel %vm179, %v387, -inf
  %415 = vmax.xlane.f32.xlu0 %v414
  %v416 = vpop.xlane.xlu0 %415
  %v417 = vsel %vm179, %v406, -inf
  %418 = vmax.xlane.f32.xlu0 %v417
  %v419 = vpop.xlane.xlu0 %418
  %v420 = vmax.f32 %v416, %v419
  %v421 = vmax.f32 %v413, %v420
  %v422 = vsub.f32 %v348, %v421
  %v423 = vmul.f32 %v422, 1.442695
  %v424 = vpow.pop %v423
  %v425 = vsub.f32 %v368, %v421
  %v426 = vmul.f32 %v425, 1.442695
  %v427 = vpow.pop %v426
  %v428 = vsub.f32 %v387, %v421
  %v429 = vmul.f32 %v428, 1.442695
  %v430 = vpow.pop %v429
  %v431 = vsub.f32 %v406, %v421
  %v432 = vmul.f32 %v431, 1.442695
  %v433 = vpow.pop %v432
  %v434 = vsel %vm179, %v424, 0.0
  %435 = vadd.xlane.f32.xlu0 %v434
  %v436 = vpop.xlane.xlu0 %435
  %v437 = vsel %vm179, %v427, 0.0
  %438 = vadd.xlane.f32.xlu0 %v437
  %v439 = vpop.xlane.xlu0 %438
  %v440 = vadd.f32 %v436, %v439
  %v441 = vsel %vm179, %v430, 0.0
  %442 = vadd.xlane.f32.xlu0 %v441
  %v443 = vpop.xlane.xlu0 %442
  %v444 = vadd.f32 %v440, %v443
  %v445 = vsel %vm179, %v433, 0.0
  %446 = vadd.xlane.f32.xlu0 %v445
  %v447 = vpop.xlane.xlu0 %446
  %v448 = vadd.f32 %v444, %v447
  %v449 = vrcp.pop %v448
  %v450 = vmul.f32 %v424, %v449
  %452 = vset.pattern.permute.xlu0 0
  %453 = vperm.xlu0 %452, %v450
  %v454 = vpop.permute.xlu0 %453
  %v456 = vmul.f32 %v454, %v296
  %457 = vset.pattern.permute.xlu0 1
  %458 = vperm.xlu0 %457, %v450
  %v459 = vpop.permute.xlu0 %458
  %v461 = vmul.f32 %v459, %v296
  %463 = vrot.lane.b32.xlu0 %v461, 96
  %v464 = vpop.permute.xlu0 %463
  %v466 = vadd.f32 %v456, %v464
  %467 = vset.pattern.permute.xlu0 2
  %468 = vperm.xlu0 %467, %v450
  %v469 = vpop.permute.xlu0 %468
  %v471 = vmul.f32 %v469, %v296
  %473 = vrot.lane.b32.xlu0 %v471, 64
  %v474 = vpop.permute.xlu0 %473
  %v476 = vadd.f32 %v466, %v474
  %477 = vset.pattern.permute.xlu0 3
  %478 = vperm.xlu0 %477, %v450
  %v479 = vpop.permute.xlu0 %478
  %v481 = vmul.f32 %v479, %v296
  %483 = vrot.lane.b32.xlu0 %v481, 32
  %v484 = vpop.permute.xlu0 %483
  %v486 = vadd.f32 %v476, %v484
  %v487 = vmul.f32 %v295, 0.0
  %v488 = vadd.f32 %v487, %v486
  %v489 = vtanh.pop %v488
  %491 = vrot.lane.b32.xlu0 %v295, 96
  %v492 = vpop.permute.xlu0 %491
  %v494 = vmul.f32 %v489, %v492
  %495 = vst.msk [vmem:[%s6] sm:$0xff] %vm179, %v494
  %s496 = scalar_lea.vmem %s0, 8
  %v497 = vld [vmem:[%s496] sm:$0xff]
  %v498 = vpack.c.bf16 %v494, %v494
  %v499 = vpack.c.bf16 %v497, %v497
  %v501 = vsel %vm94, %v499, 0
  %503 = vmatprep.subr.bf16.mxu0 %v67
  %504 = vmatpush1.bf16.msra.mxu0 %v66
  %505 = vmatprep.subr.bf16.mxu0 %v70
  %506 = vmatpush1.bf16.msra.mxu0 %v69
  %507 = vmatprep.subr.bf16.mxu0 %v73
  %508 = vmatpush1.bf16.msra.mxu0 %v72
  %509 = vmatprep.subr.bf16.mxu0 %v76
  %510 = vmatpush1.bf16.msra.mxu0 %v75
  %511 = vmatprep.subr.bf16.mxu0 0
  %512 = vmatpush1.bf16.msra.mxu0 0
  %513 = vmatprep.subr.bf16.mxu0 0
  %514 = vmatpush1.bf16.msra.mxu0 0
  %515 = vmatprep.subr.bf16.mxu0 0
  %516 = vmatpush1.bf16.msra.mxu0 0
  %517 = vmatprep.subr.bf16.mxu0 0
  %518 = vmatpush1.bf16.msra.mxu0 0
  %519 = vmatprep.subr.bf16.mxu0 0
  %520 = vmatpush1.bf16.msra.mxu0 0
  %521 = vmatprep.subr.bf16.mxu0 0
  %522 = vmatpush1.bf16.msra.mxu0 0
  %523 = vmatprep.subr.bf16.mxu0 0
  %524 = vmatpush1.bf16.msra.mxu0 0
  %525 = vmatprep.subr.bf16.mxu0 0
  %526 = vmatpush1.bf16.msra.mxu0 0
  %527 = vmatprep.subr.bf16.mxu0 0
  %528 = vmatpush1.bf16.msra.mxu0 0
  %529 = vmatprep.subr.bf16.mxu0 0
  %530 = vmatpush1.bf16.msra.mxu0 0
  %531 = vmatprep.subr.bf16.mxu0 0
  %532 = vmatpush1.bf16.msra.mxu0 0
  %533 = vmatprep.subr.bf16.mxu0 0
  %534 = vmatpush1.bf16.msra.mxu0 0
  %535 = vmatprep.mubr.bf16.mxu0 0
  %536 = vmatmul.mubr.bf16.gmra.mrb[0].mxu0 %v501
  %v537 = vpop.f32.mrb[0].mxu0
  %v538 = vadd.f32 0.0, %v537
  %v539 = vpop.f32.mrb[0].mxu0
  %v540 = vadd.f32 0.0, %v539
  %v541 = vpop.f32.mrb[0].mxu0
  %v542 = vpop.f32.mrb[0].mxu0
  %543 = vdwg.mxu0
  %544 = vmatprep.subr.bf16.mxu0 0
  %545 = vmatpush1.bf16.msra.mxu0 %v68
  %546 = vmatprep.subr.bf16.mxu0 0
  %547 = vmatpush1.bf16.msra.mxu0 %v71
  %548 = vmatprep.subr.bf16.mxu0 0
  %549 = vmatpush1.bf16.msra.mxu0 %v74
  %550 = vmatprep.subr.bf16.mxu0 0
  %551 = vmatpush1.bf16.msra.mxu0 %v77
  %552 = vmatprep.subr.bf16.mxu0 0
  %553 = vmatpush1.bf16.msra.mxu0 0
  %554 = vmatprep.subr.bf16.mxu0 0
  %555 = vmatpush1.bf16.msra.mxu0 0
  %556 = vmatprep.subr.bf16.mxu0 0
  %557 = vmatpush1.bf16.msra.mxu0 0
  %558 = vmatprep.subr.bf16.mxu0 0
  %559 = vmatpush1.bf16.msra.mxu0 0
  %560 = vmatprep.subr.bf16.mxu0 0
  %561 = vmatpush1.bf16.msra.mxu0 0
  %562 = vmatprep.subr.bf16.mxu0 0
  %563 = vmatpush1.bf16.msra.mxu0 0
  %564 = vmatprep.subr.bf16.mxu0 0
  %565 = vmatpush1.bf16.msra.mxu0 0
  %566 = vmatprep.subr.bf16.mxu0 0
  %567 = vmatpush1.bf16.msra.mxu0 0
  %568 = vmatprep.subr.bf16.mxu0 0
  %569 = vmatpush1.bf16.msra.mxu0 0
  %570 = vmatprep.subr.bf16.mxu0 0
  %571 = vmatpush1.bf16.msra.mxu0 0
  %572 = vmatprep.subr.bf16.mxu0 0
  %573 = vmatpush1.bf16.msra.mxu0 0
  %574 = vmatprep.subr.bf16.mxu0 0
  %575 = vmatpush1.bf16.msra.mxu0 0
  %576 = vmatprep.mubr.bf16.mxu0 0
  %577 = vmatmul.mubr.bf16.gmra.mrb[0].mxu0 %v501
  %v578 = vpop.f32.mrb[0].mxu0
  %v579 = vadd.f32 0.0, %v578
  %v580 = vpop.f32.mrb[0].mxu0
  %v581 = vpop.f32.mrb[0].mxu0
  %v582 = vpop.f32.mrb[0].mxu0
  %583 = vdwg.mxu0
  %v585 = vsel %vm179, %v498, 0
  %587 = vmatprep.subr.bf16.mxu0 %v37
  %588 = vmatpush1.bf16.msra.mxu0 %v36
  %589 = vmatprep.subr.bf16.mxu0 %v40
  %590 = vmatpush1.bf16.msra.mxu0 %v39
  %591 = vmatprep.subr.bf16.mxu0 0
  %592 = vmatpush1.bf16.msra.mxu0 0
  %593 = vmatprep.subr.bf16.mxu0 0
  %594 = vmatpush1.bf16.msra.mxu0 0
  %595 = vmatprep.subr.bf16.mxu0 0
  %596 = vmatpush1.bf16.msra.mxu0 0
  %597 = vmatprep.subr.bf16.mxu0 0
  %598 = vmatpush1.bf16.msra.mxu0 0
  %599 = vmatprep.subr.bf16.mxu0 0
  %600 = vmatpush1.bf16.msra.mxu0 0
  %601 = vmatprep.subr.bf16.mxu0 0
  %602 = vmatpush1.bf16.msra.mxu0 0
  %603 = vmatprep.subr.bf16.mxu0 0
  %604 = vmatpush1.bf16.msra.mxu0 0
  %605 = vmatprep.subr.bf16.mxu0 0
  %606 = vmatpush1.bf16.msra.mxu0 0
  %607 = vmatprep.subr.bf16.mxu0 0
  %608 = vmatpush1.bf16.msra.mxu0 0
  %609 = vmatprep.subr.bf16.mxu0 0
  %610 = vmatpush1.bf16.msra.mxu0 0
  %611 = vmatprep.subr.bf16.mxu0 0
  %612 = vmatpush1.bf16.msra.mxu0 0
  %613 = vmatprep.subr.bf16.mxu0 0
  %614 = vmatpush1.bf16.msra.mxu0 0
  %615 = vmatprep.subr.bf16.mxu0 0
  %616 = vmatpush1.bf16.msra.mxu0 0
  %617 = vmatprep.subr.bf16.mxu0 0
  %618 = vmatpush1.bf16.msra.mxu0 0
  %619 = vmatprep.mubr.bf16.mxu0 0
  %620 = vmatmul.mubr.bf16.gmra.mrb[0].mxu0 %v585
  %v621 = vpop.f32.mrb[0].mxu0
  %v622 = vadd.f32 %v538, %v621
  %v623 = vpop.f32.mrb[0].mxu0
  %v624 = vadd.f32 %v540, %v623
  %v625 = vpop.f32.mrb[0].mxu0
  %v626 = vpop.f32.mrb[0].mxu0
  %627 = vdwg.mxu0
  %628 = vmatprep.subr.bf16.mxu0 0
  %629 = vmatpush1.bf16.msra.mxu0 %v38
  %630 = vmatprep.subr.bf16.mxu0 0
  %631 = vmatpush1.bf16.msra.mxu0 %v41
  %632 = vmatprep.subr.bf16.mxu0 0
  %633 = vmatpush1.bf16.msra.mxu0 0
  %634 = vmatprep.subr.bf16.mxu0 0
  %635 = vmatpush1.bf16.msra.mxu0 0
  %636 = vmatprep.subr.bf16.mxu0 0
  %637 = vmatpush1.bf16.msra.mxu0 0
  %638 = vmatprep.subr.bf16.mxu0 0
  %639 = vmatpush1.bf16.msra.mxu0 0
  %640 = vmatprep.subr.bf16.mxu0 0
  %641 = vmatpush1.bf16.msra.mxu0 0
  %642 = vmatprep.subr.bf16.mxu0 0
  %643 = vmatpush1.bf16.msra.mxu0 0
  %644 = vmatprep.subr.bf16.mxu0 0
  %645 = vmatpush1.bf16.msra.mxu0 0
  %646 = vmatprep.subr.bf16.mxu0 0
  %647 = vmatpush1.bf16.msra.mxu0 0
  %648 = vmatprep.subr.bf16.mxu0 0
  %649 = vmatpush1.bf16.msra.mxu0 0
  %650 = vmatprep.subr.bf16.mxu0 0
  %651 = vmatpush1.bf16.msra.mxu0 0
  %652 = vmatprep.subr.bf16.mxu0 0
  %653 = vmatpush1.bf16.msra.mxu0 0
  %654 = vmatprep.subr.bf16.mxu0 0
  %655 = vmatpush1.bf16.msra.mxu0 0
  %656 = vmatprep.subr.bf16.mxu0 0
  %657 = vmatpush1.bf16.msra.mxu0 0
  %658 = vmatprep.subr.bf16.mxu0 0
  %659 = vmatpush1.bf16.msra.mxu0 0
  %660 = vmatprep.mubr.bf16.mxu0 0
  %661 = vmatmul.mubr.bf16.gmra.mrb[0].mxu0 %v585
  %v662 = vpop.f32.mrb[0].mxu0
  %v663 = vadd.f32 %v579, %v662
  %v664 = vpop.f32.mrb[0].mxu0
  %v665 = vpop.f32.mrb[0].mxu0
  %v666 = vpop.f32.mrb[0].mxu0
  %667 = vdwg.mxu0
  %v668 = vadd.f32 %v622, %v268
  %v669 = vadd.f32 %v624, %v272
  %v670 = vadd.f32 %v663, %v276
  %v671 = vtanh.pop %v668
  %v672 = vxor.u32 %v669, 2147483648
  %v673 = vxor.u32 %v670, 2147483648
  %v674 = vmul.f32 %v672, 1.442695
  %v675 = vpow.pop %v674
  %v676 = vmul.f32 %v673, 1.442695
  %v677 = vpow.pop %v676
  %v678 = vadd.f32 %v675, 1.0
  %v679 = vadd.f32 %v677, 1.0
  %v680 = vrcp.pop %v678
  %v681 = vmul.f32 1.0, %v680
  %v682 = vrcp.pop %v679
  %v683 = vmul.f32 1.0, %v682
  %v684 = vmul.f32 %v671, %v681
  %v685 = vpack.c.bf16 %v488, %v488
  %v687 = vsel %vm179, %v685, 0
  %689 = vmatprep.subr.bf16.mxu0 0
  %690 = vmatpush1.bf16.msra.mxu0 %v82
  %691 = vmatprep.subr.bf16.mxu0 0
  %692 = vmatpush1.bf16.msra.mxu0 %v83
  %693 = vmatprep.subr.bf16.mxu0 0
  %694 = vmatpush1.bf16.msra.mxu0 0
  %695 = vmatprep.subr.bf16.mxu0 0
  %696 = vmatpush1.bf16.msra.mxu0 0
  %697 = vmatprep.subr.bf16.mxu0 0
  %698 = vmatpush1.bf16.msra.mxu0 0
  %699 = vmatprep.subr.bf16.mxu0 0
  %700 = vmatpush1.bf16.msra.mxu0 0
  %701 = vmatprep.subr.bf16.mxu0 0
  %702 = vmatpush1.bf16.msra.mxu0 0
  %703 = vmatprep.subr.bf16.mxu0 0
  %704 = vmatpush1.bf16.msra.mxu0 0
  %705 = vmatprep.subr.bf16.mxu0 0
  %706 = vmatpush1.bf16.msra.mxu0 0
  %707 = vmatprep.subr.bf16.mxu0 0
  %708 = vmatpush1.bf16.msra.mxu0 0
  %709 = vmatprep.subr.bf16.mxu0 0
  %710 = vmatpush1.bf16.msra.mxu0 0
  %711 = vmatprep.subr.bf16.mxu0 0
  %712 = vmatpush1.bf16.msra.mxu0 0
  %713 = vmatprep.subr.bf16.mxu0 0
  %714 = vmatpush1.bf16.msra.mxu0 0
  %715 = vmatprep.subr.bf16.mxu0 0
  %716 = vmatpush1.bf16.msra.mxu0 0
  %717 = vmatprep.subr.bf16.mxu0 0
  %718 = vmatpush1.bf16.msra.mxu0 0
  %719 = vmatprep.subr.bf16.mxu0 0
  %720 = vmatpush1.bf16.msra.mxu0 0
  %721 = vmatprep.mubr.bf16.mxu0 0
  %722 = vmatmul.mubr.bf16.gmra.mrb[0].mxu0 %v687
  %v723 = vpop.f32.mrb[0].mxu0
  %v724 = vadd.f32 0.0, %v723
  %v725 = vpop.f32.mrb[0].mxu0
  %v726 = vpop.f32.mrb[0].mxu0
  %v727 = vpop.f32.mrb[0].mxu0
  %728 = vdwg.mxu0
  %v729 = vmul.f32 %v684, %v724
  %v730 = vsel %vm179, %v729, 0.0
  %731 = vadd.xlane.f32.xlu0 %v730
  %v732 = vpop.xlane.xlu0 %731
  %v733 = vadd.f32 %v732, %v345
  %v734 = vtanh.pop %v733
  %736 = vrot.lane.b32.xlu0 %v724, 32
  %v737 = vpop.permute.xlu0 %736
  %v739 = vmul.f32 %v684, %v737
  %741 = vrot.lane.b32.xlu0 %v739, 96
  %v742 = vpop.permute.xlu0 %741
  %v744 = vsel %vm179, %v742, 0.0
  %745 = vadd.xlane.f32.xlu0 %v744
  %v746 = vpop.xlane.xlu0 %745
  %v747 = vadd.f32 %v746, %v365
  %v748 = vtanh.pop %v747
  %749 = vrot.lane.b32.xlu0 %v724, 64
  %v750 = vpop.permute.xlu0 %749
  %v752 = vmul.f32 %v684, %v750
  %754 = vrot.lane.b32.xlu0 %v752, 64
  %v755 = vpop.permute.xlu0 %754
  %v757 = vsel %vm179, %v755, 0.0
  %758 = vadd.xlane.f32.xlu0 %v757
  %v759 = vpop.xlane.xlu0 %758
  %v760 = vadd.f32 %v759, %v384
  %v761 = vtanh.pop %v760
  %762 = vrot.lane.b32.xlu0 %v724, 96
  %v763 = vpop.permute.xlu0 %762
  %v765 = vmul.f32 %v684, %v763
  %767 = vrot.lane.b32.xlu0 %v765, 32
  %v768 = vpop.permute.xlu0 %767
  %v770 = vsel %vm179, %v768, 0.0
  %771 = vadd.xlane.f32.xlu0 %v770
  %v772 = vpop.xlane.xlu0 %771
  %v773 = vadd.f32 %v772, %v403
  %v774 = vtanh.pop %v773
  %v775 = vsel %vm179, %v734, -inf
  %776 = vmax.xlane.f32.xlu0 %v775
  %v777 = vpop.xlane.xlu0 %776
  %v778 = vsel %vm179, %v748, -inf
  %779 = vmax.xlane.f32.xlu0 %v778
  %v780 = vpop.xlane.xlu0 %779
  %v781 = vmax.f32 %v777, %v780
  %v782 = vsel %vm179, %v761, -inf
  %783 = vmax.xlane.f32.xlu0 %v782
  %v784 = vpop.xlane.xlu0 %783
  %v785 = vsel %vm179, %v774, -inf
  %786 = vmax.xlane.f32.xlu0 %v785
  %v787 = vpop.xlane.xlu0 %786
  %v788 = vmax.f32 %v784, %v787
  %v789 = vmax.f32 %v781, %v788
  %v790 = vsub.f32 %v734, %v789
  %v791 = vmul.f32 %v790, 1.442695
  %v792 = vpow.pop %v791
  %v793 = vsub.f32 %v748, %v789
  %v794 = vmul.f32 %v793, 1.442695
  %v795 = vpow.pop %v794
  %v796 = vsub.f32 %v761, %v789
  %v797 = vmul.f32 %v796, 1.442695
  %v798 = vpow.pop %v797
  %v799 = vsub.f32 %v774, %v789
  %v800 = vmul.f32 %v799, 1.442695
  %v801 = vpow.pop %v800
  %v802 = vsel %vm179, %v792, 0.0
  %803 = vadd.xlane.f32.xlu0 %v802
  %v804 = vpop.xlane.xlu0 %803
  %v805 = vsel %vm179, %v795, 0.0
  %806 = vadd.xlane.f32.xlu0 %v805
  %v807 = vpop.xlane.xlu0 %806
  %v808 = vadd.f32 %v804, %v807
  %v809 = vsel %vm179, %v798, 0.0
  %810 = vadd.xlane.f32.xlu0 %v809
  %v811 = vpop.xlane.xlu0 %810
  %v812 = vadd.f32 %v808, %v811
  %v813 = vsel %vm179, %v801, 0.0
  %814 = vadd.xlane.f32.xlu0 %v813
  %v815 = vpop.xlane.xlu0 %814
  %v816 = vadd.f32 %v812, %v815
  %v817 = vrcp.pop %v816
  %v818 = vmul.f32 %v792, %v817
  %820 = vset.pattern.permute.xlu0 0
  %821 = vperm.xlu0 %820, %v818
  %v822 = vpop.permute.xlu0 %821
  %v824 = vmul.f32 %v822, %v684
  %825 = vset.pattern.permute.xlu0 1
  %826 = vperm.xlu0 %825, %v818
  %v827 = vpop.permute.xlu0 %826
  %v829 = vmul.f32 %v827, %v684
  %831 = vrot.lane.b32.xlu0 %v829, 96
  %v832 = vpop.permute.xlu0 %831
  %v834 = vadd.f32 %v824, %v832
  %835 = vset.pattern.permute.xlu0 2
  %836 = vperm.xlu0 %835, %v818
  %v837 = vpop.permute.xlu0 %836
  %v839 = vmul.f32 %v837, %v684
  %841 = vrot.lane.b32.xlu0 %v839, 64
  %v842 = vpop.permute.xlu0 %841
  %v844 = vadd.f32 %v834, %v842
  %845 = vset.pattern.permute.xlu0 3
  %846 = vperm.xlu0 %845, %v818
  %v847 = vpop.permute.xlu0 %846
  %v849 = vmul.f32 %v847, %v684
  %851 = vrot.lane.b32.xlu0 %v849, 32
  %v852 = vpop.permute.xlu0 %851
  %v854 = vadd.f32 %v844, %v852
  %v855 = vmul.f32 %v488, %v683
  %v856 = vadd.f32 %v855, %v854
  %v857 = vtanh.pop %v856
  %859 = vrot.lane.b32.xlu0 %v683, 96
  %v860 = vpop.permute.xlu0 %859
  %v862 = vmul.f32 %v857, %v860
  %s863 = scalar_lea.vmem %s6, 8
  %864 = vst.msk [vmem:[%s863] sm:$0xff] %vm179, %v862
  %s865 = scalar_lea.vmem %s0, 16
  %v866 = vld [vmem:[%s865] sm:$0xff]
  %v867 = vpack.c.bf16 %v862, %v862
  %v868 = vpack.c.bf16 %v866, %v866
  %v870 = vsel %vm94, %v868, 0
  %872 = vmatprep.subr.bf16.mxu0 %v67
  %873 = vmatpush1.bf16.msra.mxu0 %v66
  %874 = vmatprep.subr.bf16.mxu0 %v70
  %875 = vmatpush1.bf16.msra.mxu0 %v69
  %876 = vmatprep.subr.bf16.mxu0 %v73
  %877 = vmatpush1.bf16.msra.mxu0 %v72
  %878 = vmatprep.subr.bf16.mxu0 %v76
  %879 = vmatpush1.bf16.msra.mxu0 %v75
  %880 = vmatprep.subr.bf16.mxu0 0
  %881 = vmatpush1.bf16.msra.mxu0 0
  %882 = vmatprep.subr.bf16.mxu0 0
  %883 = vmatpush1.bf16.msra.mxu0 0
  %884 = vmatprep.subr.bf16.mxu0 0
  %885 = vmatpush1.bf16.msra.mxu0 0
  %886 = vmatprep.subr.bf16.mxu0 0
  %887 = vmatpush1.bf16.msra.mxu0 0
  %888 = vmatprep.subr.bf16.mxu0 0
  %889 = vmatpush1.bf16.msra.mxu0 0
  %890 = vmatprep.subr.bf16.mxu0 0
  %891 = vmatpush1.bf16.msra.mxu0 0
  %892 = vmatprep.subr.bf16.mxu0 0
  %893 = vmatpush1.bf16.msra.mxu0 0
  %894 = vmatprep.subr.bf16.mxu0 0
  %895 = vmatpush1.bf16.msra.mxu0 0
  %896 = vmatprep.subr.bf16.mxu0 0
  %897 = vmatpush1.bf16.msra.mxu0 0
  %898 = vmatprep.subr.bf16.mxu0 0
  %899 = vmatpush1.bf16.msra.mxu0 0
  %900 = vmatprep.subr.bf16.mxu0 0
  %901 = vmatpush1.bf16.msra.mxu0 0
  %902 = vmatprep.subr.bf16.mxu0 0
  %903 = vmatpush1.bf16.msra.mxu0 0
  %904 = vmatprep.mubr.bf16.mxu0 0
  %905 = vmatmul.mubr.bf16.gmra.mrb[0].mxu0 %v870
  %v906 = vpop.f32.mrb[0].mxu0
  %v907 = vadd.f32 0.0, %v906
  %v908 = vpop.f32.mrb[0].mxu0
  %v909 = vadd.f32 0.0, %v908
  %v910 = vpop.f32.mrb[0].mxu0
  %v911 = vpop.f32.mrb[0].mxu0
  %912 = vdwg.mxu0
  %913 = vmatprep.subr.bf16.mxu0 0
  %914 = vmatpush1.bf16.msra.mxu0 %v68
  %915 = vmatprep.subr.bf16.mxu0 0
  %916 = vmatpush1.bf16.msra.mxu0 %v71
  %917 = vmatprep.subr.bf16.mxu0 0
  %918 = vmatpush1.bf16.msra.mxu0 %v74
  %919 = vmatprep.subr.bf16.mxu0 0
  %920 = vmatpush1.bf16.msra.mxu0 %v77
  %921 = vmatprep.subr.bf16.mxu0 0
  %922 = vmatpush1.bf16.msra.mxu0 0
  %923 = vmatprep.subr.bf16.mxu0 0
  %924 = vmatpush1.bf16.msra.mxu0 0
  %925 = vmatprep.subr.bf16.mxu0 0
  %926 = vmatpush1.bf16.msra.mxu0 0
  %927 = vmatprep.subr.bf16.mxu0 0
  %928 = vmatpush1.bf16.msra.mxu0 0
  %929 = vmatprep.subr.bf16.mxu0 0
  %930 = vmatpush1.bf16.msra.mxu0 0
  %931 = vmatprep.subr.bf16.mxu0 0
  %932 = vmatpush1.bf16.msra.mxu0 0
  %933 = vmatprep.subr.bf16.mxu0 0
  %934 = vmatpush1.bf16.msra.mxu0 0
  %935 = vmatprep.subr.bf16.mxu0 0
  %936 = vmatpush1.bf16.msra.mxu0 0
  %937 = vmatprep.subr.bf16.mxu0 0
  %938 = vmatpush1.bf16.msra.mxu0 0
  %939 = vmatprep.subr.bf16.mxu0 0
  %940 = vmatpush1.bf16.msra.mxu0 0
  %941 = vmatprep.subr.bf16.mxu0 0
  %942 = vmatpush1.bf16.msra.mxu0 0
  %943 = vmatprep.subr.bf16.mxu0 0
  %944 = vmatpush1.bf16.msra.mxu0 0
  %945 = vmatprep.mubr.bf16.mxu0 0
  %946 = vmatmul.mubr.bf16.gmra.mrb[0].mxu0 %v870
  %v947 = vpop.f32.mrb[0].mxu0
  %v948 = vadd.f32 0.0, %v947
  %v949 = vpop.f32.mrb[0].mxu0
  %v950 = vpop.f32.mrb[0].mxu0
  %v951 = vpop.f32.mrb[0].mxu0
  %952 = vdwg.mxu0
  %v954 = vsel %vm179, %v867, 0
  %956 = vmatprep.subr.bf16.mxu0 %v37
  %957 = vmatpush1.bf16.msra.mxu0 %v36
  %958 = vmatprep.subr.bf16.mxu0 %v40
  %959 = vmatpush1.bf16.msra.mxu0 %v39
  %960 = vmatprep.subr.bf16.mxu0 0
  %961 = vmatpush1.bf16.msra.mxu0 0
  %962 = vmatprep.subr.bf16.mxu0 0
  %963 = vmatpush1.bf16.msra.mxu0 0
  %964 = vmatprep.subr.bf16.mxu0 0
  %965 = vmatpush1.bf16.msra.mxu0 0
  %966 = vmatprep.subr.bf16.mxu0 0
  %967 = vmatpush1.bf16.msra.mxu0 0
  %968 = vmatprep.subr.bf16.mxu0 0
  %969 = vmatpush1.bf16.msra.mxu0 0
  %970 = vmatprep.subr.bf16.mxu0 0
  %971 = vmatpush1.bf16.msra.mxu0 0
  %972 = vmatprep.subr.bf16.mxu0 0
  %973 = vmatpush1.bf16.msra.mxu0 0
  %974 = vmatprep.subr.bf16.mxu0 0
  %975 = vmatpush1.bf16.msra.mxu0 0
  %976 = vmatprep.subr.bf16.mxu0 0
  %977 = vmatpush1.bf16.msra.mxu0 0
  %978 = vmatprep.subr.bf16.mxu0 0
  %979 = vmatpush1.bf16.msra.mxu0 0
  %980 = vmatprep.subr.bf16.mxu0 0
  %981 = vmatpush1.bf16.msra.mxu0 0
  %982 = vmatprep.subr.bf16.mxu0 0
  %983 = vmatpush1.bf16.msra.mxu0 0
  %984 = vmatprep.subr.bf16.mxu0 0
  %985 = vmatpush1.bf16.msra.mxu0 0
  %986 = vmatprep.subr.bf16.mxu0 0
  %987 = vmatpush1.bf16.msra.mxu0 0
  %988 = vmatprep.mubr.bf16.mxu0 0
  %989 = vmatmul.mubr.bf16.gmra.mrb[0].mxu0 %v954
  %v990 = vpop.f32.mrb[0].mxu0
  %v991 = vadd.f32 %v907, %v990
  %v992 = vpop.f32.mrb[0].mxu0
  %v993 = vadd.f32 %v909, %v992
  %v994 = vpop.f32.mrb[0].mxu0
  %v995 = vpop.f32.mrb[0].mxu0
  %996 = vdwg.mxu0
  %997 = vmatprep.subr.bf16.mxu0 0
  %998 = vmatpush1.bf16.msra.mxu0 %v38
  %999 = vmatprep.subr.bf16.mxu0 0
  %1000 = vmatpush1.bf16.msra.mxu0 %v41
  %1001 = vmatprep.subr.bf16.mxu0 0
  %1002 = vmatpush1.bf16.msra.mxu0 0
  %1003 = vmatprep.subr.bf16.mxu0 0
  %1004 = vmatpush1.bf16.msra.mxu0 0
  %1005 = vmatprep.subr.bf16.mxu0 0
  %1006 = vmatpush1.bf16.msra.mxu0 0
  %1007 = vmatprep.subr.bf16.mxu0 0
  %1008 = vmatpush1.bf16.msra.mxu0 0
  %1009 = vmatprep.subr.bf16.mxu0 0
  %1010 = vmatpush1.bf16.msra.mxu0 0
  %1011 = vmatprep.subr.bf16.mxu0 0
  %1012 = vmatpush1.bf16.msra.mxu0 0
  %1013 = vmatprep.subr.bf16.mxu0 0
  %1014 = vmatpush1.bf16.msra.mxu0 0
  %1015 = vmatprep.subr.bf16.mxu0 0
  %1016 = vmatpush1.bf16.msra.mxu0 0
  %1017 = vmatprep.subr.bf16.mxu0 0
  %1018 = vmatpush1.bf16.msra.mxu0 0
  %1019 = vmatprep.subr.bf16.mxu0 0
  %1020 = vmatpush1.bf16.msra.mxu0 0
  %1021 = vmatprep.subr.bf16.mxu0 0
  %1022 = vmatpush1.bf16.msra.mxu0 0
  %1023 = vmatprep.subr.bf16.mxu0 0
  %1024 = vmatpush1.bf16.msra.mxu0 0
  %1025 = vmatprep.subr.bf16.mxu0 0
  %1026 = vmatpush1.bf16.msra.mxu0 0
  %1027 = vmatprep.subr.bf16.mxu0 0
  %1028 = vmatpush1.bf16.msra.mxu0 0
  %1029 = vmatprep.mubr.bf16.mxu0 0
  %1030 = vmatmul.mubr.bf16.gmra.mrb[0].mxu0 %v954
  %v1031 = vpop.f32.mrb[0].mxu0
  %v1032 = vadd.f32 %v948, %v1031
  %v1033 = vpop.f32.mrb[0].mxu0
  %v1034 = vpop.f32.mrb[0].mxu0
  %v1035 = vpop.f32.mrb[0].mxu0
  %1036 = vdwg.mxu0
  %v1037 = vadd.f32 %v991, %v268
  %v1038 = vadd.f32 %v993, %v272
  %v1039 = vadd.f32 %v1032, %v276
  %v1040 = vtanh.pop %v1037
  %v1041 = vxor.u32 %v1038, 2147483648
  %v1042 = vxor.u32 %v1039, 2147483648
  %v1043 = vmul.f32 %v1041, 1.442695
  %v1044 = vpow.pop %v1043
  %v1045 = vmul.f32 %v1042, 1.442695
  %v1046 = vpow.pop %v1045
  %v1047 = vadd.f32 %v1044, 1.0
  %v1048 = vadd.f32 %v1046, 1.0
  %v1049 = vrcp.pop %v1047
  %v1050 = vmul.f32 1.0, %v1049
  %v1051 = vrcp.pop %v1048
  %v1052 = vmul.f32 1.0, %v1051
  %v1053 = vmul.f32 %v1040, %v1050
  %v1054 = vpack.c.bf16 %v856, %v856
  %v1056 = vsel %vm179, %v1054, 0
  %1058 = vmatprep.subr.bf16.mxu0 0
  %1059 = vmatpush1.bf16.msra.mxu0 %v82
  %1060 = vmatprep.subr.bf16.mxu0 0
  %1061 = vmatpush1.bf16.msra.mxu0 %v83
  %1062 = vmatprep.subr.bf16.mxu0 0
  %1063 = vmatpush1.bf16.msra.mxu0 0
  %1064 = vmatprep.subr.bf16.mxu0 0
  %1065 = vmatpush1.bf16.msra.mxu0 0
  %1066 = vmatprep.subr.bf16.mxu0 0
  %1067 = vmatpush1.bf16.msra.mxu0 0
  %1068 = vmatprep.subr.bf16.mxu0 0
  %1069 = vmatpush1.bf16.msra.mxu0 0
  %1070 = vmatprep.subr.bf16.mxu0 0
  %1071 = vmatpush1.bf16.msra.mxu0 0
  %1072 = vmatprep.subr.bf16.mxu0 0
  %1073 = vmatpush1.bf16.msra.mxu0 0
  %1074 = vmatprep.subr.bf16.mxu0 0
  %1075 = vmatpush1.bf16.msra.mxu0 0
  %1076 = vmatprep.subr.bf16.mxu0 0
  %1077 = vmatpush1.bf16.msra.mxu0 0
  %1078 = vmatprep.subr.bf16.mxu0 0
  %1079 = vmatpush1.bf16.msra.mxu0 0
  %1080 = vmatprep.subr.bf16.mxu0 0
  %1081 = vmatpush1.bf16.msra.mxu0 0
  %1082 = vmatprep.subr.bf16.mxu0 0
  %1083 = vmatpush1.bf16.msra.mxu0 0
  %1084 = vmatprep.subr.bf16.mxu0 0
  %1085 = vmatpush1.bf16.msra.mxu0 0
  %1086 = vmatprep.subr.bf16.mxu0 0
  %1087 = vmatpush1.bf16.msra.mxu0 0
  %1088 = vmatprep.subr.bf16.mxu0 0
  %1089 = vmatpush1.bf16.msra.mxu0 0
  %1090 = vmatprep.mubr.bf16.mxu0 0
  %1091 = vmatmul.mubr.bf16.gmra.mrb[0].mxu0 %v1056
  %v1092 = vpop.f32.mrb[0].mxu0
  %v1093 = vadd.f32 0.0, %v1092
  %v1094 = vpop.f32.mrb[0].mxu0
  %v1095 = vpop.f32.mrb[0].mxu0
  %v1096 = vpop.f32.mrb[0].mxu0
  %1097 = vdwg.mxu0
  %v1098 = vmul.f32 %v1053, %v1093
  %v1099 = vsel %vm179, %v1098, 0.0
  %1100 = vadd.xlane.f32.xlu0 %v1099
  %v1101 = vpop.xlane.xlu0 %1100
  %v1102 = vadd.f32 %v1101, %v345
  %v1103 = vtanh.pop %v1102
  %1105 = vrot.lane.b32.xlu0 %v1093, 32
  %v1106 = vpop.permute.xlu0 %1105
  %v1108 = vmul.f32 %v1053, %v1106
  %1110 = vrot.lane.b32.xlu0 %v1108, 96
  %v1111 = vpop.permute.xlu0 %1110
  %v1113 = vsel %vm179, %v1111, 0.0
  %1114 = vadd.xlane.f32.xlu0 %v1113
  %v1115 = vpop.xlane.xlu0 %1114
  %v1116 = vadd.f32 %v1115, %v365
  %v1117 = vtanh.pop %v1116
  %1118 = vrot.lane.b32.xlu0 %v1093, 64
  %v1119 = vpop.permute.xlu0 %1118
  %v1121 = vmul.f32 %v1053, %v1119
  %1123 = vrot.lane.b32.xlu0 %v1121, 64
  %v1124 = vpop.permute.xlu0 %1123
  %v1126 = vsel %vm179, %v1124, 0.0
  %1127 = vadd.xlane.f32.xlu0 %v1126
  %v1128 = vpop.xlane.xlu0 %1127
  %v1129 = vadd.f32 %v1128, %v384
  %v1130 = vtanh.pop %v1129
  %1131 = vrot.lane.b32.xlu0 %v1093, 96
  %v1132 = vpop.permute.xlu0 %1131
  %v1134 = vmul.f32 %v1053, %v1132
  %1136 = vrot.lane.b32.xlu0 %v1134, 32
  %v1137 = vpop.permute.xlu0 %1136
  %v1139 = vsel %vm179, %v1137, 0.0
  %1140 = vadd.xlane.f32.xlu0 %v1139
  %v1141 = vpop.xlane.xlu0 %1140
  %v1142 = vadd.f32 %v1141, %v403
  %v1143 = vtanh.pop %v1142
  %v1144 = vsel %vm179, %v1103, -inf
  %1145 = vmax.xlane.f32.xlu0 %v1144
  %v1146 = vpop.xlane.xlu0 %1145
  %v1147 = vsel %vm179, %v1117, -inf
  %1148 = vmax.xlane.f32.xlu0 %v1147
  %v1149 = vpop.xlane.xlu0 %1148
  %v1150 = vmax.f32 %v1146, %v1149
  %v1151 = vsel %vm179, %v1130, -inf
  %1152 = vmax.xlane.f32.xlu0 %v1151
  %v1153 = vpop.xlane.xlu0 %1152
  %v1154 = vsel %vm179, %v1143, -inf
  %1155 = vmax.xlane.f32.xlu0 %v1154
  %v1156 = vpop.xlane.xlu0 %1155
  %v1157 = vmax.f32 %v1153, %v1156
  %v1158 = vmax.f32 %v1150, %v1157
  %v1159 = vsub.f32 %v1103, %v1158
  %v1160 = vmul.f32 %v1159, 1.442695
  %v1161 = vpow.pop %v1160
  %v1162 = vsub.f32 %v1117, %v1158
  %v1163 = vmul.f32 %v1162, 1.442695
  %v1164 = vpow.pop %v1163
  %v1165 = vsub.f32 %v1130, %v1158
  %v1166 = vmul.f32 %v1165, 1.442695
  %v1167 = vpow.pop %v1166
  %v1168 = vsub.f32 %v1143, %v1158
  %v1169 = vmul.f32 %v1168, 1.442695
  %v1170 = vpow.pop %v1169
  %v1171 = vsel %vm179, %v1161, 0.0
  %1172 = vadd.xlane.f32.xlu0 %v1171
  %v1173 = vpop.xlane.xlu0 %1172
  %v1174 = vsel %vm179, %v1164, 0.0
  %1175 = vadd.xlane.f32.xlu0 %v1174
  %v1176 = vpop.xlane.xlu0 %1175
  %v1177 = vadd.f32 %v1173, %v1176
  %v1178 = vsel %vm179, %v1167, 0.0
  %1179 = vadd.xlane.f32.xlu0 %v1178
  %v1180 = vpop.xlane.xlu0 %1179
  %v1181 = vadd.f32 %v1177, %v1180
  %v1182 = vsel %vm179, %v1170, 0.0
  %1183 = vadd.xlane.f32.xlu0 %v1182
  %v1184 = vpop.xlane.xlu0 %1183
  %v1185 = vadd.f32 %v1181, %v1184
  %v1186 = vrcp.pop %v1185
  %v1187 = vmul.f32 %v1161, %v1186
  %1189 = vset.pattern.permute.xlu0 0
  %1190 = vperm.xlu0 %1189, %v1187
  %v1191 = vpop.permute.xlu0 %1190
  %v1193 = vmul.f32 %v1191, %v1053
  %1194 = vset.pattern.permute.xlu0 1
  %1195 = vperm.xlu0 %1194, %v1187
  %v1196 = vpop.permute.xlu0 %1195
  %v1198 = vmul.f32 %v1196, %v1053
  %1200 = vrot.lane.b32.xlu0 %v1198, 96
  %v1201 = vpop.permute.xlu0 %1200
  %v1203 = vadd.f32 %v1193, %v1201
  %1204 = vset.pattern.permute.xlu0 2
  %1205 = vperm.xlu0 %1204, %v1187
  %v1206 = vpop.permute.xlu0 %1205
  %v1208 = vmul.f32 %v1206, %v1053
  %1210 = vrot.lane.b32.xlu0 %v1208, 64
  %v1211 = vpop.permute.xlu0 %1210
  %v1213 = vadd.f32 %v1203, %v1211
  %1214 = vset.pattern.permute.xlu0 3
  %1215 = vperm.xlu0 %1214, %v1187
  %v1216 = vpop.permute.xlu0 %1215
  %v1218 = vmul.f32 %v1216, %v1053
  %1220 = vrot.lane.b32.xlu0 %v1218, 32
  %v1221 = vpop.permute.xlu0 %1220
  %v1223 = vadd.f32 %v1213, %v1221
  %v1224 = vmul.f32 %v856, %v1052
  %v1225 = vadd.f32 %v1224, %v1223
  %v1226 = vtanh.pop %v1225
  %1228 = vrot.lane.b32.xlu0 %v1052, 96
  %v1229 = vpop.permute.xlu0 %1228
  %v1231 = vmul.f32 %v1226, %v1229
  %s1232 = scalar_lea.vmem %s6, 16
  %1233 = vst.msk [vmem:[%s1232] sm:$0xff] %vm179, %v1231
  %s1234 = scalar_lea.vmem %s0, 24
  %v1235 = vld [vmem:[%s1234] sm:$0xff]
  %v1236 = vpack.c.bf16 %v1231, %v1231
  %v1237 = vpack.c.bf16 %v1235, %v1235
  %v1239 = vsel %vm94, %v1237, 0
  %1241 = vmatprep.subr.bf16.mxu0 %v67
  %1242 = vmatpush1.bf16.msra.mxu0 %v66
  %1243 = vmatprep.subr.bf16.mxu0 %v70
  %1244 = vmatpush1.bf16.msra.mxu0 %v69
  %1245 = vmatprep.subr.bf16.mxu0 %v73
  %1246 = vmatpush1.bf16.msra.mxu0 %v72
  %1247 = vmatprep.subr.bf16.mxu0 %v76
  %1248 = vmatpush1.bf16.msra.mxu0 %v75
  %1249 = vmatprep.subr.bf16.mxu0 0
  %1250 = vmatpush1.bf16.msra.mxu0 0
  %1251 = vmatprep.subr.bf16.mxu0 0
  %1252 = vmatpush1.bf16.msra.mxu0 0
  %1253 = vmatprep.subr.bf16.mxu0 0
  %1254 = vmatpush1.bf16.msra.mxu0 0
  %1255 = vmatprep.subr.bf16.mxu0 0
  %1256 = vmatpush1.bf16.msra.mxu0 0
  %1257 = vmatprep.subr.bf16.mxu0 0
  %1258 = vmatpush1.bf16.msra.mxu0 0
  %1259 = vmatprep.subr.bf16.mxu0 0
  %1260 = vmatpush1.bf16.msra.mxu0 0
  %1261 = vmatprep.subr.bf16.mxu0 0
  %1262 = vmatpush1.bf16.msra.mxu0 0
  %1263 = vmatprep.subr.bf16.mxu0 0
  %1264 = vmatpush1.bf16.msra.mxu0 0
  %1265 = vmatprep.subr.bf16.mxu0 0
  %1266 = vmatpush1.bf16.msra.mxu0 0
  %1267 = vmatprep.subr.bf16.mxu0 0
  %1268 = vmatpush1.bf16.msra.mxu0 0
  %1269 = vmatprep.subr.bf16.mxu0 0
  %1270 = vmatpush1.bf16.msra.mxu0 0
  %1271 = vmatprep.subr.bf16.mxu0 0
  %1272 = vmatpush1.bf16.msra.mxu0 0
  %1273 = vmatprep.mubr.bf16.mxu0 0
  %1274 = vmatmul.mubr.bf16.gmra.mrb[0].mxu0 %v1239
  %v1275 = vpop.f32.mrb[0].mxu0
  %v1276 = vadd.f32 0.0, %v1275
  %v1277 = vpop.f32.mrb[0].mxu0
  %v1278 = vadd.f32 0.0, %v1277
  %v1279 = vpop.f32.mrb[0].mxu0
  %v1280 = vpop.f32.mrb[0].mxu0
  %1281 = vdwg.mxu0
  %1282 = vmatprep.subr.bf16.mxu0 0
  %1283 = vmatpush1.bf16.msra.mxu0 %v68
  %1284 = vmatprep.subr.bf16.mxu0 0
  %1285 = vmatpush1.bf16.msra.mxu0 %v71
  %1286 = vmatprep.subr.bf16.mxu0 0
  %1287 = vmatpush1.bf16.msra.mxu0 %v74
  %1288 = vmatprep.subr.bf16.mxu0 0
  %1289 = vmatpush1.bf16.msra.mxu0 %v77
  %1290 = vmatprep.subr.bf16.mxu0 0
  %1291 = vmatpush1.bf16.msra.mxu0 0
  %1292 = vmatprep.subr.bf16.mxu0 0
  %1293 = vmatpush1.bf16.msra.mxu0 0
  %1294 = vmatprep.subr.bf16.mxu0 0
  %1295 = vmatpush1.bf16.msra.mxu0 0
  %1296 = vmatprep.subr.bf16.mxu0 0
  %1297 = vmatpush1.bf16.msra.mxu0 0
  %1298 = vmatprep.subr.bf16.mxu0 0
  %1299 = vmatpush1.bf16.msra.mxu0 0
  %1300 = vmatprep.subr.bf16.mxu0 0
  %1301 = vmatpush1.bf16.msra.mxu0 0
  %1302 = vmatprep.subr.bf16.mxu0 0
  %1303 = vmatpush1.bf16.msra.mxu0 0
  %1304 = vmatprep.subr.bf16.mxu0 0
  %1305 = vmatpush1.bf16.msra.mxu0 0
  %1306 = vmatprep.subr.bf16.mxu0 0
  %1307 = vmatpush1.bf16.msra.mxu0 0
  %1308 = vmatprep.subr.bf16.mxu0 0
  %1309 = vmatpush1.bf16.msra.mxu0 0
  %1310 = vmatprep.subr.bf16.mxu0 0
  %1311 = vmatpush1.bf16.msra.mxu0 0
  %1312 = vmatprep.subr.bf16.mxu0 0
  %1313 = vmatpush1.bf16.msra.mxu0 0
  %1314 = vmatprep.mubr.bf16.mxu0 0
  %1315 = vmatmul.mubr.bf16.gmra.mrb[0].mxu0 %v1239
  %v1316 = vpop.f32.mrb[0].mxu0
  %v1317 = vadd.f32 0.0, %v1316
  %v1318 = vpop.f32.mrb[0].mxu0
  %v1319 = vpop.f32.mrb[0].mxu0
  %v1320 = vpop.f32.mrb[0].mxu0
  %1321 = vdwg.mxu0
  %v1323 = vsel %vm179, %v1236, 0
  %1325 = vmatprep.subr.bf16.mxu0 %v37
  %1326 = vmatpush1.bf16.msra.mxu0 %v36
  %1327 = vmatprep.subr.bf16.mxu0 %v40
  %1328 = vmatpush1.bf16.msra.mxu0 %v39
  %1329 = vmatprep.subr.bf16.mxu0 0
  %1330 = vmatpush1.bf16.msra.mxu0 0
  %1331 = vmatprep.subr.bf16.mxu0 0
  %1332 = vmatpush1.bf16.msra.mxu0 0
  %1333 = vmatprep.subr.bf16.mxu0 0
  %1334 = vmatpush1.bf16.msra.mxu0 0
  %1335 = vmatprep.subr.bf16.mxu0 0
  %1336 = vmatpush1.bf16.msra.mxu0 0
  %1337 = vmatprep.subr.bf16.mxu0 0
  %1338 = vmatpush1.bf16.msra.mxu0 0
  %1339 = vmatprep.subr.bf16.mxu0 0
  %1340 = vmatpush1.bf16.msra.mxu0 0
  %1341 = vmatprep.subr.bf16.mxu0 0
  %1342 = vmatpush1.bf16.msra.mxu0 0
  %1343 = vmatprep.subr.bf16.mxu0 0
  %1344 = vmatpush1.bf16.msra.mxu0 0
  %1345 = vmatprep.subr.bf16.mxu0 0
  %1346 = vmatpush1.bf16.msra.mxu0 0
  %1347 = vmatprep.subr.bf16.mxu0 0
  %1348 = vmatpush1.bf16.msra.mxu0 0
  %1349 = vmatprep.subr.bf16.mxu0 0
  %1350 = vmatpush1.bf16.msra.mxu0 0
  %1351 = vmatprep.subr.bf16.mxu0 0
  %1352 = vmatpush1.bf16.msra.mxu0 0
  %1353 = vmatprep.subr.bf16.mxu0 0
  %1354 = vmatpush1.bf16.msra.mxu0 0
  %1355 = vmatprep.subr.bf16.mxu0 0
  %1356 = vmatpush1.bf16.msra.mxu0 0
  %1357 = vmatprep.mubr.bf16.mxu0 0
  %1358 = vmatmul.mubr.bf16.gmra.mrb[0].mxu0 %v1323
  %v1359 = vpop.f32.mrb[0].mxu0
  %v1360 = vadd.f32 %v1276, %v1359
  %v1361 = vpop.f32.mrb[0].mxu0
  %v1362 = vadd.f32 %v1278, %v1361
  %v1363 = vpop.f32.mrb[0].mxu0
  %v1364 = vpop.f32.mrb[0].mxu0
  %1365 = vdwg.mxu0
  %1366 = vmatprep.subr.bf16.mxu0 0
  %1367 = vmatpush1.bf16.msra.mxu0 %v38
  %1368 = vmatprep.subr.bf16.mxu0 0
  %1369 = vmatpush1.bf16.msra.mxu0 %v41
  %1370 = vmatprep.subr.bf16.mxu0 0
  %1371 = vmatpush1.bf16.msra.mxu0 0
  %1372 = vmatprep.subr.bf16.mxu0 0
  %1373 = vmatpush1.bf16.msra.mxu0 0
  %1374 = vmatprep.subr.bf16.mxu0 0
  %1375 = vmatpush1.bf16.msra.mxu0 0
  %1376 = vmatprep.subr.bf16.mxu0 0
  %1377 = vmatpush1.bf16.msra.mxu0 0
  %1378 = vmatprep.subr.bf16.mxu0 0
  %1379 = vmatpush1.bf16.msra.mxu0 0
  %1380 = vmatprep.subr.bf16.mxu0 0
  %1381 = vmatpush1.bf16.msra.mxu0 0
  %1382 = vmatprep.subr.bf16.mxu0 0
  %1383 = vmatpush1.bf16.msra.mxu0 0
  %1384 = vmatprep.subr.bf16.mxu0 0
  %1385 = vmatpush1.bf16.msra.mxu0 0
  %1386 = vmatprep.subr.bf16.mxu0 0
  %1387 = vmatpush1.bf16.msra.mxu0 0
  %1388 = vmatprep.subr.bf16.mxu0 0
  %1389 = vmatpush1.bf16.msra.mxu0 0
  %1390 = vmatprep.subr.bf16.mxu0 0
  %1391 = vmatpush1.bf16.msra.mxu0 0
  %1392 = vmatprep.subr.bf16.mxu0 0
  %1393 = vmatpush1.bf16.msra.mxu0 0
  %1394 = vmatprep.subr.bf16.mxu0 0
  %1395 = vmatpush1.bf16.msra.mxu0 0
  %1396 = vmatprep.subr.bf16.mxu0 0
  %1397 = vmatpush1.bf16.msra.mxu0 0
  %1398 = vmatprep.mubr.bf16.mxu0 0
  %1399 = vmatmul.mubr.bf16.gmra.mrb[0].mxu0 %v1323
  %v1400 = vpop.f32.mrb[0].mxu0
  %v1401 = vadd.f32 %v1317, %v1400
  %v1402 = vpop.f32.mrb[0].mxu0
  %v1403 = vpop.f32.mrb[0].mxu0
  %v1404 = vpop.f32.mrb[0].mxu0
  %1405 = vdwg.mxu0
  %v1406 = vadd.f32 %v1360, %v268
  %v1407 = vadd.f32 %v1362, %v272
  %v1408 = vadd.f32 %v1401, %v276
  %v1409 = vtanh.pop %v1406
  %v1410 = vxor.u32 %v1407, 2147483648
  %v1411 = vxor.u32 %v1408, 2147483648
  %v1412 = vmul.f32 %v1410, 1.442695
  %v1413 = vpow.pop %v1412
  %v1414 = vmul.f32 %v1411, 1.442695
  %v1415 = vpow.pop %v1414
  %v1416 = vadd.f32 %v1413, 1.0
  %v1417 = vadd.f32 %v1415, 1.0
  %v1418 = vrcp.pop %v1416
  %v1419 = vmul.f32 1.0, %v1418
  %v1420 = vrcp.pop %v1417
  %v1421 = vmul.f32 1.0, %v1420
  %v1422 = vmul.f32 %v1409, %v1419
  %v1423 = vpack.c.bf16 %v1225, %v1225
  %v1425 = vsel %vm179, %v1423, 0
  %1427 = vmatprep.subr.bf16.mxu0 0
  %1428 = vmatpush1.bf16.msra.mxu0 %v82
  %1429 = vmatprep.subr.bf16.mxu0 0
  %1430 = vmatpush1.bf16.msra.mxu0 %v83
  %1431 = vmatprep.subr.bf16.mxu0 0
  %1432 = vmatpush1.bf16.msra.mxu0 0
  %1433 = vmatprep.subr.bf16.mxu0 0
  %1434 = vmatpush1.bf16.msra.mxu0 0
  %1435 = vmatprep.subr.bf16.mxu0 0
  %1436 = vmatpush1.bf16.msra.mxu0 0
  %1437 = vmatprep.subr.bf16.mxu0 0
  %1438 = vmatpush1.bf16.msra.mxu0 0
  %1439 = vmatprep.subr.bf16.mxu0 0
  %1440 = vmatpush1.bf16.msra.mxu0 0
  %1441 = vmatprep.subr.bf16.mxu0 0
  %1442 = vmatpush1.bf16.msra.mxu0 0
  %1443 = vmatprep.subr.bf16.mxu0 0
  %1444 = vmatpush1.bf16.msra.mxu0 0
  %1445 = vmatprep.subr.bf16.mxu0 0
  %1446 = vmatpush1.bf16.msra.mxu0 0
  %1447 = vmatprep.subr.bf16.mxu0 0
  %1448 = vmatpush1.bf16.msra.mxu0 0
  %1449 = vmatprep.subr.bf16.mxu0 0
  %1450 = vmatpush1.bf16.msra.mxu0 0
  %1451 = vmatprep.subr.bf16.mxu0 0
  %1452 = vmatpush1.bf16.msra.mxu0 0
  %1453 = vmatprep.subr.bf16.mxu0 0
  %1454 = vmatpush1.bf16.msra.mxu0 0
  %1455 = vmatprep.subr.bf16.mxu0 0
  %1456 = vmatpush1.bf16.msra.mxu0 0
  %1457 = vmatprep.subr.bf16.mxu0 0
  %1458 = vmatpush1.bf16.msra.mxu0 0
  %1459 = vmatprep.mubr.bf16.mxu0 0
  %1460 = vmatmul.mubr.bf16.gmra.mrb[0].mxu0 %v1425
  %v1461 = vpop.f32.mrb[0].mxu0
  %v1462 = vadd.f32 0.0, %v1461
  %v1463 = vpop.f32.mrb[0].mxu0
  %v1464 = vpop.f32.mrb[0].mxu0
  %v1465 = vpop.f32.mrb[0].mxu0
  %1466 = vdwg.mxu0
  %v1467 = vmul.f32 %v1422, %v1462
  %v1468 = vsel %vm179, %v1467, 0.0
  %1469 = vadd.xlane.f32.xlu0 %v1468
  %v1470 = vpop.xlane.xlu0 %1469
  %v1471 = vadd.f32 %v1470, %v345
  %v1472 = vtanh.pop %v1471
  %1474 = vrot.lane.b32.xlu0 %v1462, 32
  %v1475 = vpop.permute.xlu0 %1474
  %v1477 = vmul.f32 %v1422, %v1475
  %1479 = vrot.lane.b32.xlu0 %v1477, 96
  %v1480 = vpop.permute.xlu0 %1479
  %v1482 = vsel %vm179, %v1480, 0.0
  %1483 = vadd.xlane.f32.xlu0 %v1482
  %v1484 = vpop.xlane.xlu0 %1483
  %v1485 = vadd.f32 %v1484, %v365
  %v1486 = vtanh.pop %v1485
  %1487 = vrot.lane.b32.xlu0 %v1462, 64
  %v1488 = vpop.permute.xlu0 %1487
  %v1490 = vmul.f32 %v1422, %v1488
  %1492 = vrot.lane.b32.xlu0 %v1490, 64
  %v1493 = vpop.permute.xlu0 %1492
  %v1495 = vsel %vm179, %v1493, 0.0
  %1496 = vadd.xlane.f32.xlu0 %v1495
  %v1497 = vpop.xlane.xlu0 %1496
  %v1498 = vadd.f32 %v1497, %v384
  %v1499 = vtanh.pop %v1498
  %1500 = vrot.lane.b32.xlu0 %v1462, 96
  %v1501 = vpop.permute.xlu0 %1500
  %v1503 = vmul.f32 %v1422, %v1501
  %1505 = vrot.lane.b32.xlu0 %v1503, 32
  %v1506 = vpop.permute.xlu0 %1505
  %v1508 = vsel %vm179, %v1506, 0.0
  %1509 = vadd.xlane.f32.xlu0 %v1508
  %v1510 = vpop.xlane.xlu0 %1509
  %v1511 = vadd.f32 %v1510, %v403
  %v1512 = vtanh.pop %v1511
  %v1513 = vsel %vm179, %v1472, -inf
  %1514 = vmax.xlane.f32.xlu0 %v1513
  %v1515 = vpop.xlane.xlu0 %1514
  %v1516 = vsel %vm179, %v1486, -inf
  %1517 = vmax.xlane.f32.xlu0 %v1516
  %v1518 = vpop.xlane.xlu0 %1517
  %v1519 = vmax.f32 %v1515, %v1518
  %v1520 = vsel %vm179, %v1499, -inf
  %1521 = vmax.xlane.f32.xlu0 %v1520
  %v1522 = vpop.xlane.xlu0 %1521
  %v1523 = vsel %vm179, %v1512, -inf
  %1524 = vmax.xlane.f32.xlu0 %v1523
  %v1525 = vpop.xlane.xlu0 %1524
  %v1526 = vmax.f32 %v1522, %v1525
  %v1527 = vmax.f32 %v1519, %v1526
  %v1528 = vsub.f32 %v1472, %v1527
  %v1529 = vmul.f32 %v1528, 1.442695
  %v1530 = vpow.pop %v1529
  %v1531 = vsub.f32 %v1486, %v1527
  %v1532 = vmul.f32 %v1531, 1.442695
  %v1533 = vpow.pop %v1532
  %v1534 = vsub.f32 %v1499, %v1527
  %v1535 = vmul.f32 %v1534, 1.442695
  %v1536 = vpow.pop %v1535
  %v1537 = vsub.f32 %v1512, %v1527
  %v1538 = vmul.f32 %v1537, 1.442695
  %v1539 = vpow.pop %v1538
  %v1540 = vsel %vm179, %v1530, 0.0
  %1541 = vadd.xlane.f32.xlu0 %v1540
  %v1542 = vpop.xlane.xlu0 %1541
  %v1543 = vsel %vm179, %v1533, 0.0
  %1544 = vadd.xlane.f32.xlu0 %v1543
  %v1545 = vpop.xlane.xlu0 %1544
  %v1546 = vadd.f32 %v1542, %v1545
  %v1547 = vsel %vm179, %v1536, 0.0
  %1548 = vadd.xlane.f32.xlu0 %v1547
  %v1549 = vpop.xlane.xlu0 %1548
  %v1550 = vadd.f32 %v1546, %v1549
  %v1551 = vsel %vm179, %v1539, 0.0
  %1552 = vadd.xlane.f32.xlu0 %v1551
  %v1553 = vpop.xlane.xlu0 %1552
  %v1554 = vadd.f32 %v1550, %v1553
  %v1555 = vrcp.pop %v1554
  %v1556 = vmul.f32 %v1530, %v1555
  %1558 = vset.pattern.permute.xlu0 0
  %1559 = vperm.xlu0 %1558, %v1556
  %v1560 = vpop.permute.xlu0 %1559
  %v1562 = vmul.f32 %v1560, %v1422
  %1563 = vset.pattern.permute.xlu0 1
  %1564 = vperm.xlu0 %1563, %v1556
  %v1565 = vpop.permute.xlu0 %1564
  %v1567 = vmul.f32 %v1565, %v1422
  %1569 = vrot.lane.b32.xlu0 %v1567, 96
  %v1570 = vpop.permute.xlu0 %1569
  %v1572 = vadd.f32 %v1562, %v1570
  %1573 = vset.pattern.permute.xlu0 2
  %1574 = vperm.xlu0 %1573, %v1556
  %v1575 = vpop.permute.xlu0 %1574
  %v1577 = vmul.f32 %v1575, %v1422
  %1579 = vrot.lane.b32.xlu0 %v1577, 64
  %v1580 = vpop.permute.xlu0 %1579
  %v1582 = vadd.f32 %v1572, %v1580
  %1583 = vset.pattern.permute.xlu0 3
  %1584 = vperm.xlu0 %1583, %v1556
  %v1585 = vpop.permute.xlu0 %1584
  %v1587 = vmul.f32 %v1585, %v1422
  %1589 = vrot.lane.b32.xlu0 %v1587, 32
  %v1590 = vpop.permute.xlu0 %1589
  %v1592 = vadd.f32 %v1582, %v1590
  %v1593 = vmul.f32 %v1225, %v1421
  %v1594 = vadd.f32 %v1593, %v1592
  %v1595 = vtanh.pop %v1594
  %1597 = vrot.lane.b32.xlu0 %v1421, 96
  %v1598 = vpop.permute.xlu0 %1597
  %v1600 = vmul.f32 %v1595, %v1598
  %s1601 = scalar_lea.vmem %s6, 24
  %1602 = vst.msk [vmem:[%s1601] sm:$0xff] %vm179, %v1600
  %s1603 = scalar_lea.vmem %s0, 32
  %v1604 = vld [vmem:[%s1603] sm:$0xff]
  %v1605 = vpack.c.bf16 %v1600, %v1600
  %v1606 = vpack.c.bf16 %v1604, %v1604
  %v1608 = vsel %vm94, %v1606, 0
  %1610 = vmatprep.subr.bf16.mxu0 %v67
  %1611 = vmatpush1.bf16.msra.mxu0 %v66
  %1612 = vmatprep.subr.bf16.mxu0 %v70
  %1613 = vmatpush1.bf16.msra.mxu0 %v69
  %1614 = vmatprep.subr.bf16.mxu0 %v73
  %1615 = vmatpush1.bf16.msra.mxu0 %v72
  %1616 = vmatprep.subr.bf16.mxu0 %v76
  %1617 = vmatpush1.bf16.msra.mxu0 %v75
  %1618 = vmatprep.subr.bf16.mxu0 0
  %1619 = vmatpush1.bf16.msra.mxu0 0
  %1620 = vmatprep.subr.bf16.mxu0 0
  %1621 = vmatpush1.bf16.msra.mxu0 0
  %1622 = vmatprep.subr.bf16.mxu0 0
  %1623 = vmatpush1.bf16.msra.mxu0 0
  %1624 = vmatprep.subr.bf16.mxu0 0
  %1625 = vmatpush1.bf16.msra.mxu0 0
  %1626 = vmatprep.subr.bf16.mxu0 0
  %1627 = vmatpush1.bf16.msra.mxu0 0
  %1628 = vmatprep.subr.bf16.mxu0 0
  %1629 = vmatpush1.bf16.msra.mxu0 0
  %1630 = vmatprep.subr.bf16.mxu0 0
  %1631 = vmatpush1.bf16.msra.mxu0 0
  %1632 = vmatprep.subr.bf16.mxu0 0
  %1633 = vmatpush1.bf16.msra.mxu0 0
  %1634 = vmatprep.subr.bf16.mxu0 0
  %1635 = vmatpush1.bf16.msra.mxu0 0
  %1636 = vmatprep.subr.bf16.mxu0 0
  %1637 = vmatpush1.bf16.msra.mxu0 0
  %1638 = vmatprep.subr.bf16.mxu0 0
  %1639 = vmatpush1.bf16.msra.mxu0 0
  %1640 = vmatprep.subr.bf16.mxu0 0
  %1641 = vmatpush1.bf16.msra.mxu0 0
  %1642 = vmatprep.mubr.bf16.mxu0 0
  %1643 = vmatmul.mubr.bf16.gmra.mrb[0].mxu0 %v1608
  %v1644 = vpop.f32.mrb[0].mxu0
  %v1645 = vadd.f32 0.0, %v1644
  %v1646 = vpop.f32.mrb[0].mxu0
  %v1647 = vadd.f32 0.0, %v1646
  %v1648 = vpop.f32.mrb[0].mxu0
  %v1649 = vpop.f32.mrb[0].mxu0
  %1650 = vdwg.mxu0
  %1651 = vmatprep.subr.bf16.mxu0 0
  %1652 = vmatpush1.bf16.msra.mxu0 %v68
  %1653 = vmatprep.subr.bf16.mxu0 0
  %1654 = vmatpush1.bf16.msra.mxu0 %v71
  %1655 = vmatprep.subr.bf16.mxu0 0
  %1656 = vmatpush1.bf16.msra.mxu0 %v74
  %1657 = vmatprep.subr.bf16.mxu0 0
  %1658 = vmatpush1.bf16.msra.mxu0 %v77
  %1659 = vmatprep.subr.bf16.mxu0 0
  %1660 = vmatpush1.bf16.msra.mxu0 0
  %1661 = vmatprep.subr.bf16.mxu0 0
  %1662 = vmatpush1.bf16.msra.mxu0 0
  %1663 = vmatprep.subr.bf16.mxu0 0
  %1664 = vmatpush1.bf16.msra.mxu0 0
  %1665 = vmatprep.subr.bf16.mxu0 0
  %1666 = vmatpush1.bf16.msra.mxu0 0
  %1667 = vmatprep.subr.bf16.mxu0 0
  %1668 = vmatpush1.bf16.msra.mxu0 0
  %1669 = vmatprep.subr.bf16.mxu0 0
  %1670 = vmatpush1.bf16.msra.mxu0 0
  %1671 = vmatprep.subr.bf16.mxu0 0
  %1672 = vmatpush1.bf16.msra.mxu0 0
  %1673 = vmatprep.subr.bf16.mxu0 0
  %1674 = vmatpush1.bf16.msra.mxu0 0
  %1675 = vmatprep.subr.bf16.mxu0 0
  %1676 = vmatpush1.bf16.msra.mxu0 0
  %1677 = vmatprep.subr.bf16.mxu0 0
  %1678 = vmatpush1.bf16.msra.mxu0 0
  %1679 = vmatprep.subr.bf16.mxu0 0
  %1680 = vmatpush1.bf16.msra.mxu0 0
  %1681 = vmatprep.subr.bf16.mxu0 0
  %1682 = vmatpush1.bf16.msra.mxu0 0
  %1683 = vmatprep.mubr.bf16.mxu0 0
  %1684 = vmatmul.mubr.bf16.gmra.mrb[0].mxu0 %v1608
  %v1685 = vpop.f32.mrb[0].mxu0
  %v1686 = vadd.f32 0.0, %v1685
  %v1687 = vpop.f32.mrb[0].mxu0
  %v1688 = vpop.f32.mrb[0].mxu0
  %v1689 = vpop.f32.mrb[0].mxu0
  %1690 = vdwg.mxu0
  %v1692 = vsel %vm179, %v1605, 0
  %1694 = vmatprep.subr.bf16.mxu0 %v37
  %1695 = vmatpush1.bf16.msra.mxu0 %v36
  %1696 = vmatprep.subr.bf16.mxu0 %v40
  %1697 = vmatpush1.bf16.msra.mxu0 %v39
  %1698 = vmatprep.subr.bf16.mxu0 0
  %1699 = vmatpush1.bf16.msra.mxu0 0
  %1700 = vmatprep.subr.bf16.mxu0 0
  %1701 = vmatpush1.bf16.msra.mxu0 0
  %1702 = vmatprep.subr.bf16.mxu0 0
  %1703 = vmatpush1.bf16.msra.mxu0 0
  %1704 = vmatprep.subr.bf16.mxu0 0
  %1705 = vmatpush1.bf16.msra.mxu0 0
  %1706 = vmatprep.subr.bf16.mxu0 0
  %1707 = vmatpush1.bf16.msra.mxu0 0
  %1708 = vmatprep.subr.bf16.mxu0 0
  %1709 = vmatpush1.bf16.msra.mxu0 0
  %1710 = vmatprep.subr.bf16.mxu0 0
  %1711 = vmatpush1.bf16.msra.mxu0 0
  %1712 = vmatprep.subr.bf16.mxu0 0
  %1713 = vmatpush1.bf16.msra.mxu0 0
  %1714 = vmatprep.subr.bf16.mxu0 0
  %1715 = vmatpush1.bf16.msra.mxu0 0
  %1716 = vmatprep.subr.bf16.mxu0 0
  %1717 = vmatpush1.bf16.msra.mxu0 0
  %1718 = vmatprep.subr.bf16.mxu0 0
  %1719 = vmatpush1.bf16.msra.mxu0 0
  %1720 = vmatprep.subr.bf16.mxu0 0
  %1721 = vmatpush1.bf16.msra.mxu0 0
  %1722 = vmatprep.subr.bf16.mxu0 0
  %1723 = vmatpush1.bf16.msra.mxu0 0
  %1724 = vmatprep.subr.bf16.mxu0 0
  %1725 = vmatpush1.bf16.msra.mxu0 0
  %1726 = vmatprep.mubr.bf16.mxu0 0
  %1727 = vmatmul.mubr.bf16.gmra.mrb[0].mxu0 %v1692
  %v1728 = vpop.f32.mrb[0].mxu0
  %v1729 = vadd.f32 %v1645, %v1728
  %v1730 = vpop.f32.mrb[0].mxu0
  %v1731 = vadd.f32 %v1647, %v1730
  %v1732 = vpop.f32.mrb[0].mxu0
  %v1733 = vpop.f32.mrb[0].mxu0
  %1734 = vdwg.mxu0
  %1735 = vmatprep.subr.bf16.mxu0 0
  %1736 = vmatpush1.bf16.msra.mxu0 %v38
  %1737 = vmatprep.subr.bf16.mxu0 0
  %1738 = vmatpush1.bf16.msra.mxu0 %v41
  %1739 = vmatprep.subr.bf16.mxu0 0
  %1740 = vmatpush1.bf16.msra.mxu0 0
  %1741 = vmatprep.subr.bf16.mxu0 0
  %1742 = vmatpush1.bf16.msra.mxu0 0
  %1743 = vmatprep.subr.bf16.mxu0 0
  %1744 = vmatpush1.bf16.msra.mxu0 0
  %1745 = vmatprep.subr.bf16.mxu0 0
  %1746 = vmatpush1.bf16.msra.mxu0 0
  %1747 = vmatprep.subr.bf16.mxu0 0
  %1748 = vmatpush1.bf16.msra.mxu0 0
  %1749 = vmatprep.subr.bf16.mxu0 0
  %1750 = vmatpush1.bf16.msra.mxu0 0
  %1751 = vmatprep.subr.bf16.mxu0 0
  %1752 = vmatpush1.bf16.msra.mxu0 0
  %1753 = vmatprep.subr.bf16.mxu0 0
  %1754 = vmatpush1.bf16.msra.mxu0 0
  %1755 = vmatprep.subr.bf16.mxu0 0
  %1756 = vmatpush1.bf16.msra.mxu0 0
  %1757 = vmatprep.subr.bf16.mxu0 0
  %1758 = vmatpush1.bf16.msra.mxu0 0
  %1759 = vmatprep.subr.bf16.mxu0 0
  %1760 = vmatpush1.bf16.msra.mxu0 0
  %1761 = vmatprep.subr.bf16.mxu0 0
  %1762 = vmatpush1.bf16.msra.mxu0 0
  %1763 = vmatprep.subr.bf16.mxu0 0
  %1764 = vmatpush1.bf16.msra.mxu0 0
  %1765 = vmatprep.subr.bf16.mxu0 0
  %1766 = vmatpush1.bf16.msra.mxu0 0
  %1767 = vmatprep.mubr.bf16.mxu0 0
  %1768 = vmatmul.mubr.bf16.gmra.mrb[0].mxu0 %v1692
  %v1769 = vpop.f32.mrb[0].mxu0
  %v1770 = vadd.f32 %v1686, %v1769
  %v1771 = vpop.f32.mrb[0].mxu0
  %v1772 = vpop.f32.mrb[0].mxu0
  %v1773 = vpop.f32.mrb[0].mxu0
  %1774 = vdwg.mxu0
  %v1775 = vadd.f32 %v1729, %v268
  %v1776 = vadd.f32 %v1731, %v272
  %v1777 = vadd.f32 %v1770, %v276
  %v1778 = vtanh.pop %v1775
  %v1779 = vxor.u32 %v1776, 2147483648
  %v1780 = vxor.u32 %v1777, 2147483648
  %v1781 = vmul.f32 %v1779, 1.442695
  %v1782 = vpow.pop %v1781
  %v1783 = vmul.f32 %v1780, 1.442695
  %v1784 = vpow.pop %v1783
  %v1785 = vadd.f32 %v1782, 1.0
  %v1786 = vadd.f32 %v1784, 1.0
  %v1787 = vrcp.pop %v1785
  %v1788 = vmul.f32 1.0, %v1787
  %v1789 = vrcp.pop %v1786
  %v1790 = vmul.f32 1.0, %v1789
  %v1791 = vmul.f32 %v1778, %v1788
  %v1792 = vpack.c.bf16 %v1594, %v1594
  %v1794 = vsel %vm179, %v1792, 0
  %1796 = vmatprep.subr.bf16.mxu0 0
  %1797 = vmatpush1.bf16.msra.mxu0 %v82
  %1798 = vmatprep.subr.bf16.mxu0 0
  %1799 = vmatpush1.bf16.msra.mxu0 %v83
  %1800 = vmatprep.subr.bf16.mxu0 0
  %1801 = vmatpush1.bf16.msra.mxu0 0
  %1802 = vmatprep.subr.bf16.mxu0 0
  %1803 = vmatpush1.bf16.msra.mxu0 0
  %1804 = vmatprep.subr.bf16.mxu0 0
  %1805 = vmatpush1.bf16.msra.mxu0 0
  %1806 = vmatprep.subr.bf16.mxu0 0
  %1807 = vmatpush1.bf16.msra.mxu0 0
  %1808 = vmatprep.subr.bf16.mxu0 0
  %1809 = vmatpush1.bf16.msra.mxu0 0
  %1810 = vmatprep.subr.bf16.mxu0 0
  %1811 = vmatpush1.bf16.msra.mxu0 0
  %1812 = vmatprep.subr.bf16.mxu0 0
  %1813 = vmatpush1.bf16.msra.mxu0 0
  %1814 = vmatprep.subr.bf16.mxu0 0
  %1815 = vmatpush1.bf16.msra.mxu0 0
  %1816 = vmatprep.subr.bf16.mxu0 0
  %1817 = vmatpush1.bf16.msra.mxu0 0
  %1818 = vmatprep.subr.bf16.mxu0 0
  %1819 = vmatpush1.bf16.msra.mxu0 0
  %1820 = vmatprep.subr.bf16.mxu0 0
  %1821 = vmatpush1.bf16.msra.mxu0 0
  %1822 = vmatprep.subr.bf16.mxu0 0
  %1823 = vmatpush1.bf16.msra.mxu0 0
  %1824 = vmatprep.subr.bf16.mxu0 0
  %1825 = vmatpush1.bf16.msra.mxu0 0
  %1826 = vmatprep.subr.bf16.mxu0 0
  %1827 = vmatpush1.bf16.msra.mxu0 0
  %1828 = vmatprep.mubr.bf16.mxu0 0
  %1829 = vmatmul.mubr.bf16.gmra.mrb[0].mxu0 %v1794
  %v1830 = vpop.f32.mrb[0].mxu0
  %v1831 = vadd.f32 0.0, %v1830
  %v1832 = vpop.f32.mrb[0].mxu0
  %v1833 = vpop.f32.mrb[0].mxu0
  %v1834 = vpop.f32.mrb[0].mxu0
  %1835 = vdwg.mxu0
  %v1836 = vmul.f32 %v1791, %v1831
  %v1837 = vsel %vm179, %v1836, 0.0
  %1838 = vadd.xlane.f32.xlu0 %v1837
  %v1839 = vpop.xlane.xlu0 %1838
  %v1840 = vadd.f32 %v1839, %v345
  %v1841 = vtanh.pop %v1840
  %1843 = vrot.lane.b32.xlu0 %v1831, 32
  %v1844 = vpop.permute.xlu0 %1843
  %v1846 = vmul.f32 %v1791, %v1844
  %1848 = vrot.lane.b32.xlu0 %v1846, 96
  %v1849 = vpop.permute.xlu0 %1848
  %v1851 = vsel %vm179, %v1849, 0.0
  %1852 = vadd.xlane.f32.xlu0 %v1851
  %v1853 = vpop.xlane.xlu0 %1852
  %v1854 = vadd.f32 %v1853, %v365
  %v1855 = vtanh.pop %v1854
  %1856 = vrot.lane.b32.xlu0 %v1831, 64
  %v1857 = vpop.permute.xlu0 %1856
  %v1859 = vmul.f32 %v1791, %v1857
  %1861 = vrot.lane.b32.xlu0 %v1859, 64
  %v1862 = vpop.permute.xlu0 %1861
  %v1864 = vsel %vm179, %v1862, 0.0
  %1865 = vadd.xlane.f32.xlu0 %v1864
  %v1866 = vpop.xlane.xlu0 %1865
  %v1867 = vadd.f32 %v1866, %v384
  %v1868 = vtanh.pop %v1867
  %1869 = vrot.lane.b32.xlu0 %v1831, 96
  %v1870 = vpop.permute.xlu0 %1869
  %v1872 = vmul.f32 %v1791, %v1870
  %1874 = vrot.lane.b32.xlu0 %v1872, 32
  %v1875 = vpop.permute.xlu0 %1874
  %v1877 = vsel %vm179, %v1875, 0.0
  %1878 = vadd.xlane.f32.xlu0 %v1877
  %v1879 = vpop.xlane.xlu0 %1878
  %v1880 = vadd.f32 %v1879, %v403
  %v1881 = vtanh.pop %v1880
  %v1882 = vsel %vm179, %v1841, -inf
  %1883 = vmax.xlane.f32.xlu0 %v1882
  %v1884 = vpop.xlane.xlu0 %1883
  %v1885 = vsel %vm179, %v1855, -inf
  %1886 = vmax.xlane.f32.xlu0 %v1885
  %v1887 = vpop.xlane.xlu0 %1886
  %v1888 = vmax.f32 %v1884, %v1887
  %v1889 = vsel %vm179, %v1868, -inf
  %1890 = vmax.xlane.f32.xlu0 %v1889
  %v1891 = vpop.xlane.xlu0 %1890
  %v1892 = vsel %vm179, %v1881, -inf
  %1893 = vmax.xlane.f32.xlu0 %v1892
  %v1894 = vpop.xlane.xlu0 %1893
  %v1895 = vmax.f32 %v1891, %v1894
  %v1896 = vmax.f32 %v1888, %v1895
  %v1897 = vsub.f32 %v1841, %v1896
  %v1898 = vmul.f32 %v1897, 1.442695
  %v1899 = vpow.pop %v1898
  %v1900 = vsub.f32 %v1855, %v1896
  %v1901 = vmul.f32 %v1900, 1.442695
  %v1902 = vpow.pop %v1901
  %v1903 = vsub.f32 %v1868, %v1896
  %v1904 = vmul.f32 %v1903, 1.442695
  %v1905 = vpow.pop %v1904
  %v1906 = vsub.f32 %v1881, %v1896
  %v1907 = vmul.f32 %v1906, 1.442695
  %v1908 = vpow.pop %v1907
  %v1909 = vsel %vm179, %v1899, 0.0
  %1910 = vadd.xlane.f32.xlu0 %v1909
  %v1911 = vpop.xlane.xlu0 %1910
  %v1912 = vsel %vm179, %v1902, 0.0
  %1913 = vadd.xlane.f32.xlu0 %v1912
  %v1914 = vpop.xlane.xlu0 %1913
  %v1915 = vadd.f32 %v1911, %v1914
  %v1916 = vsel %vm179, %v1905, 0.0
  %1917 = vadd.xlane.f32.xlu0 %v1916
  %v1918 = vpop.xlane.xlu0 %1917
  %v1919 = vadd.f32 %v1915, %v1918
  %v1920 = vsel %vm179, %v1908, 0.0
  %1921 = vadd.xlane.f32.xlu0 %v1920
  %v1922 = vpop.xlane.xlu0 %1921
  %v1923 = vadd.f32 %v1919, %v1922
  %v1924 = vrcp.pop %v1923
  %v1925 = vmul.f32 %v1899, %v1924
  %1927 = vset.pattern.permute.xlu0 0
  %1928 = vperm.xlu0 %1927, %v1925
  %v1929 = vpop.permute.xlu0 %1928
  %v1931 = vmul.f32 %v1929, %v1791
  %1932 = vset.pattern.permute.xlu0 1
  %1933 = vperm.xlu0 %1932, %v1925
  %v1934 = vpop.permute.xlu0 %1933
  %v1936 = vmul.f32 %v1934, %v1791
  %1938 = vrot.lane.b32.xlu0 %v1936, 96
  %v1939 = vpop.permute.xlu0 %1938
  %v1941 = vadd.f32 %v1931, %v1939
  %1942 = vset.pattern.permute.xlu0 2
  %1943 = vperm.xlu0 %1942, %v1925
  %v1944 = vpop.permute.xlu0 %1943
  %v1946 = vmul.f32 %v1944, %v1791
  %1948 = vrot.lane.b32.xlu0 %v1946, 64
  %v1949 = vpop.permute.xlu0 %1948
  %v1951 = vadd.f32 %v1941, %v1949
  %1952 = vset.pattern.permute.xlu0 3
  %1953 = vperm.xlu0 %1952, %v1925
  %v1954 = vpop.permute.xlu0 %1953
  %v1956 = vmul.f32 %v1954, %v1791
  %1958 = vrot.lane.b32.xlu0 %v1956, 32
  %v1959 = vpop.permute.xlu0 %1958
  %v1961 = vadd.f32 %v1951, %v1959
  %v1962 = vmul.f32 %v1594, %v1790
  %v1963 = vadd.f32 %v1962, %v1961
  %v1964 = vtanh.pop %v1963
  %1966 = vrot.lane.b32.xlu0 %v1790, 96
  %v1967 = vpop.permute.xlu0 %1966
  %v1969 = vmul.f32 %v1964, %v1967
  %s1970 = scalar_lea.vmem %s6, 32
  %1971 = vst.msk [vmem:[%s1970] sm:$0xff] %vm179, %v1969
  %s1972 = scalar_lea.vmem %s0, 40
  %v1973 = vld [vmem:[%s1972] sm:$0xff]
  %v1974 = vpack.c.bf16 %v1969, %v1969
  %v1975 = vpack.c.bf16 %v1973, %v1973
  %v1977 = vsel %vm94, %v1975, 0
  %1979 = vmatprep.subr.bf16.mxu0 %v67
  %1980 = vmatpush1.bf16.msra.mxu0 %v66
  %1981 = vmatprep.subr.bf16.mxu0 %v70
  %1982 = vmatpush1.bf16.msra.mxu0 %v69
  %1983 = vmatprep.subr.bf16.mxu0 %v73
  %1984 = vmatpush1.bf16.msra.mxu0 %v72
  %1985 = vmatprep.subr.bf16.mxu0 %v76
  %1986 = vmatpush1.bf16.msra.mxu0 %v75
  %1987 = vmatprep.subr.bf16.mxu0 0
  %1988 = vmatpush1.bf16.msra.mxu0 0
  %1989 = vmatprep.subr.bf16.mxu0 0
  %1990 = vmatpush1.bf16.msra.mxu0 0
  %1991 = vmatprep.subr.bf16.mxu0 0
  %1992 = vmatpush1.bf16.msra.mxu0 0
  %1993 = vmatprep.subr.bf16.mxu0 0
  %1994 = vmatpush1.bf16.msra.mxu0 0
  %1995 = vmatprep.subr.bf16.mxu0 0
  %1996 = vmatpush1.bf16.msra.mxu0 0
  %1997 = vmatprep.subr.bf16.mxu0 0
  %1998 = vmatpush1.bf16.msra.mxu0 0
  %1999 = vmatprep.subr.bf16.mxu0 0
  %2000 = vmatpush1.bf16.msra.mxu0 0
  %2001 = vmatprep.subr.bf16.mxu0 0
  %2002 = vmatpush1.bf16.msra.mxu0 0
  %2003 = vmatprep.subr.bf16.mxu0 0
  %2004 = vmatpush1.bf16.msra.mxu0 0
  %2005 = vmatprep.subr.bf16.mxu0 0
  %2006 = vmatpush1.bf16.msra.mxu0 0
  %2007 = vmatprep.subr.bf16.mxu0 0
  %2008 = vmatpush1.bf16.msra.mxu0 0
  %2009 = vmatprep.subr.bf16.mxu0 0
  %2010 = vmatpush1.bf16.msra.mxu0 0
  %2011 = vmatprep.mubr.bf16.mxu0 0
  %2012 = vmatmul.mubr.bf16.gmra.mrb[0].mxu0 %v1977
  %v2013 = vpop.f32.mrb[0].mxu0
  %v2014 = vadd.f32 0.0, %v2013
  %v2015 = vpop.f32.mrb[0].mxu0
  %v2016 = vadd.f32 0.0, %v2015
  %v2017 = vpop.f32.mrb[0].mxu0
  %v2018 = vpop.f32.mrb[0].mxu0
  %2019 = vdwg.mxu0
  %2020 = vmatprep.subr.bf16.mxu0 0
  %2021 = vmatpush1.bf16.msra.mxu0 %v68
  %2022 = vmatprep.subr.bf16.mxu0 0
  %2023 = vmatpush1.bf16.msra.mxu0 %v71
  %2024 = vmatprep.subr.bf16.mxu0 0
  %2025 = vmatpush1.bf16.msra.mxu0 %v74
  %2026 = vmatprep.subr.bf16.mxu0 0
  %2027 = vmatpush1.bf16.msra.mxu0 %v77
  %2028 = vmatprep.subr.bf16.mxu0 0
  %2029 = vmatpush1.bf16.msra.mxu0 0
  %2030 = vmatprep.subr.bf16.mxu0 0
  %2031 = vmatpush1.bf16.msra.mxu0 0
  %2032 = vmatprep.subr.bf16.mxu0 0
  %2033 = vmatpush1.bf16.msra.mxu0 0
  %2034 = vmatprep.subr.bf16.mxu0 0
  %2035 = vmatpush1.bf16.msra.mxu0 0
  %2036 = vmatprep.subr.bf16.mxu0 0
  %2037 = vmatpush1.bf16.msra.mxu0 0
  %2038 = vmatprep.subr.bf16.mxu0 0
  %2039 = vmatpush1.bf16.msra.mxu0 0
  %2040 = vmatprep.subr.bf16.mxu0 0
  %2041 = vmatpush1.bf16.msra.mxu0 0
  %2042 = vmatprep.subr.bf16.mxu0 0
  %2043 = vmatpush1.bf16.msra.mxu0 0
  %2044 = vmatprep.subr.bf16.mxu0 0
  %2045 = vmatpush1.bf16.msra.mxu0 0
  %2046 = vmatprep.subr.bf16.mxu0 0
  %2047 = vmatpush1.bf16.msra.mxu0 0
  %2048 = vmatprep.subr.bf16.mxu0 0
  %2049 = vmatpush1.bf16.msra.mxu0 0
  %2050 = vmatprep.subr.bf16.mxu0 0
  %2051 = vmatpush1.bf16.msra.mxu0 0
  %2052 = vmatprep.mubr.bf16.mxu0 0
  %2053 = vmatmul.mubr.bf16.gmra.mrb[0].mxu0 %v1977
  %v2054 = vpop.f32.mrb[0].mxu0
  %v2055 = vadd.f32 0.0, %v2054
  %v2056 = vpop.f32.mrb[0].mxu0
  %v2057 = vpop.f32.mrb[0].mxu0
  %v2058 = vpop.f32.mrb[0].mxu0
  %2059 = vdwg.mxu0
  %v2061 = vsel %vm179, %v1974, 0
  %2063 = vmatprep.subr.bf16.mxu0 %v37
  %2064 = vmatpush1.bf16.msra.mxu0 %v36
  %2065 = vmatprep.subr.bf16.mxu0 %v40
  %2066 = vmatpush1.bf16.msra.mxu0 %v39
  %2067 = vmatprep.subr.bf16.mxu0 0
  %2068 = vmatpush1.bf16.msra.mxu0 0
  %2069 = vmatprep.subr.bf16.mxu0 0
  %2070 = vmatpush1.bf16.msra.mxu0 0
  %2071 = vmatprep.subr.bf16.mxu0 0
  %2072 = vmatpush1.bf16.msra.mxu0 0
  %2073 = vmatprep.subr.bf16.mxu0 0
  %2074 = vmatpush1.bf16.msra.mxu0 0
  %2075 = vmatprep.subr.bf16.mxu0 0
  %2076 = vmatpush1.bf16.msra.mxu0 0
  %2077 = vmatprep.subr.bf16.mxu0 0
  %2078 = vmatpush1.bf16.msra.mxu0 0
  %2079 = vmatprep.subr.bf16.mxu0 0
  %2080 = vmatpush1.bf16.msra.mxu0 0
  %2081 = vmatprep.subr.bf16.mxu0 0
  %2082 = vmatpush1.bf16.msra.mxu0 0
  %2083 = vmatprep.subr.bf16.mxu0 0
  %2084 = vmatpush1.bf16.msra.mxu0 0
  %2085 = vmatprep.subr.bf16.mxu0 0
  %2086 = vmatpush1.bf16.msra.mxu0 0
  %2087 = vmatprep.subr.bf16.mxu0 0
  %2088 = vmatpush1.bf16.msra.mxu0 0
  %2089 = vmatprep.subr.bf16.mxu0 0
  %2090 = vmatpush1.bf16.msra.mxu0 0
  %2091 = vmatprep.subr.bf16.mxu0 0
  %2092 = vmatpush1.bf16.msra.mxu0 0
  %2093 = vmatprep.subr.bf16.mxu0 0
  %2094 = vmatpush1.bf16.msra.mxu0 0
  %2095 = vmatprep.mubr.bf16.mxu0 0
  %2096 = vmatmul.mubr.bf16.gmra.mrb[0].mxu0 %v2061
  %v2097 = vpop.f32.mrb[0].mxu0
  %v2098 = vadd.f32 %v2014, %v2097
  %v2099 = vpop.f32.mrb[0].mxu0
  %v2100 = vadd.f32 %v2016, %v2099
  %v2101 = vpop.f32.mrb[0].mxu0
  %v2102 = vpop.f32.mrb[0].mxu0
  %2103 = vdwg.mxu0
  %2104 = vmatprep.subr.bf16.mxu0 0
  %2105 = vmatpush1.bf16.msra.mxu0 %v38
  %2106 = vmatprep.subr.bf16.mxu0 0
  %2107 = vmatpush1.bf16.msra.mxu0 %v41
  %2108 = vmatprep.subr.bf16.mxu0 0
  %2109 = vmatpush1.bf16.msra.mxu0 0
  %2110 = vmatprep.subr.bf16.mxu0 0
  %2111 = vmatpush1.bf16.msra.mxu0 0
  %2112 = vmatprep.subr.bf16.mxu0 0
  %2113 = vmatpush1.bf16.msra.mxu0 0
  %2114 = vmatprep.subr.bf16.mxu0 0
  %2115 = vmatpush1.bf16.msra.mxu0 0
  %2116 = vmatprep.subr.bf16.mxu0 0
  %2117 = vmatpush1.bf16.msra.mxu0 0
  %2118 = vmatprep.subr.bf16.mxu0 0
  %2119 = vmatpush1.bf16.msra.mxu0 0
  %2120 = vmatprep.subr.bf16.mxu0 0
  %2121 = vmatpush1.bf16.msra.mxu0 0
  %2122 = vmatprep.subr.bf16.mxu0 0
  %2123 = vmatpush1.bf16.msra.mxu0 0
  %2124 = vmatprep.subr.bf16.mxu0 0
  %2125 = vmatpush1.bf16.msra.mxu0 0
  %2126 = vmatprep.subr.bf16.mxu0 0
  %2127 = vmatpush1.bf16.msra.mxu0 0
  %2128 = vmatprep.subr.bf16.mxu0 0
  %2129 = vmatpush1.bf16.msra.mxu0 0
  %2130 = vmatprep.subr.bf16.mxu0 0
  %2131 = vmatpush1.bf16.msra.mxu0 0
  %2132 = vmatprep.subr.bf16.mxu0 0
  %2133 = vmatpush1.bf16.msra.mxu0 0
  %2134 = vmatprep.subr.bf16.mxu0 0
  %2135 = vmatpush1.bf16.msra.mxu0 0
  %2136 = vmatprep.mubr.bf16.mxu0 0
  %2137 = vmatmul.mubr.bf16.gmra.mrb[0].mxu0 %v2061
  %v2138 = vpop.f32.mrb[0].mxu0
  %v2139 = vadd.f32 %v2055, %v2138
  %v2140 = vpop.f32.mrb[0].mxu0
  %v2141 = vpop.f32.mrb[0].mxu0
  %v2142 = vpop.f32.mrb[0].mxu0
  %2143 = vdwg.mxu0
  %v2144 = vadd.f32 %v2098, %v268
  %v2145 = vadd.f32 %v2100, %v272
  %v2146 = vadd.f32 %v2139, %v276
  %v2147 = vtanh.pop %v2144
  %v2148 = vxor.u32 %v2145, 2147483648
  %v2149 = vxor.u32 %v2146, 2147483648
  %v2150 = vmul.f32 %v2148, 1.442695
  %v2151 = vpow.pop %v2150
  %v2152 = vmul.f32 %v2149, 1.442695
  %v2153 = vpow.pop %v2152
  %v2154 = vadd.f32 %v2151, 1.0
  %v2155 = vadd.f32 %v2153, 1.0
  %v2156 = vrcp.pop %v2154
  %v2157 = vmul.f32 1.0, %v2156
  %v2158 = vrcp.pop %v2155
  %v2159 = vmul.f32 1.0, %v2158
  %v2160 = vmul.f32 %v2147, %v2157
  %v2161 = vpack.c.bf16 %v1963, %v1963
  %v2163 = vsel %vm179, %v2161, 0
  %2165 = vmatprep.subr.bf16.mxu0 0
  %2166 = vmatpush1.bf16.msra.mxu0 %v82
  %2167 = vmatprep.subr.bf16.mxu0 0
  %2168 = vmatpush1.bf16.msra.mxu0 %v83
  %2169 = vmatprep.subr.bf16.mxu0 0
  %2170 = vmatpush1.bf16.msra.mxu0 0
  %2171 = vmatprep.subr.bf16.mxu0 0
  %2172 = vmatpush1.bf16.msra.mxu0 0
  %2173 = vmatprep.subr.bf16.mxu0 0
  %2174 = vmatpush1.bf16.msra.mxu0 0
  %2175 = vmatprep.subr.bf16.mxu0 0
  %2176 = vmatpush1.bf16.msra.mxu0 0
  %2177 = vmatprep.subr.bf16.mxu0 0
  %2178 = vmatpush1.bf16.msra.mxu0 0
  %2179 = vmatprep.subr.bf16.mxu0 0
  %2180 = vmatpush1.bf16.msra.mxu0 0
  %2181 = vmatprep.subr.bf16.mxu0 0
  %2182 = vmatpush1.bf16.msra.mxu0 0
  %2183 = vmatprep.subr.bf16.mxu0 0
  %2184 = vmatpush1.bf16.msra.mxu0 0
  %2185 = vmatprep.subr.bf16.mxu0 0
  %2186 = vmatpush1.bf16.msra.mxu0 0
  %2187 = vmatprep.subr.bf16.mxu0 0
  %2188 = vmatpush1.bf16.msra.mxu0 0
  %2189 = vmatprep.subr.bf16.mxu0 0
  %2190 = vmatpush1.bf16.msra.mxu0 0
  %2191 = vmatprep.subr.bf16.mxu0 0
  %2192 = vmatpush1.bf16.msra.mxu0 0
  %2193 = vmatprep.subr.bf16.mxu0 0
  %2194 = vmatpush1.bf16.msra.mxu0 0
  %2195 = vmatprep.subr.bf16.mxu0 0
  %2196 = vmatpush1.bf16.msra.mxu0 0
  %2197 = vmatprep.mubr.bf16.mxu0 0
  %2198 = vmatmul.mubr.bf16.gmra.mrb[0].mxu0 %v2163
  %v2199 = vpop.f32.mrb[0].mxu0
  %v2200 = vadd.f32 0.0, %v2199
  %v2201 = vpop.f32.mrb[0].mxu0
  %v2202 = vpop.f32.mrb[0].mxu0
  %v2203 = vpop.f32.mrb[0].mxu0
  %2204 = vdwg.mxu0
  %v2205 = vmul.f32 %v2160, %v2200
  %v2206 = vsel %vm179, %v2205, 0.0
  %2207 = vadd.xlane.f32.xlu0 %v2206
  %v2208 = vpop.xlane.xlu0 %2207
  %v2209 = vadd.f32 %v2208, %v345
  %v2210 = vtanh.pop %v2209
  %2212 = vrot.lane.b32.xlu0 %v2200, 32
  %v2213 = vpop.permute.xlu0 %2212
  %v2215 = vmul.f32 %v2160, %v2213
  %2217 = vrot.lane.b32.xlu0 %v2215, 96
  %v2218 = vpop.permute.xlu0 %2217
  %v2220 = vsel %vm179, %v2218, 0.0
  %2221 = vadd.xlane.f32.xlu0 %v2220
  %v2222 = vpop.xlane.xlu0 %2221
  %v2223 = vadd.f32 %v2222, %v365
  %v2224 = vtanh.pop %v2223
  %2225 = vrot.lane.b32.xlu0 %v2200, 64
  %v2226 = vpop.permute.xlu0 %2225
  %v2228 = vmul.f32 %v2160, %v2226
  %2230 = vrot.lane.b32.xlu0 %v2228, 64
  %v2231 = vpop.permute.xlu0 %2230
  %v2233 = vsel %vm179, %v2231, 0.0
  %2234 = vadd.xlane.f32.xlu0 %v2233
  %v2235 = vpop.xlane.xlu0 %2234
  %v2236 = vadd.f32 %v2235, %v384
  %v2237 = vtanh.pop %v2236
  %2238 = vrot.lane.b32.xlu0 %v2200, 96
  %v2239 = vpop.permute.xlu0 %2238
  %v2241 = vmul.f32 %v2160, %v2239
  %2243 = vrot.lane.b32.xlu0 %v2241, 32
  %v2244 = vpop.permute.xlu0 %2243
  %v2246 = vsel %vm179, %v2244, 0.0
  %2247 = vadd.xlane.f32.xlu0 %v2246
  %v2248 = vpop.xlane.xlu0 %2247
  %v2249 = vadd.f32 %v2248, %v403
  %v2250 = vtanh.pop %v2249
  %v2251 = vsel %vm179, %v2210, -inf
  %2252 = vmax.xlane.f32.xlu0 %v2251
  %v2253 = vpop.xlane.xlu0 %2252
  %v2254 = vsel %vm179, %v2224, -inf
  %2255 = vmax.xlane.f32.xlu0 %v2254
  %v2256 = vpop.xlane.xlu0 %2255
  %v2257 = vmax.f32 %v2253, %v2256
  %v2258 = vsel %vm179, %v2237, -inf
  %2259 = vmax.xlane.f32.xlu0 %v2258
  %v2260 = vpop.xlane.xlu0 %2259
  %v2261 = vsel %vm179, %v2250, -inf
  %2262 = vmax.xlane.f32.xlu0 %v2261
  %v2263 = vpop.xlane.xlu0 %2262
  %v2264 = vmax.f32 %v2260, %v2263
  %v2265 = vmax.f32 %v2257, %v2264
  %v2266 = vsub.f32 %v2210, %v2265
  %v2267 = vmul.f32 %v2266, 1.442695
  %v2268 = vpow.pop %v2267
  %v2269 = vsub.f32 %v2224, %v2265
  %v2270 = vmul.f32 %v2269, 1.442695
  %v2271 = vpow.pop %v2270
  %v2272 = vsub.f32 %v2237, %v2265
  %v2273 = vmul.f32 %v2272, 1.442695
  %v2274 = vpow.pop %v2273
  %v2275 = vsub.f32 %v2250, %v2265
  %v2276 = vmul.f32 %v2275, 1.442695
  %v2277 = vpow.pop %v2276
  %v2278 = vsel %vm179, %v2268, 0.0
  %2279 = vadd.xlane.f32.xlu0 %v2278
  %v2280 = vpop.xlane.xlu0 %2279
  %v2281 = vsel %vm179, %v2271, 0.0
  %2282 = vadd.xlane.f32.xlu0 %v2281
  %v2283 = vpop.xlane.xlu0 %2282
  %v2284 = vadd.f32 %v2280, %v2283
  %v2285 = vsel %vm179, %v2274, 0.0
  %2286 = vadd.xlane.f32.xlu0 %v2285
  %v2287 = vpop.xlane.xlu0 %2286
  %v2288 = vadd.f32 %v2284, %v2287
  %v2289 = vsel %vm179, %v2277, 0.0
  %2290 = vadd.xlane.f32.xlu0 %v2289
  %v2291 = vpop.xlane.xlu0 %2290
  %v2292 = vadd.f32 %v2288, %v2291
  %v2293 = vrcp.pop %v2292
  %v2294 = vmul.f32 %v2268, %v2293
  %2296 = vset.pattern.permute.xlu0 0
  %2297 = vperm.xlu0 %2296, %v2294
  %v2298 = vpop.permute.xlu0 %2297
  %v2300 = vmul.f32 %v2298, %v2160
  %2301 = vset.pattern.permute.xlu0 1
  %2302 = vperm.xlu0 %2301, %v2294
  %v2303 = vpop.permute.xlu0 %2302
  %v2305 = vmul.f32 %v2303, %v2160
  %2307 = vrot.lane.b32.xlu0 %v2305, 96
  %v2308 = vpop.permute.xlu0 %2307
  %v2310 = vadd.f32 %v2300, %v2308
  %2311 = vset.pattern.permute.xlu0 2
  %2312 = vperm.xlu0 %2311, %v2294
  %v2313 = vpop.permute.xlu0 %2312
  %v2315 = vmul.f32 %v2313, %v2160
  %2317 = vrot.lane.b32.xlu0 %v2315, 64
  %v2318 = vpop.permute.xlu0 %2317
  %v2320 = vadd.f32 %v2310, %v2318
  %2321 = vset.pattern.permute.xlu0 3
  %2322 = vperm.xlu0 %2321, %v2294
  %v2323 = vpop.permute.xlu0 %2322
  %v2325 = vmul.f32 %v2323, %v2160
  %2327 = vrot.lane.b32.xlu0 %v2325, 32
  %v2328 = vpop.permute.xlu0 %2327
  %v2330 = vadd.f32 %v2320, %v2328
  %v2331 = vmul.f32 %v1963, %v2159
  %v2332 = vadd.f32 %v2331, %v2330
  %v2333 = vtanh.pop %v2332
  %2335 = vrot.lane.b32.xlu0 %v2159, 96
  %v2336 = vpop.permute.xlu0 %2335
  %v2338 = vmul.f32 %v2333, %v2336
  %s2339 = scalar_lea.vmem %s6, 40
  %2340 = vst.msk [vmem:[%s2339] sm:$0xff] %vm179, %v2338
  %s2341 = scalar_lea.vmem %s0, 48
  %v2342 = vld [vmem:[%s2341] sm:$0xff]
  %v2343 = vpack.c.bf16 %v2338, %v2338
  %v2344 = vpack.c.bf16 %v2342, %v2342
  %v2346 = vsel %vm94, %v2344, 0
  %2348 = vmatprep.subr.bf16.mxu0 %v67
  %2349 = vmatpush1.bf16.msra.mxu0 %v66
  %2350 = vmatprep.subr.bf16.mxu0 %v70
  %2351 = vmatpush1.bf16.msra.mxu0 %v69
  %2352 = vmatprep.subr.bf16.mxu0 %v73
  %2353 = vmatpush1.bf16.msra.mxu0 %v72
  %2354 = vmatprep.subr.bf16.mxu0 %v76
  %2355 = vmatpush1.bf16.msra.mxu0 %v75
  %2356 = vmatprep.subr.bf16.mxu0 0
  %2357 = vmatpush1.bf16.msra.mxu0 0
  %2358 = vmatprep.subr.bf16.mxu0 0
  %2359 = vmatpush1.bf16.msra.mxu0 0
  %2360 = vmatprep.subr.bf16.mxu0 0
  %2361 = vmatpush1.bf16.msra.mxu0 0
  %2362 = vmatprep.subr.bf16.mxu0 0
  %2363 = vmatpush1.bf16.msra.mxu0 0
  %2364 = vmatprep.subr.bf16.mxu0 0
  %2365 = vmatpush1.bf16.msra.mxu0 0
  %2366 = vmatprep.subr.bf16.mxu0 0
  %2367 = vmatpush1.bf16.msra.mxu0 0
  %2368 = vmatprep.subr.bf16.mxu0 0
  %2369 = vmatpush1.bf16.msra.mxu0 0
  %2370 = vmatprep.subr.bf16.mxu0 0
  %2371 = vmatpush1.bf16.msra.mxu0 0
  %2372 = vmatprep.subr.bf16.mxu0 0
  %2373 = vmatpush1.bf16.msra.mxu0 0
  %2374 = vmatprep.subr.bf16.mxu0 0
  %2375 = vmatpush1.bf16.msra.mxu0 0
  %2376 = vmatprep.subr.bf16.mxu0 0
  %2377 = vmatpush1.bf16.msra.mxu0 0
  %2378 = vmatprep.subr.bf16.mxu0 0
  %2379 = vmatpush1.bf16.msra.mxu0 0
  %2380 = vmatprep.mubr.bf16.mxu0 0
  %2381 = vmatmul.mubr.bf16.gmra.mrb[0].mxu0 %v2346
  %v2382 = vpop.f32.mrb[0].mxu0
  %v2383 = vadd.f32 0.0, %v2382
  %v2384 = vpop.f32.mrb[0].mxu0
  %v2385 = vadd.f32 0.0, %v2384
  %v2386 = vpop.f32.mrb[0].mxu0
  %v2387 = vpop.f32.mrb[0].mxu0
  %2388 = vdwg.mxu0
  %2389 = vmatprep.subr.bf16.mxu0 0
  %2390 = vmatpush1.bf16.msra.mxu0 %v68
  %2391 = vmatprep.subr.bf16.mxu0 0
  %2392 = vmatpush1.bf16.msra.mxu0 %v71
  %2393 = vmatprep.subr.bf16.mxu0 0
  %2394 = vmatpush1.bf16.msra.mxu0 %v74
  %2395 = vmatprep.subr.bf16.mxu0 0
  %2396 = vmatpush1.bf16.msra.mxu0 %v77
  %2397 = vmatprep.subr.bf16.mxu0 0
  %2398 = vmatpush1.bf16.msra.mxu0 0
  %2399 = vmatprep.subr.bf16.mxu0 0
  %2400 = vmatpush1.bf16.msra.mxu0 0
  %2401 = vmatprep.subr.bf16.mxu0 0
  %2402 = vmatpush1.bf16.msra.mxu0 0
  %2403 = vmatprep.subr.bf16.mxu0 0
  %2404 = vmatpush1.bf16.msra.mxu0 0
  %2405 = vmatprep.subr.bf16.mxu0 0
  %2406 = vmatpush1.bf16.msra.mxu0 0
  %2407 = vmatprep.subr.bf16.mxu0 0
  %2408 = vmatpush1.bf16.msra.mxu0 0
  %2409 = vmatprep.subr.bf16.mxu0 0
  %2410 = vmatpush1.bf16.msra.mxu0 0
  %2411 = vmatprep.subr.bf16.mxu0 0
  %2412 = vmatpush1.bf16.msra.mxu0 0
  %2413 = vmatprep.subr.bf16.mxu0 0
  %2414 = vmatpush1.bf16.msra.mxu0 0
  %2415 = vmatprep.subr.bf16.mxu0 0
  %2416 = vmatpush1.bf16.msra.mxu0 0
  %2417 = vmatprep.subr.bf16.mxu0 0
  %2418 = vmatpush1.bf16.msra.mxu0 0
  %2419 = vmatprep.subr.bf16.mxu0 0
  %2420 = vmatpush1.bf16.msra.mxu0 0
  %2421 = vmatprep.mubr.bf16.mxu0 0
  %2422 = vmatmul.mubr.bf16.gmra.mrb[0].mxu0 %v2346
  %v2423 = vpop.f32.mrb[0].mxu0
  %v2424 = vadd.f32 0.0, %v2423
  %v2425 = vpop.f32.mrb[0].mxu0
  %v2426 = vpop.f32.mrb[0].mxu0
  %v2427 = vpop.f32.mrb[0].mxu0
  %2428 = vdwg.mxu0
  %v2430 = vsel %vm179, %v2343, 0
  %2432 = vmatprep.subr.bf16.mxu0 %v37
  %2433 = vmatpush1.bf16.msra.mxu0 %v36
  %2434 = vmatprep.subr.bf16.mxu0 %v40
  %2435 = vmatpush1.bf16.msra.mxu0 %v39
  %2436 = vmatprep.subr.bf16.mxu0 0
  %2437 = vmatpush1.bf16.msra.mxu0 0
  %2438 = vmatprep.subr.bf16.mxu0 0
  %2439 = vmatpush1.bf16.msra.mxu0 0
  %2440 = vmatprep.subr.bf16.mxu0 0
  %2441 = vmatpush1.bf16.msra.mxu0 0
  %2442 = vmatprep.subr.bf16.mxu0 0
  %2443 = vmatpush1.bf16.msra.mxu0 0
  %2444 = vmatprep.subr.bf16.mxu0 0
  %2445 = vmatpush1.bf16.msra.mxu0 0
  %2446 = vmatprep.subr.bf16.mxu0 0
  %2447 = vmatpush1.bf16.msra.mxu0 0
  %2448 = vmatprep.subr.bf16.mxu0 0
  %2449 = vmatpush1.bf16.msra.mxu0 0
  %2450 = vmatprep.subr.bf16.mxu0 0
  %2451 = vmatpush1.bf16.msra.mxu0 0
  %2452 = vmatprep.subr.bf16.mxu0 0
  %2453 = vmatpush1.bf16.msra.mxu0 0
  %2454 = vmatprep.subr.bf16.mxu0 0
  %2455 = vmatpush1.bf16.msra.mxu0 0
  %2456 = vmatprep.subr.bf16.mxu0 0
  %2457 = vmatpush1.bf16.msra.mxu0 0
  %2458 = vmatprep.subr.bf16.mxu0 0
  %2459 = vmatpush1.bf16.msra.mxu0 0
  %2460 = vmatprep.subr.bf16.mxu0 0
  %2461 = vmatpush1.bf16.msra.mxu0 0
  %2462 = vmatprep.subr.bf16.mxu0 0
  %2463 = vmatpush1.bf16.msra.mxu0 0
  %2464 = vmatprep.mubr.bf16.mxu0 0
  %2465 = vmatmul.mubr.bf16.gmra.mrb[0].mxu0 %v2430
  %v2466 = vpop.f32.mrb[0].mxu0
  %v2467 = vadd.f32 %v2383, %v2466
  %v2468 = vpop.f32.mrb[0].mxu0
  %v2469 = vadd.f32 %v2385, %v2468
  %v2470 = vpop.f32.mrb[0].mxu0
  %v2471 = vpop.f32.mrb[0].mxu0
  %2472 = vdwg.mxu0
  %2473 = vmatprep.subr.bf16.mxu0 0
  %2474 = vmatpush1.bf16.msra.mxu0 %v38
  %2475 = vmatprep.subr.bf16.mxu0 0
  %2476 = vmatpush1.bf16.msra.mxu0 %v41
  %2477 = vmatprep.subr.bf16.mxu0 0
  %2478 = vmatpush1.bf16.msra.mxu0 0
  %2479 = vmatprep.subr.bf16.mxu0 0
  %2480 = vmatpush1.bf16.msra.mxu0 0
  %2481 = vmatprep.subr.bf16.mxu0 0
  %2482 = vmatpush1.bf16.msra.mxu0 0
  %2483 = vmatprep.subr.bf16.mxu0 0
  %2484 = vmatpush1.bf16.msra.mxu0 0
  %2485 = vmatprep.subr.bf16.mxu0 0
  %2486 = vmatpush1.bf16.msra.mxu0 0
  %2487 = vmatprep.subr.bf16.mxu0 0
  %2488 = vmatpush1.bf16.msra.mxu0 0
  %2489 = vmatprep.subr.bf16.mxu0 0
  %2490 = vmatpush1.bf16.msra.mxu0 0
  %2491 = vmatprep.subr.bf16.mxu0 0
  %2492 = vmatpush1.bf16.msra.mxu0 0
  %2493 = vmatprep.subr.bf16.mxu0 0
  %2494 = vmatpush1.bf16.msra.mxu0 0
  %2495 = vmatprep.subr.bf16.mxu0 0
  %2496 = vmatpush1.bf16.msra.mxu0 0
  %2497 = vmatprep.subr.bf16.mxu0 0
  %2498 = vmatpush1.bf16.msra.mxu0 0
  %2499 = vmatprep.subr.bf16.mxu0 0
  %2500 = vmatpush1.bf16.msra.mxu0 0
  %2501 = vmatprep.subr.bf16.mxu0 0
  %2502 = vmatpush1.bf16.msra.mxu0 0
  %2503 = vmatprep.subr.bf16.mxu0 0
  %2504 = vmatpush1.bf16.msra.mxu0 0
  %2505 = vmatprep.mubr.bf16.mxu0 0
  %2506 = vmatmul.mubr.bf16.gmra.mrb[0].mxu0 %v2430
  %v2507 = vpop.f32.mrb[0].mxu0
  %v2508 = vadd.f32 %v2424, %v2507
  %v2509 = vpop.f32.mrb[0].mxu0
  %v2510 = vpop.f32.mrb[0].mxu0
  %v2511 = vpop.f32.mrb[0].mxu0
  %2512 = vdwg.mxu0
  %v2513 = vadd.f32 %v2467, %v268
  %v2514 = vadd.f32 %v2469, %v272
  %v2515 = vadd.f32 %v2508, %v276
  %v2516 = vtanh.pop %v2513
  %v2517 = vxor.u32 %v2514, 2147483648
  %v2518 = vxor.u32 %v2515, 2147483648
  %v2519 = vmul.f32 %v2517, 1.442695
  %v2520 = vpow.pop %v2519
  %v2521 = vmul.f32 %v2518, 1.442695
  %v2522 = vpow.pop %v2521
  %v2523 = vadd.f32 %v2520, 1.0
  %v2524 = vadd.f32 %v2522, 1.0
  %v2525 = vrcp.pop %v2523
  %v2526 = vmul.f32 1.0, %v2525
  %v2527 = vrcp.pop %v2524
  %v2528 = vmul.f32 1.0, %v2527
  %v2529 = vmul.f32 %v2516, %v2526
  %v2530 = vpack.c.bf16 %v2332, %v2332
  %v2532 = vsel %vm179, %v2530, 0
  %2534 = vmatprep.subr.bf16.mxu0 0
  %2535 = vmatpush1.bf16.msra.mxu0 %v82
  %2536 = vmatprep.subr.bf16.mxu0 0
  %2537 = vmatpush1.bf16.msra.mxu0 %v83
  %2538 = vmatprep.subr.bf16.mxu0 0
  %2539 = vmatpush1.bf16.msra.mxu0 0
  %2540 = vmatprep.subr.bf16.mxu0 0
  %2541 = vmatpush1.bf16.msra.mxu0 0
  %2542 = vmatprep.subr.bf16.mxu0 0
  %2543 = vmatpush1.bf16.msra.mxu0 0
  %2544 = vmatprep.subr.bf16.mxu0 0
  %2545 = vmatpush1.bf16.msra.mxu0 0
  %2546 = vmatprep.subr.bf16.mxu0 0
  %2547 = vmatpush1.bf16.msra.mxu0 0
  %2548 = vmatprep.subr.bf16.mxu0 0
  %2549 = vmatpush1.bf16.msra.mxu0 0
  %2550 = vmatprep.subr.bf16.mxu0 0
  %2551 = vmatpush1.bf16.msra.mxu0 0
  %2552 = vmatprep.subr.bf16.mxu0 0
  %2553 = vmatpush1.bf16.msra.mxu0 0
  %2554 = vmatprep.subr.bf16.mxu0 0
  %2555 = vmatpush1.bf16.msra.mxu0 0
  %2556 = vmatprep.subr.bf16.mxu0 0
  %2557 = vmatpush1.bf16.msra.mxu0 0
  %2558 = vmatprep.subr.bf16.mxu0 0
  %2559 = vmatpush1.bf16.msra.mxu0 0
  %2560 = vmatprep.subr.bf16.mxu0 0
  %2561 = vmatpush1.bf16.msra.mxu0 0
  %2562 = vmatprep.subr.bf16.mxu0 0
  %2563 = vmatpush1.bf16.msra.mxu0 0
  %2564 = vmatprep.subr.bf16.mxu0 0
  %2565 = vmatpush1.bf16.msra.mxu0 0
  %2566 = vmatprep.mubr.bf16.mxu0 0
  %2567 = vmatmul.mubr.bf16.gmra.mrb[0].mxu0 %v2532
  %v2568 = vpop.f32.mrb[0].mxu0
  %v2569 = vadd.f32 0.0, %v2568
  %v2570 = vpop.f32.mrb[0].mxu0
  %v2571 = vpop.f32.mrb[0].mxu0
  %v2572 = vpop.f32.mrb[0].mxu0
  %2573 = vdwg.mxu0
  %v2574 = vmul.f32 %v2529, %v2569
  %v2575 = vsel %vm179, %v2574, 0.0
  %2576 = vadd.xlane.f32.xlu0 %v2575
  %v2577 = vpop.xlane.xlu0 %2576
  %v2578 = vadd.f32 %v2577, %v345
  %v2579 = vtanh.pop %v2578
  %2581 = vrot.lane.b32.xlu0 %v2569, 32
  %v2582 = vpop.permute.xlu0 %2581
  %v2584 = vmul.f32 %v2529, %v2582
  %2586 = vrot.lane.b32.xlu0 %v2584, 96
  %v2587 = vpop.permute.xlu0 %2586
  %v2589 = vsel %vm179, %v2587, 0.0
  %2590 = vadd.xlane.f32.xlu0 %v2589
  %v2591 = vpop.xlane.xlu0 %2590
  %v2592 = vadd.f32 %v2591, %v365
  %v2593 = vtanh.pop %v2592
  %2594 = vrot.lane.b32.xlu0 %v2569, 64
  %v2595 = vpop.permute.xlu0 %2594
  %v2597 = vmul.f32 %v2529, %v2595
  %2599 = vrot.lane.b32.xlu0 %v2597, 64
  %v2600 = vpop.permute.xlu0 %2599
  %v2602 = vsel %vm179, %v2600, 0.0
  %2603 = vadd.xlane.f32.xlu0 %v2602
  %v2604 = vpop.xlane.xlu0 %2603
  %v2605 = vadd.f32 %v2604, %v384
  %v2606 = vtanh.pop %v2605
  %2607 = vrot.lane.b32.xlu0 %v2569, 96
  %v2608 = vpop.permute.xlu0 %2607
  %v2610 = vmul.f32 %v2529, %v2608
  %2612 = vrot.lane.b32.xlu0 %v2610, 32
  %v2613 = vpop.permute.xlu0 %2612
  %v2615 = vsel %vm179, %v2613, 0.0
  %2616 = vadd.xlane.f32.xlu0 %v2615
  %v2617 = vpop.xlane.xlu0 %2616
  %v2618 = vadd.f32 %v2617, %v403
  %v2619 = vtanh.pop %v2618
  %v2620 = vsel %vm179, %v2579, -inf
  %2621 = vmax.xlane.f32.xlu0 %v2620
  %v2622 = vpop.xlane.xlu0 %2621
  %v2623 = vsel %vm179, %v2593, -inf
  %2624 = vmax.xlane.f32.xlu0 %v2623
  %v2625 = vpop.xlane.xlu0 %2624
  %v2626 = vmax.f32 %v2622, %v2625
  %v2627 = vsel %vm179, %v2606, -inf
  %2628 = vmax.xlane.f32.xlu0 %v2627
  %v2629 = vpop.xlane.xlu0 %2628
  %v2630 = vsel %vm179, %v2619, -inf
  %2631 = vmax.xlane.f32.xlu0 %v2630
  %v2632 = vpop.xlane.xlu0 %2631
  %v2633 = vmax.f32 %v2629, %v2632
  %v2634 = vmax.f32 %v2626, %v2633
  %v2635 = vsub.f32 %v2579, %v2634
  %v2636 = vmul.f32 %v2635, 1.442695
  %v2637 = vpow.pop %v2636
  %v2638 = vsub.f32 %v2593, %v2634
  %v2639 = vmul.f32 %v2638, 1.442695
  %v2640 = vpow.pop %v2639
  %v2641 = vsub.f32 %v2606, %v2634
  %v2642 = vmul.f32 %v2641, 1.442695
  %v2643 = vpow.pop %v2642
  %v2644 = vsub.f32 %v2619, %v2634
  %v2645 = vmul.f32 %v2644, 1.442695
  %v2646 = vpow.pop %v2645
  %v2647 = vsel %vm179, %v2637, 0.0
  %2648 = vadd.xlane.f32.xlu0 %v2647
  %v2649 = vpop.xlane.xlu0 %2648
  %v2650 = vsel %vm179, %v2640, 0.0
  %2651 = vadd.xlane.f32.xlu0 %v2650
  %v2652 = vpop.xlane.xlu0 %2651
  %v2653 = vadd.f32 %v2649, %v2652
  %v2654 = vsel %vm179, %v2643, 0.0
  %2655 = vadd.xlane.f32.xlu0 %v2654
  %v2656 = vpop.xlane.xlu0 %2655
  %v2657 = vadd.f32 %v2653, %v2656
  %v2658 = vsel %vm179, %v2646, 0.0
  %2659 = vadd.xlane.f32.xlu0 %v2658
  %v2660 = vpop.xlane.xlu0 %2659
  %v2661 = vadd.f32 %v2657, %v2660
  %v2662 = vrcp.pop %v2661
  %v2663 = vmul.f32 %v2637, %v2662
  %2665 = vset.pattern.permute.xlu0 0
  %2666 = vperm.xlu0 %2665, %v2663
  %v2667 = vpop.permute.xlu0 %2666
  %v2669 = vmul.f32 %v2667, %v2529
  %2670 = vset.pattern.permute.xlu0 1
  %2671 = vperm.xlu0 %2670, %v2663
  %v2672 = vpop.permute.xlu0 %2671
  %v2674 = vmul.f32 %v2672, %v2529
  %2676 = vrot.lane.b32.xlu0 %v2674, 96
  %v2677 = vpop.permute.xlu0 %2676
  %v2679 = vadd.f32 %v2669, %v2677
  %2680 = vset.pattern.permute.xlu0 2
  %2681 = vperm.xlu0 %2680, %v2663
  %v2682 = vpop.permute.xlu0 %2681
  %v2684 = vmul.f32 %v2682, %v2529
  %2686 = vrot.lane.b32.xlu0 %v2684, 64
  %v2687 = vpop.permute.xlu0 %2686
  %v2689 = vadd.f32 %v2679, %v2687
  %2690 = vset.pattern.permute.xlu0 3
  %2691 = vperm.xlu0 %2690, %v2663
  %v2692 = vpop.permute.xlu0 %2691
  %v2694 = vmul.f32 %v2692, %v2529
  %2696 = vrot.lane.b32.xlu0 %v2694, 32
  %v2697 = vpop.permute.xlu0 %2696
  %v2699 = vadd.f32 %v2689, %v2697
  %v2700 = vmul.f32 %v2332, %v2528
  %v2701 = vadd.f32 %v2700, %v2699
  %v2702 = vtanh.pop %v2701
  %2704 = vrot.lane.b32.xlu0 %v2528, 96
  %v2705 = vpop.permute.xlu0 %2704
  %v2707 = vmul.f32 %v2702, %v2705
  %s2708 = scalar_lea.vmem %s6, 48
  %2709 = vst.msk [vmem:[%s2708] sm:$0xff] %vm179, %v2707
  %s2710 = scalar_lea.vmem %s0, 56
  %v2711 = vld [vmem:[%s2710] sm:$0xff]
  %v2712 = vpack.c.bf16 %v2707, %v2707
  %v2713 = vpack.c.bf16 %v2711, %v2711
  %v2715 = vsel %vm94, %v2713, 0
  %2717 = vmatprep.subr.bf16.mxu0 %v67
  %2718 = vmatpush1.bf16.msra.mxu0 %v66
  %2719 = vmatprep.subr.bf16.mxu0 %v70
  %2720 = vmatpush1.bf16.msra.mxu0 %v69
  %2721 = vmatprep.subr.bf16.mxu0 %v73
  %2722 = vmatpush1.bf16.msra.mxu0 %v72
  %2723 = vmatprep.subr.bf16.mxu0 %v76
  %2724 = vmatpush1.bf16.msra.mxu0 %v75
  %2725 = vmatprep.subr.bf16.mxu0 0
  %2726 = vmatpush1.bf16.msra.mxu0 0
  %2727 = vmatprep.subr.bf16.mxu0 0
  %2728 = vmatpush1.bf16.msra.mxu0 0
  %2729 = vmatprep.subr.bf16.mxu0 0
  %2730 = vmatpush1.bf16.msra.mxu0 0
  %2731 = vmatprep.subr.bf16.mxu0 0
  %2732 = vmatpush1.bf16.msra.mxu0 0
  %2733 = vmatprep.subr.bf16.mxu0 0
  %2734 = vmatpush1.bf16.msra.mxu0 0
  %2735 = vmatprep.subr.bf16.mxu0 0
  %2736 = vmatpush1.bf16.msra.mxu0 0
  %2737 = vmatprep.subr.bf16.mxu0 0
  %2738 = vmatpush1.bf16.msra.mxu0 0
  %2739 = vmatprep.subr.bf16.mxu0 0
  %2740 = vmatpush1.bf16.msra.mxu0 0
  %2741 = vmatprep.subr.bf16.mxu0 0
  %2742 = vmatpush1.bf16.msra.mxu0 0
  %2743 = vmatprep.subr.bf16.mxu0 0
  %2744 = vmatpush1.bf16.msra.mxu0 0
  %2745 = vmatprep.subr.bf16.mxu0 0
  %2746 = vmatpush1.bf16.msra.mxu0 0
  %2747 = vmatprep.subr.bf16.mxu0 0
  %2748 = vmatpush1.bf16.msra.mxu0 0
  %2749 = vmatprep.mubr.bf16.mxu0 0
  %2750 = vmatmul.mubr.bf16.gmra.mrb[0].mxu0 %v2715
  %v2751 = vpop.f32.mrb[0].mxu0
  %v2752 = vadd.f32 0.0, %v2751
  %v2753 = vpop.f32.mrb[0].mxu0
  %v2754 = vadd.f32 0.0, %v2753
  %v2755 = vpop.f32.mrb[0].mxu0
  %v2756 = vpop.f32.mrb[0].mxu0
  %2757 = vdwg.mxu0
  %2758 = vmatprep.subr.bf16.mxu0 0
  %2759 = vmatpush1.bf16.msra.mxu0 %v68
  %2760 = vmatprep.subr.bf16.mxu0 0
  %2761 = vmatpush1.bf16.msra.mxu0 %v71
  %2762 = vmatprep.subr.bf16.mxu0 0
  %2763 = vmatpush1.bf16.msra.mxu0 %v74
  %2764 = vmatprep.subr.bf16.mxu0 0
  %2765 = vmatpush1.bf16.msra.mxu0 %v77
  %2766 = vmatprep.subr.bf16.mxu0 0
  %2767 = vmatpush1.bf16.msra.mxu0 0
  %2768 = vmatprep.subr.bf16.mxu0 0
  %2769 = vmatpush1.bf16.msra.mxu0 0
  %2770 = vmatprep.subr.bf16.mxu0 0
  %2771 = vmatpush1.bf16.msra.mxu0 0
  %2772 = vmatprep.subr.bf16.mxu0 0
  %2773 = vmatpush1.bf16.msra.mxu0 0
  %2774 = vmatprep.subr.bf16.mxu0 0
  %2775 = vmatpush1.bf16.msra.mxu0 0
  %2776 = vmatprep.subr.bf16.mxu0 0
  %2777 = vmatpush1.bf16.msra.mxu0 0
  %2778 = vmatprep.subr.bf16.mxu0 0
  %2779 = vmatpush1.bf16.msra.mxu0 0
  %2780 = vmatprep.subr.bf16.mxu0 0
  %2781 = vmatpush1.bf16.msra.mxu0 0
  %2782 = vmatprep.subr.bf16.mxu0 0
  %2783 = vmatpush1.bf16.msra.mxu0 0
  %2784 = vmatprep.subr.bf16.mxu0 0
  %2785 = vmatpush1.bf16.msra.mxu0 0
  %2786 = vmatprep.subr.bf16.mxu0 0
  %2787 = vmatpush1.bf16.msra.mxu0 0
  %2788 = vmatprep.subr.bf16.mxu0 0
  %2789 = vmatpush1.bf16.msra.mxu0 0
  %2790 = vmatprep.mubr.bf16.mxu0 0
  %2791 = vmatmul.mubr.bf16.gmra.mrb[0].mxu0 %v2715
  %v2792 = vpop.f32.mrb[0].mxu0
  %v2793 = vadd.f32 0.0, %v2792
  %v2794 = vpop.f32.mrb[0].mxu0
  %v2795 = vpop.f32.mrb[0].mxu0
  %v2796 = vpop.f32.mrb[0].mxu0
  %2797 = vdwg.mxu0
  %v2799 = vsel %vm179, %v2712, 0
  %2801 = vmatprep.subr.bf16.mxu0 %v37
  %2802 = vmatpush1.bf16.msra.mxu0 %v36
  %2803 = vmatprep.subr.bf16.mxu0 %v40
  %2804 = vmatpush1.bf16.msra.mxu0 %v39
  %2805 = vmatprep.subr.bf16.mxu0 0
  %2806 = vmatpush1.bf16.msra.mxu0 0
  %2807 = vmatprep.subr.bf16.mxu0 0
  %2808 = vmatpush1.bf16.msra.mxu0 0
  %2809 = vmatprep.subr.bf16.mxu0 0
  %2810 = vmatpush1.bf16.msra.mxu0 0
  %2811 = vmatprep.subr.bf16.mxu0 0
  %2812 = vmatpush1.bf16.msra.mxu0 0
  %2813 = vmatprep.subr.bf16.mxu0 0
  %2814 = vmatpush1.bf16.msra.mxu0 0
  %2815 = vmatprep.subr.bf16.mxu0 0
  %2816 = vmatpush1.bf16.msra.mxu0 0
  %2817 = vmatprep.subr.bf16.mxu0 0
  %2818 = vmatpush1.bf16.msra.mxu0 0
  %2819 = vmatprep.subr.bf16.mxu0 0
  %2820 = vmatpush1.bf16.msra.mxu0 0
  %2821 = vmatprep.subr.bf16.mxu0 0
  %2822 = vmatpush1.bf16.msra.mxu0 0
  %2823 = vmatprep.subr.bf16.mxu0 0
  %2824 = vmatpush1.bf16.msra.mxu0 0
  %2825 = vmatprep.subr.bf16.mxu0 0
  %2826 = vmatpush1.bf16.msra.mxu0 0
  %2827 = vmatprep.subr.bf16.mxu0 0
  %2828 = vmatpush1.bf16.msra.mxu0 0
  %2829 = vmatprep.subr.bf16.mxu0 0
  %2830 = vmatpush1.bf16.msra.mxu0 0
  %2831 = vmatprep.subr.bf16.mxu0 0
  %2832 = vmatpush1.bf16.msra.mxu0 0
  %2833 = vmatprep.mubr.bf16.mxu0 0
  %2834 = vmatmul.mubr.bf16.gmra.mrb[0].mxu0 %v2799
  %v2835 = vpop.f32.mrb[0].mxu0
  %v2836 = vadd.f32 %v2752, %v2835
  %v2837 = vpop.f32.mrb[0].mxu0
  %v2838 = vadd.f32 %v2754, %v2837
  %v2839 = vpop.f32.mrb[0].mxu0
  %v2840 = vpop.f32.mrb[0].mxu0
  %2841 = vdwg.mxu0
  %2842 = vmatprep.subr.bf16.mxu0 0
  %2843 = vmatpush1.bf16.msra.mxu0 %v38
  %2844 = vmatprep.subr.bf16.mxu0 0
  %2845 = vmatpush1.bf16.msra.mxu0 %v41
  %2846 = vmatprep.subr.bf16.mxu0 0
  %2847 = vmatpush1.bf16.msra.mxu0 0
  %2848 = vmatprep.subr.bf16.mxu0 0
  %2849 = vmatpush1.bf16.msra.mxu0 0
  %2850 = vmatprep.subr.bf16.mxu0 0
  %2851 = vmatpush1.bf16.msra.mxu0 0
  %2852 = vmatprep.subr.bf16.mxu0 0
  %2853 = vmatpush1.bf16.msra.mxu0 0
  %2854 = vmatprep.subr.bf16.mxu0 0
  %2855 = vmatpush1.bf16.msra.mxu0 0
  %2856 = vmatprep.subr.bf16.mxu0 0
  %2857 = vmatpush1.bf16.msra.mxu0 0
  %2858 = vmatprep.subr.bf16.mxu0 0
  %2859 = vmatpush1.bf16.msra.mxu0 0
  %2860 = vmatprep.subr.bf16.mxu0 0
  %2861 = vmatpush1.bf16.msra.mxu0 0
  %2862 = vmatprep.subr.bf16.mxu0 0
  %2863 = vmatpush1.bf16.msra.mxu0 0
  %2864 = vmatprep.subr.bf16.mxu0 0
  %2865 = vmatpush1.bf16.msra.mxu0 0
  %2866 = vmatprep.subr.bf16.mxu0 0
  %2867 = vmatpush1.bf16.msra.mxu0 0
  %2868 = vmatprep.subr.bf16.mxu0 0
  %2869 = vmatpush1.bf16.msra.mxu0 0
  %2870 = vmatprep.subr.bf16.mxu0 0
  %2871 = vmatpush1.bf16.msra.mxu0 0
  %2872 = vmatprep.subr.bf16.mxu0 0
  %2873 = vmatpush1.bf16.msra.mxu0 0
  %2874 = vmatprep.mubr.bf16.mxu0 0
  %2875 = vmatmul.mubr.bf16.gmra.mrb[0].mxu0 %v2799
  %v2876 = vpop.f32.mrb[0].mxu0
  %v2877 = vadd.f32 %v2793, %v2876
  %v2878 = vpop.f32.mrb[0].mxu0
  %v2879 = vpop.f32.mrb[0].mxu0
  %v2880 = vpop.f32.mrb[0].mxu0
  %2881 = vdwg.mxu0
  %v2882 = vadd.f32 %v2836, %v268
  %v2883 = vadd.f32 %v2838, %v272
  %v2884 = vadd.f32 %v2877, %v276
  %v2885 = vtanh.pop %v2882
  %v2886 = vxor.u32 %v2883, 2147483648
  %v2887 = vxor.u32 %v2884, 2147483648
  %v2888 = vmul.f32 %v2886, 1.442695
  %v2889 = vpow.pop %v2888
  %v2890 = vmul.f32 %v2887, 1.442695
  %v2891 = vpow.pop %v2890
  %v2892 = vadd.f32 %v2889, 1.0
  %v2893 = vadd.f32 %v2891, 1.0
  %v2894 = vrcp.pop %v2892
  %v2895 = vmul.f32 1.0, %v2894
  %v2896 = vrcp.pop %v2893
  %v2897 = vmul.f32 1.0, %v2896
  %v2898 = vmul.f32 %v2885, %v2895
  %v2899 = vpack.c.bf16 %v2701, %v2701
  %v2901 = vsel %vm179, %v2899, 0
  %2903 = vmatprep.subr.bf16.mxu0 0
  %2904 = vmatpush1.bf16.msra.mxu0 %v82
  %2905 = vmatprep.subr.bf16.mxu0 0
  %2906 = vmatpush1.bf16.msra.mxu0 %v83
  %2907 = vmatprep.subr.bf16.mxu0 0
  %2908 = vmatpush1.bf16.msra.mxu0 0
  %2909 = vmatprep.subr.bf16.mxu0 0
  %2910 = vmatpush1.bf16.msra.mxu0 0
  %2911 = vmatprep.subr.bf16.mxu0 0
  %2912 = vmatpush1.bf16.msra.mxu0 0
  %2913 = vmatprep.subr.bf16.mxu0 0
  %2914 = vmatpush1.bf16.msra.mxu0 0
  %2915 = vmatprep.subr.bf16.mxu0 0
  %2916 = vmatpush1.bf16.msra.mxu0 0
  %2917 = vmatprep.subr.bf16.mxu0 0
  %2918 = vmatpush1.bf16.msra.mxu0 0
  %2919 = vmatprep.subr.bf16.mxu0 0
  %2920 = vmatpush1.bf16.msra.mxu0 0
  %2921 = vmatprep.subr.bf16.mxu0 0
  %2922 = vmatpush1.bf16.msra.mxu0 0
  %2923 = vmatprep.subr.bf16.mxu0 0
  %2924 = vmatpush1.bf16.msra.mxu0 0
  %2925 = vmatprep.subr.bf16.mxu0 0
  %2926 = vmatpush1.bf16.msra.mxu0 0
  %2927 = vmatprep.subr.bf16.mxu0 0
  %2928 = vmatpush1.bf16.msra.mxu0 0
  %2929 = vmatprep.subr.bf16.mxu0 0
  %2930 = vmatpush1.bf16.msra.mxu0 0
  %2931 = vmatprep.subr.bf16.mxu0 0
  %2932 = vmatpush1.bf16.msra.mxu0 0
  %2933 = vmatprep.subr.bf16.mxu0 0
  %2934 = vmatpush1.bf16.msra.mxu0 0
  %2935 = vmatprep.mubr.bf16.mxu0 0
  %2936 = vmatmul.mubr.bf16.gmra.mrb[0].mxu0 %v2901
  %v2937 = vpop.f32.mrb[0].mxu0
  %v2938 = vadd.f32 0.0, %v2937
  %v2939 = vpop.f32.mrb[0].mxu0
  %v2940 = vpop.f32.mrb[0].mxu0
  %v2941 = vpop.f32.mrb[0].mxu0
  %2942 = vdwg.mxu0
  %v2943 = vmul.f32 %v2898, %v2938
  %v2944 = vsel %vm179, %v2943, 0.0
  %2945 = vadd.xlane.f32.xlu0 %v2944
  %v2946 = vpop.xlane.xlu0 %2945
  %v2947 = vadd.f32 %v2946, %v345
  %v2948 = vtanh.pop %v2947
  %2950 = vrot.lane.b32.xlu0 %v2938, 32
  %v2951 = vpop.permute.xlu0 %2950
  %v2953 = vmul.f32 %v2898, %v2951
  %2955 = vrot.lane.b32.xlu0 %v2953, 96
  %v2956 = vpop.permute.xlu0 %2955
  %v2958 = vsel %vm179, %v2956, 0.0
  %2959 = vadd.xlane.f32.xlu0 %v2958
  %v2960 = vpop.xlane.xlu0 %2959
  %v2961 = vadd.f32 %v2960, %v365
  %v2962 = vtanh.pop %v2961
  %2963 = vrot.lane.b32.xlu0 %v2938, 64
  %v2964 = vpop.permute.xlu0 %2963
  %v2966 = vmul.f32 %v2898, %v2964
  %2968 = vrot.lane.b32.xlu0 %v2966, 64
  %v2969 = vpop.permute.xlu0 %2968
  %v2971 = vsel %vm179, %v2969, 0.0
  %2972 = vadd.xlane.f32.xlu0 %v2971
  %v2973 = vpop.xlane.xlu0 %2972
  %v2974 = vadd.f32 %v2973, %v384
  %v2975 = vtanh.pop %v2974
  %2976 = vrot.lane.b32.xlu0 %v2938, 96
  %v2977 = vpop.permute.xlu0 %2976
  %v2979 = vmul.f32 %v2898, %v2977
  %2981 = vrot.lane.b32.xlu0 %v2979, 32
  %v2982 = vpop.permute.xlu0 %2981
  %v2984 = vsel %vm179, %v2982, 0.0
  %2985 = vadd.xlane.f32.xlu0 %v2984
  %v2986 = vpop.xlane.xlu0 %2985
  %v2987 = vadd.f32 %v2986, %v403
  %v2988 = vtanh.pop %v2987
  %v2989 = vsel %vm179, %v2948, -inf
  %2990 = vmax.xlane.f32.xlu0 %v2989
  %v2991 = vpop.xlane.xlu0 %2990
  %v2992 = vsel %vm179, %v2962, -inf
  %2993 = vmax.xlane.f32.xlu0 %v2992
  %v2994 = vpop.xlane.xlu0 %2993
  %v2995 = vmax.f32 %v2991, %v2994
  %v2996 = vsel %vm179, %v2975, -inf
  %2997 = vmax.xlane.f32.xlu0 %v2996
  %v2998 = vpop.xlane.xlu0 %2997
  %v2999 = vsel %vm179, %v2988, -inf
  %3000 = vmax.xlane.f32.xlu0 %v2999
  %v3001 = vpop.xlane.xlu0 %3000
  %v3002 = vmax.f32 %v2998, %v3001
  %v3003 = vmax.f32 %v2995, %v3002
  %v3004 = vsub.f32 %v2948, %v3003
  %v3005 = vmul.f32 %v3004, 1.442695
  %v3006 = vpow.pop %v3005
  %v3007 = vsub.f32 %v2962, %v3003
  %v3008 = vmul.f32 %v3007, 1.442695
  %v3009 = vpow.pop %v3008
  %v3010 = vsub.f32 %v2975, %v3003
  %v3011 = vmul.f32 %v3010, 1.442695
  %v3012 = vpow.pop %v3011
  %v3013 = vsub.f32 %v2988, %v3003
  %v3014 = vmul.f32 %v3013, 1.442695
  %v3015 = vpow.pop %v3014
  %v3016 = vsel %vm179, %v3006, 0.0
  %3017 = vadd.xlane.f32.xlu0 %v3016
  %v3018 = vpop.xlane.xlu0 %3017
  %v3019 = vsel %vm179, %v3009, 0.0
  %3020 = vadd.xlane.f32.xlu0 %v3019
  %v3021 = vpop.xlane.xlu0 %3020
  %v3022 = vadd.f32 %v3018, %v3021
  %v3023 = vsel %vm179, %v3012, 0.0
  %3024 = vadd.xlane.f32.xlu0 %v3023
  %v3025 = vpop.xlane.xlu0 %3024
  %v3026 = vadd.f32 %v3022, %v3025
  %v3027 = vsel %vm179, %v3015, 0.0
  %3028 = vadd.xlane.f32.xlu0 %v3027
  %v3029 = vpop.xlane.xlu0 %3028
  %v3030 = vadd.f32 %v3026, %v3029
  %v3031 = vrcp.pop %v3030
  %v3032 = vmul.f32 %v3006, %v3031
  %3034 = vset.pattern.permute.xlu0 0
  %3035 = vperm.xlu0 %3034, %v3032
  %v3036 = vpop.permute.xlu0 %3035
  %v3038 = vmul.f32 %v3036, %v2898
  %3039 = vset.pattern.permute.xlu0 1
  %3040 = vperm.xlu0 %3039, %v3032
  %v3041 = vpop.permute.xlu0 %3040
  %v3043 = vmul.f32 %v3041, %v2898
  %3045 = vrot.lane.b32.xlu0 %v3043, 96
  %v3046 = vpop.permute.xlu0 %3045
  %v3048 = vadd.f32 %v3038, %v3046
  %3049 = vset.pattern.permute.xlu0 2
  %3050 = vperm.xlu0 %3049, %v3032
  %v3051 = vpop.permute.xlu0 %3050
  %v3053 = vmul.f32 %v3051, %v2898
  %3055 = vrot.lane.b32.xlu0 %v3053, 64
  %v3056 = vpop.permute.xlu0 %3055
  %v3058 = vadd.f32 %v3048, %v3056
  %3059 = vset.pattern.permute.xlu0 3
  %3060 = vperm.xlu0 %3059, %v3032
  %v3061 = vpop.permute.xlu0 %3060
  %v3063 = vmul.f32 %v3061, %v2898
  %3065 = vrot.lane.b32.xlu0 %v3063, 32
  %v3066 = vpop.permute.xlu0 %3065
  %v3068 = vadd.f32 %v3058, %v3066
  %v3069 = vmul.f32 %v2701, %v2897
  %v3070 = vadd.f32 %v3069, %v3068
  %v3071 = vtanh.pop %v3070
  %3073 = vrot.lane.b32.xlu0 %v2897, 96
  %v3074 = vpop.permute.xlu0 %3073
  %v3076 = vmul.f32 %v3071, %v3074
  %s3077 = scalar_lea.vmem %s6, 56
  %3078 = vst.msk [vmem:[%s3077] sm:$0xff] %vm179, %v3076
  // Predicated region
  $region26: #{mi_lstm_forward.1} parent=0 // pred_check
    _
  $region27: #{mi_lstm_forward.1} parent=0 // pred_check_branch
    %3080 = sbr.rel (0) target = $region29
  $region28: #{mi_lstm_forward.1} parent=0 // pred_region
    _
  $region29: #{mi_lstm_forward.1} parent=0 // pred_fallthru
    _
  // Predicated region
  $region30: #{mi_lstm_forward.1} parent=0 // pred_check
    _
  $region31: #{mi_lstm_forward.1} parent=0 // pred_check_branch
    %3082 = sbr.rel (0) target = $region33
  $region32: #{mi_lstm_forward.1} parent=0 // pred_region
    _
  $region33: #{mi_lstm_forward.1} parent=0 // pred_fallthru
    _

</llo_original>
